<compile_context>
chip_gen: v7x
topology: tpu7x:2x2x1
jax: 0.10.0
libtpu: 0.0.40
codegen_flags: <defaults>
</compile_context>

<pallas_src>
import math
import numpy as np
import jax
import jax.numpy as jnp
from jax import lax
from jax.experimental import pallas as pl
from jax.experimental.pallas import tpu as pltpu

BN_EPS = 1e-5
CPAD = 128   # lane-dense channel width carried through the conv stack


# --------------------------------------------------------------------------
# In-kernel building blocks
# --------------------------------------------------------------------------
def _conv3x3_interior(act, taps_ref, shift_ref):
    """3x3 'same' conv + folded BN shift + ReLU on an interior-only activation.

    act      : (B, h, w, cin) bf16   interior activation (no halos stored);
                                     the 1-px halo is synthesized as zeros.
    taps_ref : (9, cin, cout) bf16   per-tap weights (BN scale pre-folded)
    shift_ref: (1, cout) f32         folded conv-bias + BN shift
    returns  : (B, h, w, cout) f32   post-ReLU activation
    """
    b, h, w, cin = act.shape
    cout = taps_ref.shape[-1]
    zc = jnp.zeros((b, h, 1, cin), act.dtype)
    zr = jnp.zeros((b, 1, w, cin), act.dtype)
    # Width (sublane) shifts hoisted out of the tap loop: only 2 shift passes.
    wslabs = (jnp.concatenate([zc, act[:, :, :w - 1, :]], axis=2),   # kw = 0
              act,                                                   # kw = 1 (free)
              jnp.concatenate([act[:, :, 1:, :], zc], axis=2))       # kw = 2
    m = b * h * w
    acc = jnp.zeros((m, cout), jnp.float32)
    for kh in range(3):
        for kw in range(3):
            s = wslabs[kw]
            if kh == 0:                                              # row shifts are major-dim: cheap
                s = jnp.concatenate([zr, s[:, :h - 1, :, :]], axis=1)
            elif kh == 2:
                s = jnp.concatenate([s[:, 1:, :, :], zr], axis=1)
            acc = acc + jnp.dot(s.reshape(m, cin), taps_ref[3 * kh + kw],
                                preferred_element_type=jnp.float32)
    y = jnp.maximum(acc + shift_ref[...], 0.0)                       # bias+BN shift, ReLU (f32)
    return y.reshape(b, h, w, cout)


def _maxpool2x2(y, w_out):
    """2x2/2 max-pool of y; result width is zero-padded up to w_out.

    y     : (B, h, w, C) f32
    return: (B, h//2, w_out, C) f32 with columns >= w//2 equal to zero
    """
    b, h, w, c = y.shape
    h2, w2 = h // 2, w // 2
    yp = y.reshape(b * h2, 2, w, c)                                  # free leading reshape
    rows = jnp.maximum(yp[:, 0], yp[:, 1])                           # (B*h2, w, C) VPU max
    pieces = [jnp.maximum(rows[:, 2 * j:2 * j + 1, :],
                          rows[:, 2 * j + 1:2 * j + 2, :]) for j in range(w2)]
    if w_out > w2:
        pieces.append(jnp.zeros((b * h2, w_out - w2, c), y.dtype))
    pooled = jnp.concatenate(pieces, axis=1)                         # one value, one dense write later
    return pooled.reshape(b, h2, w_out, c)


# --------------------------------------------------------------------------
# The fused kernel (whole SimpleCNN forward per batch tile)
# --------------------------------------------------------------------------
def simple_cnn_kernel(xp_ref, w1_ref, s1_ref, w2_ref, s2_ref, w3_ref, s3_ref,
                      fw1_ref, fb1_ref, fw2_ref, fb2_ref, fw3_ref, fb3_ref,
                      out_ref):
    b = xp_ref.shape[0]
    xp = xp_ref[...]                                                 # (B, 4, 64, 32) bf16 patches

    # Block 1: Conv(3->32)+BN+ReLU as one K=32 matmul per pool phase, fused with
    # the 2x2 max-pool (pure element-wise max over the 4 phase planes).
    pooled1 = None
    for p in range(4):
        lhs = xp[:, p].reshape(b * 64, 32)                           # tile-aligned flatten
        y = jnp.dot(lhs, w1_ref[...], preferred_element_type=jnp.float32)
        y = jnp.maximum(y + s1_ref[...], 0.0)
        pooled1 = y if pooled1 is None else jnp.maximum(pooled1, y)
    a2 = pooled1.reshape(b, 8, 8, CPAD).astype(jnp.bfloat16)         # 8x8, channels >= 32 are zero

    # Block 2: Conv(32->64)+BN+ReLU, then 2x2 max-pool (8x8 -> 4x4).
    y2 = _conv3x3_interior(a2, w2_ref, s2_ref)                       # (B, 8, 8, 128) f32
    a3 = _maxpool2x2(y2, w_out=8).astype(jnp.bfloat16)               # (B, 4, 8, 128); cols 4..7 zero

    # Block 3: Conv(64->128)+BN+ReLU on the width-8 slab so flattens stay tile
    # aligned; output columns 4..7 are garbage and are never read below.
    y3 = _conv3x3_interior(a3, w3_ref, s3_ref)                       # (B, 4, 8, 128) f32

    # MaxPool2x2 + AdaptiveAvgPool((1,1)) fused: mean of the four 2x2-block maxima.
    feat = None
    for i in range(2):
        for j in range(2):
            blk = jnp.maximum(
                jnp.maximum(y3[:, 2 * i, 2 * j, :], y3[:, 2 * i, 2 * j + 1, :]),
                jnp.maximum(y3[:, 2 * i + 1, 2 * j, :], y3[:, 2 * i + 1, 2 * j + 1, :]))
            feat = blk if feat is None else feat + blk
    feat = feat * 0.25                                               # (B, 128) f32

    # Classifier head (Linear-ReLU-Linear-ReLU-Linear).
    # TODO(synk): Dropout(0.5)/Dropout(0.3) are train-time stochastic; identity at inference.
    h1 = jnp.maximum(
        jnp.dot(feat.astype(jnp.bfloat16), fw1_ref[...],
                preferred_element_type=jnp.float32) + fb1_ref[...], 0.0)
    h2 = jnp.maximum(
        jnp.dot(h1.astype(jnp.bfloat16), fw2_ref[...],
                preferred_element_type=jnp.float32) + fb2_ref[...], 0.0)
    out_ref[...] = jnp.dot(h2.astype(jnp.bfloat16), fw3_ref[...],
                           preferred_element_type=jnp.float32) + fb3_ref[...]


# --------------------------------------------------------------------------
# JAX wrapper (layout plumbing only -- no hot-path compute)
# --------------------------------------------------------------------------
def _pick_batch_tile(n):
    """Images per grid step: largest divisor of n up to 32 (fits comfortably in
    VMEM on v5e/v6e/v7x); once the batch is reasonably large, keep >= 2 grid
    steps so v7x's two TensorCores both get work under 'parallel' sharding."""
    cap = 32
    divs = [d for d in range(1, min(n, cap) + 1) if n % d == 0]
    multi = [d for d in divs if n // d >= 2]
    if n >= 16 and multi:
        return max(multi)
    return max(divs)


def simple_cnn_forward(x_nchw, kp):
    n, cin, h, w = x_nchw.shape
    assert (cin, h, w) == (3, 16, 16), "kernel is specialized to 3x16x16 inputs"
    num_classes = kp["num_classes"]

    # One-time layout plumbing in XLA: NCHW -> NHWC, halo pad, im2col for conv1
    # (K = 27 padded to 32), and phase-major ordering of the 2x2 pool windows.
    x = jnp.transpose(x_nchw, (0, 2, 3, 1)).astype(jnp.float32)          # (n, 16, 16, 3)
    xpad = jnp.pad(x, ((0, 0), (1, 1), (1, 1), (0, 0)))                  # (n, 18, 18, 3)
    taps = [xpad[:, kh:kh + 16, kw:kw + 16, :]
            for kh in range(3) for kw in range(3)]
    pat = jnp.stack(taps, axis=3).reshape(n, 16, 16, 27)                 # K = kh*9 + kw*3 + c
    pat = jnp.pad(pat, ((0, 0), (0, 0), (0, 0), (0, 5)))                 # K -> 32
    pat = pat.reshape(n, 8, 2, 8, 2, 32).transpose(0, 2, 4, 1, 3, 5)     # (n, di, dj, br, bc, K)
    pat = pat.reshape(n, 4, 64, 32).astype(jnp.bfloat16)                 # phase-major patches

    b_tile = _pick_batch_tile(n)
    grid = (n // b_tile,)

    def resident(arr):  # constant index_map -> stays VMEM-resident across grid steps
        nd = arr.ndim
        return pl.BlockSpec(arr.shape, lambda i, _nd=nd: (0,) * _nd)

    weights = (kp["w1"], kp["s1"], kp["w2"], kp["s2"], kp["w3"], kp["s3"],
               kp["fw1"], kp["fb1"], kp["fw2"], kp["fb2"], kp["fw3"], kp["fb3"])

    out = pl.pallas_call(
        simple_cnn_kernel,
        out_shape=jax.ShapeDtypeStruct((n, CPAD), jnp.float32),
        grid_spec=pltpu.PrefetchScalarGridSpec(
            num_scalar_prefetch=0,
            grid=grid,
            in_specs=[pl.BlockSpec((b_tile, 4, 64, 32), lambda i: (i, 0, 0, 0))]
                     + [resident(a) for a in weights],
            out_specs=pl.BlockSpec((b_tile, CPAD), lambda i: (i, 0)),
        ),
        compiler_params=pltpu.CompilerParams(
            dimension_semantics=("parallel",),
            vmem_limit_bytes=40 * 1024 * 1024),
    )(pat, *weights)
    return out[:, :num_classes]


# --------------------------------------------------------------------------
# Parameters (deterministic, matching SimpleCNN._initialize_weights, eval mode)
# --------------------------------------------------------------------------
def init_params(key, num_classes=10):
    ks = jax.random.split(key, 6)
    convs = []
    cins, couts = [3, 32, 64], [32, 64, 128]
    for idx, (cin, cout) in enumerate(zip(cins, couts)):
        fan_out = cout * 9  # kaiming_normal_(mode='fan_out', nonlinearity='relu')
        w4 = math.sqrt(2.0 / fan_out) * jax.random.normal(
            ks[idx], (3, 3, cin, cout), jnp.float32)
        conv_bias = jnp.zeros((cout,), jnp.float32)
        gamma = jnp.ones((cout,), jnp.float32)
        beta = jnp.zeros((cout,), jnp.float32)
        run_mean = jnp.zeros((cout,), jnp.float32)
        run_var = jnp.ones((cout,), jnp.float32)
        scale = gamma / jnp.sqrt(run_var + BN_EPS)          # eval-mode BatchNorm
        shift = beta + (conv_bias - run_mean) * scale
        convs.append({"w4": w4, "scale": scale, "shift": shift})
    fcs = []
    for idx, (din, dout) in enumerate([(128, 256), (256, 128), (128, num_classes)]):
        wl = 0.01 * jax.random.normal(ks[3 + idx], (din, dout), jnp.float32)
        bl = jnp.zeros((dout,), jnp.float32)
        fcs.append((wl, bl))
    return {"convs": convs, "fc": fcs, "num_classes": num_classes}


def prep_kernel_params(params):
    """Offline weight prep: fold BN scale into conv weights, zero-pad channel /
    class dims to 128 lanes, build the K=32 conv1 matrix and (9, 128, 128)
    per-tap matrices for conv2/3, cast matmul operands to bf16."""
    kp = {"num_classes": params["num_classes"]}
    convs = params["convs"]
    # Conv1 as one K=27 (padded to 32) matmul.
    w1 = convs[0]["w4"] * convs[0]["scale"][None, None, None, :]         # (3, 3, 3, 32)
    kp["w1"] = (jnp.zeros((32, CPAD), jnp.float32)
                .at[:27, :32].set(w1.reshape(27, 32))).astype(jnp.bfloat16)
    kp["s1"] = jnp.zeros((1, CPAD), jnp.float32).at[0, :32].set(convs[0]["shift"])
    # Conv2 / Conv3 as 9 per-tap (128, 128) matrices.
    for i in (1, 2):
        c = convs[i]
        wc = c["w4"] * c["scale"][None, None, None, :]
        cin, cout = wc.shape[2], wc.shape[3]
        wp = jnp.zeros((3, 3, CPAD, CPAD), jnp.float32).at[:, :, :cin, :cout].set(wc)
        kp[f"w{i + 1}"] = wp.reshape(9, CPAD, CPAD).astype(jnp.bfloat16)
        kp[f"s{i + 1}"] = jnp.zeros((1, CPAD), jnp.float32).at[0, :cout].set(c["shift"])
    (fw1, fb1), (fw2, fb2), (fw3, fb3) = params["fc"]
    kp["fw1"] = fw1.astype(jnp.bfloat16)
    kp["fb1"] = fb1.reshape(1, -1)
    kp["fw2"] = fw2.astype(jnp.bfloat16)
    kp["fb2"] = fb2.reshape(1, -1)
    ncls = fw3.shape[1]
    kp["fw3"] = (jnp.zeros((fw3.shape[0], CPAD), jnp.float32)
                 .at[:, :ncls].set(fw3)).astype(jnp.bfloat16)
    kp["fb3"] = jnp.zeros((1, CPAD), jnp.float32).at[0, :ncls].set(fb3)
    return kp


def reference_forward(x_nchw, params):
    """Pure-JAX (XLA) reference of SimpleCNN.forward (eval mode) for sanity checks."""
    x = jnp.transpose(x_nchw, (0, 2, 3, 1)).astype(jnp.float32)
    for c in params["convs"]:
        y = lax.conv_general_dilated(
            x, c["w4"], window_strides=(1, 1), padding="SAME",
            dimension_numbers=("NHWC", "HWIO", "NHWC"))
        y = jnp.maximum(y * c["scale"] + c["shift"], 0.0)
        x = lax.reduce_window(y, -jnp.inf, lax.max,
                              (1, 2, 2, 1), (1, 2, 2, 1), "VALID")
    feat = jnp.mean(x, axis=(1, 2))
    (w1, b1), (w2, b2), (w3, b3) = params["fc"]
    h = jnp.maximum(feat @ w1 + b1, 0.0)
    h = jnp.maximum(h @ w2 + b2, 0.0)
    return h @ w3 + b3


if __name__ == "__main__":
    key = jax.random.PRNGKey(0)
    k_x, k_p = jax.random.split(key)
    params = init_params(k_p, num_classes=10)
    kparams = prep_kernel_params(params)
    # Small NCHW input consistent with the module: batch=2, channels=3, spatial=16.
    x = jax.random.normal(k_x, (2, 3, 16, 16), jnp.float32)

    out = simple_cnn_forward(x, kparams)
    out = jax.block_until_ready(out)
    assert out.shape == (2, 10)

    ref = reference_forward(x, params)
    # bf16 matmul operands (f32 accumulation) -> slightly looser tolerance than pure f32.
    np.testing.assert_allclose(np.asarray(out), np.asarray(ref),
                               rtol=5e-2, atol=2e-4)
    print("KERNEL_OK")
</pallas_src>

<mosaic_0001>
module attributes {stable_mosaic.version = 11 : i64} {
  func.func @simple_cnn_kernel(%arg0: i32, %arg1: memref<2x4x64x32xbf16, #tpu.memory_space<vmem>>, %arg2: memref<32x128xbf16, #tpu.memory_space<vmem>>, %arg3: memref<1x128xf32, #tpu.memory_space<vmem>>, %arg4: memref<9x128x128xbf16, #tpu.memory_space<vmem>>, %arg5: memref<1x128xf32, #tpu.memory_space<vmem>>, %arg6: memref<9x128x128xbf16, #tpu.memory_space<vmem>>, %arg7: memref<1x128xf32, #tpu.memory_space<vmem>>, %arg8: memref<128x256xbf16, #tpu.memory_space<vmem>>, %arg9: memref<1x256xf32, #tpu.memory_space<vmem>>, %arg10: memref<256x128xbf16, #tpu.memory_space<vmem>>, %arg11: memref<1x128xf32, #tpu.memory_space<vmem>>, %arg12: memref<128x128xbf16, #tpu.memory_space<vmem>>, %arg13: memref<1x128xf32, #tpu.memory_space<vmem>>, %arg14: memref<2x128xf32, #tpu.memory_space<vmem>>) attributes {dimension_semantics = [#tpu.dimension_semantics<parallel>], iteration_bounds = array<i64: 1>, scalar_prefetch = 0 : i64, scratch_operands = 0 : i64, tpu.core_type = #tpu.core_type<tc>, window_params = [{transform_indices = @transform_0, window_bounds = array<i64: 2, 4, 64, 32>}, {pipeline_mode = #tpu.pipeline_mode<synchronous>, transform_indices = @transform_1, window_bounds = array<i64: 32, 128>}, {pipeline_mode = #tpu.pipeline_mode<synchronous>, transform_indices = @transform_2, window_bounds = array<i64: 1, 128>}, {pipeline_mode = #tpu.pipeline_mode<synchronous>, transform_indices = @transform_3, window_bounds = array<i64: 9, 128, 128>}, {pipeline_mode = #tpu.pipeline_mode<synchronous>, transform_indices = @transform_4, window_bounds = array<i64: 1, 128>}, {pipeline_mode = #tpu.pipeline_mode<synchronous>, transform_indices = @transform_5, window_bounds = array<i64: 9, 128, 128>}, {pipeline_mode = #tpu.pipeline_mode<synchronous>, transform_indices = @transform_6, window_bounds = array<i64: 1, 128>}, {pipeline_mode = #tpu.pipeline_mode<synchronous>, transform_indices = @transform_7, window_bounds = array<i64: 128, 256>}, {pipeline_mode = #tpu.pipeline_mode<synchronous>, transform_indices = @transform_8, window_bounds = array<i64: 1, 256>}, {pipeline_mode = #tpu.pipeline_mode<synchronous>, transform_indices = @transform_9, window_bounds = array<i64: 256, 128>}, {pipeline_mode = #tpu.pipeline_mode<synchronous>, transform_indices = @transform_10, window_bounds = array<i64: 1, 128>}, {pipeline_mode = #tpu.pipeline_mode<synchronous>, transform_indices = @transform_11, window_bounds = array<i64: 128, 128>}, {pipeline_mode = #tpu.pipeline_mode<synchronous>, transform_indices = @transform_12, window_bounds = array<i64: 1, 128>}, {transform_indices = @transform_13, window_bounds = array<i64: 2, 128>}]} {
    %c0 = arith.constant 0 : index
    %c0_0 = arith.constant 0 : index
    %c0_1 = arith.constant 0 : index
    %c0_2 = arith.constant 0 : index
    %0 = vector.load %arg1[%c0, %c0_0, %c0_1, %c0_2] : memref<2x4x64x32xbf16, #tpu.memory_space<vmem>>, vector<2x4x64x32xbf16>
    %1 = vector.extract_strided_slice %0 {offsets = [0, 0, 0, 0], sizes = [2, 1, 64, 32], strides = [1, 1, 1, 1]} : vector<2x4x64x32xbf16> to vector<2x1x64x32xbf16>
    %2 = vector.shape_cast %1 : vector<2x1x64x32xbf16> to vector<2x64x32xbf16>
    %3 = vector.shape_cast %2 : vector<2x64x32xbf16> to vector<128x32xbf16>
    %c0_3 = arith.constant 0 : index
    %c0_4 = arith.constant 0 : index
    %4 = vector.load %arg2[%c0_3, %c0_4] : memref<32x128xbf16, #tpu.memory_space<vmem>>, vector<32x128xbf16>
    %cst = arith.constant dense<0.000000e+00> : vector<128x128xf32>
    %5 = tpu.matmul %3, %4, %cst {dimension_numbers = #tpu.dot_dimension_numbers<[1], [0], [0], [1], [0, 0, 1, 1], [], []>} : vector<128x32xbf16>, vector<32x128xbf16>, vector<128x128xf32> -> vector<128x128xf32>
    %c0_5 = arith.constant 0 : index
    %c0_6 = arith.constant 0 : index
    %6 = vector.load %arg3[%c0_5, %c0_6] : memref<1x128xf32, #tpu.memory_space<vmem>>, vector<1x128xf32>
    %7 = vector.broadcast %6 : vector<1x128xf32> to vector<128x128xf32>
    %8 = arith.addf %5, %7 : vector<128x128xf32>
    %cst_7 = arith.constant 0.000000e+00 : f32
    %9 = vector.broadcast %cst_7 : f32 to vector<128x128xf32>
    %10 = arith.maximumf %8, %9 : vector<128x128xf32>
    %11 = vector.extract_strided_slice %0 {offsets = [0, 1, 0, 0], sizes = [2, 1, 64, 32], strides = [1, 1, 1, 1]} : vector<2x4x64x32xbf16> to vector<2x1x64x32xbf16>
    %12 = vector.shape_cast %11 : vector<2x1x64x32xbf16> to vector<2x64x32xbf16>
    %13 = vector.shape_cast %12 : vector<2x64x32xbf16> to vector<128x32xbf16>
    %c0_8 = arith.constant 0 : index
    %c0_9 = arith.constant 0 : index
    %14 = vector.load %arg2[%c0_8, %c0_9] : memref<32x128xbf16, #tpu.memory_space<vmem>>, vector<32x128xbf16>
    %cst_10 = arith.constant dense<0.000000e+00> : vector<128x128xf32>
    %15 = tpu.matmul %13, %14, %cst_10 {dimension_numbers = #tpu.dot_dimension_numbers<[1], [0], [0], [1], [0, 0, 1, 1], [], []>} : vector<128x32xbf16>, vector<32x128xbf16>, vector<128x128xf32> -> vector<128x128xf32>
    %c0_11 = arith.constant 0 : index
    %c0_12 = arith.constant 0 : index
    %16 = vector.load %arg3[%c0_11, %c0_12] : memref<1x128xf32, #tpu.memory_space<vmem>>, vector<1x128xf32>
    %17 = vector.broadcast %16 : vector<1x128xf32> to vector<128x128xf32>
    %18 = arith.addf %15, %17 : vector<128x128xf32>
    %cst_13 = arith.constant 0.000000e+00 : f32
    %19 = vector.broadcast %cst_13 : f32 to vector<128x128xf32>
    %20 = arith.maximumf %18, %19 : vector<128x128xf32>
    %21 = arith.maximumf %10, %20 : vector<128x128xf32>
    %22 = vector.extract_strided_slice %0 {offsets = [0, 2, 0, 0], sizes = [2, 1, 64, 32], strides = [1, 1, 1, 1]} : vector<2x4x64x32xbf16> to vector<2x1x64x32xbf16>
    %23 = vector.shape_cast %22 : vector<2x1x64x32xbf16> to vector<2x64x32xbf16>
    %24 = vector.shape_cast %23 : vector<2x64x32xbf16> to vector<128x32xbf16>
    %c0_14 = arith.constant 0 : index
    %c0_15 = arith.constant 0 : index
    %25 = vector.load %arg2[%c0_14, %c0_15] : memref<32x128xbf16, #tpu.memory_space<vmem>>, vector<32x128xbf16>
    %cst_16 = arith.constant dense<0.000000e+00> : vector<128x128xf32>
    %26 = tpu.matmul %24, %25, %cst_16 {dimension_numbers = #tpu.dot_dimension_numbers<[1], [0], [0], [1], [0, 0, 1, 1], [], []>} : vector<128x32xbf16>, vector<32x128xbf16>, vector<128x128xf32> -> vector<128x128xf32>
    %c0_17 = arith.constant 0 : index
    %c0_18 = arith.constant 0 : index
    %27 = vector.load %arg3[%c0_17, %c0_18] : memref<1x128xf32, #tpu.memory_space<vmem>>, vector<1x128xf32>
    %28 = vector.broadcast %27 : vector<1x128xf32> to vector<128x128xf32>
    %29 = arith.addf %26, %28 : vector<128x128xf32>
    %cst_19 = arith.constant 0.000000e+00 : f32
    %30 = vector.broadcast %cst_19 : f32 to vector<128x128xf32>
    %31 = arith.maximumf %29, %30 : vector<128x128xf32>
    %32 = arith.maximumf %21, %31 : vector<128x128xf32>
    %33 = vector.extract_strided_slice %0 {offsets = [0, 3, 0, 0], sizes = [2, 1, 64, 32], strides = [1, 1, 1, 1]} : vector<2x4x64x32xbf16> to vector<2x1x64x32xbf16>
    %34 = vector.shape_cast %33 : vector<2x1x64x32xbf16> to vector<2x64x32xbf16>
    %35 = vector.shape_cast %34 : vector<2x64x32xbf16> to vector<128x32xbf16>
    %c0_20 = arith.constant 0 : index
    %c0_21 = arith.constant 0 : index
    %36 = vector.load %arg2[%c0_20, %c0_21] : memref<32x128xbf16, #tpu.memory_space<vmem>>, vector<32x128xbf16>
    %cst_22 = arith.constant dense<0.000000e+00> : vector<128x128xf32>
    %37 = tpu.matmul %35, %36, %cst_22 {dimension_numbers = #tpu.dot_dimension_numbers<[1], [0], [0], [1], [0, 0, 1, 1], [], []>} : vector<128x32xbf16>, vector<32x128xbf16>, vector<128x128xf32> -> vector<128x128xf32>
    %c0_23 = arith.constant 0 : index
    %c0_24 = arith.constant 0 : index
    %38 = vector.load %arg3[%c0_23, %c0_24] : memref<1x128xf32, #tpu.memory_space<vmem>>, vector<1x128xf32>
    %39 = vector.broadcast %38 : vector<1x128xf32> to vector<128x128xf32>
    %40 = arith.addf %37, %39 : vector<128x128xf32>
    %cst_25 = arith.constant 0.000000e+00 : f32
    %41 = vector.broadcast %cst_25 : f32 to vector<128x128xf32>
    %42 = arith.maximumf %40, %41 : vector<128x128xf32>
    %43 = arith.maximumf %32, %42 : vector<128x128xf32>
    %44 = vector.shape_cast %43 : vector<128x128xf32> to vector<2x8x8x128xf32>
    %45 = arith.truncf %44 : vector<2x8x8x128xf32> to vector<2x8x8x128xbf16>
    %cst_26 = arith.constant 0.000000e+00 : bf16
    %46 = vector.broadcast %cst_26 : bf16 to vector<2x8x1x128xbf16>
    %cst_27 = arith.constant 0.000000e+00 : bf16
    %47 = vector.broadcast %cst_27 : bf16 to vector<2x1x8x128xbf16>
    %48 = vector.extract_strided_slice %45 {offsets = [0, 0, 0, 0], sizes = [2, 8, 7, 128], strides = [1, 1, 1, 1]} : vector<2x8x8x128xbf16> to vector<2x8x7x128xbf16>
    %49 = tpu.concatenate %46, %48 in 2 : vector<2x8x1x128xbf16>, vector<2x8x7x128xbf16> -> vector<2x8x8x128xbf16>
    %50 = vector.extract_strided_slice %45 {offsets = [0, 0, 1, 0], sizes = [2, 8, 7, 128], strides = [1, 1, 1, 1]} : vector<2x8x8x128xbf16> to vector<2x8x7x128xbf16>
    %51 = tpu.concatenate %50, %46 in 2 : vector<2x8x7x128xbf16>, vector<2x8x1x128xbf16> -> vector<2x8x8x128xbf16>
    %cst_28 = arith.constant 0.000000e+00 : f32
    %52 = vector.broadcast %cst_28 : f32 to vector<128x128xf32>
    %53 = vector.extract_strided_slice %49 {offsets = [0, 0, 0, 0], sizes = [2, 7, 8, 128], strides = [1, 1, 1, 1]} : vector<2x8x8x128xbf16> to vector<2x7x8x128xbf16>
    %54 = tpu.concatenate %47, %53 in 1 : vector<2x1x8x128xbf16>, vector<2x7x8x128xbf16> -> vector<2x8x8x128xbf16>
    %55 = vector.shape_cast %54 : vector<2x8x8x128xbf16> to vector<128x128xbf16>
    %c0_29 = arith.constant 0 : index
    %c0_30 = arith.constant 0 : index
    %c0_31 = arith.constant 0 : index
    %56 = vector.load %arg4[%c0_29, %c0_30, %c0_31] : memref<9x128x128xbf16, #tpu.memory_space<vmem>>, vector<1x128x128xbf16>
    %57 = vector.shape_cast %56 : vector<1x128x128xbf16> to vector<128x128xbf16>
    %cst_32 = arith.constant dense<0.000000e+00> : vector<128x128xf32>
    %58 = tpu.matmul %55, %57, %cst_32 {dimension_numbers = #tpu.dot_dimension_numbers<[1], [0], [0], [1], [0, 0, 1, 1], [], []>} : vector<128x128xbf16>, vector<128x128xbf16>, vector<128x128xf32> -> vector<128x128xf32>
    %59 = arith.addf %52, %58 : vector<128x128xf32>
    %60 = vector.extract_strided_slice %45 {offsets = [0, 0, 0, 0], sizes = [2, 7, 8, 128], strides = [1, 1, 1, 1]} : vector<2x8x8x128xbf16> to vector<2x7x8x128xbf16>
    %61 = tpu.concatenate %47, %60 in 1 : vector<2x1x8x128xbf16>, vector<2x7x8x128xbf16> -> vector<2x8x8x128xbf16>
    %62 = vector.shape_cast %61 : vector<2x8x8x128xbf16> to vector<128x128xbf16>
    %c1 = arith.constant 1 : index
    %c0_33 = arith.constant 0 : index
    %c0_34 = arith.constant 0 : index
    %63 = vector.load %arg4[%c1, %c0_33, %c0_34] : memref<9x128x128xbf16, #tpu.memory_space<vmem>>, vector<1x128x128xbf16>
    %64 = vector.shape_cast %63 : vector<1x128x128xbf16> to vector<128x128xbf16>
    %cst_35 = arith.constant dense<0.000000e+00> : vector<128x128xf32>
    %65 = tpu.matmul %62, %64, %cst_35 {dimension_numbers = #tpu.dot_dimension_numbers<[1], [0], [0], [1], [0, 0, 1, 1], [], []>} : vector<128x128xbf16>, vector<128x128xbf16>, vector<128x128xf32> -> vector<128x128xf32>
    %66 = arith.addf %59, %65 : vector<128x128xf32>
    %67 = vector.extract_strided_slice %51 {offsets = [0, 0, 0, 0], sizes = [2, 7, 8, 128], strides = [1, 1, 1, 1]} : vector<2x8x8x128xbf16> to vector<2x7x8x128xbf16>
    %68 = tpu.concatenate %47, %67 in 1 : vector<2x1x8x128xbf16>, vector<2x7x8x128xbf16> -> vector<2x8x8x128xbf16>
    %69 = vector.shape_cast %68 : vector<2x8x8x128xbf16> to vector<128x128xbf16>
    %c2 = arith.constant 2 : index
    %c0_36 = arith.constant 0 : index
    %c0_37 = arith.constant 0 : index
    %70 = vector.load %arg4[%c2, %c0_36, %c0_37] : memref<9x128x128xbf16, #tpu.memory_space<vmem>>, vector<1x128x128xbf16>
    %71 = vector.shape_cast %70 : vector<1x128x128xbf16> to vector<128x128xbf16>
    %cst_38 = arith.constant dense<0.000000e+00> : vector<128x128xf32>
    %72 = tpu.matmul %69, %71, %cst_38 {dimension_numbers = #tpu.dot_dimension_numbers<[1], [0], [0], [1], [0, 0, 1, 1], [], []>} : vector<128x128xbf16>, vector<128x128xbf16>, vector<128x128xf32> -> vector<128x128xf32>
    %73 = arith.addf %66, %72 : vector<128x128xf32>
    %74 = vector.shape_cast %49 : vector<2x8x8x128xbf16> to vector<128x128xbf16>
    %c3 = arith.constant 3 : index
    %c0_39 = arith.constant 0 : index
    %c0_40 = arith.constant 0 : index
    %75 = vector.load %arg4[%c3, %c0_39, %c0_40] : memref<9x128x128xbf16, #tpu.memory_space<vmem>>, vector<1x128x128xbf16>
    %76 = vector.shape_cast %75 : vector<1x128x128xbf16> to vector<128x128xbf16>
    %cst_41 = arith.constant dense<0.000000e+00> : vector<128x128xf32>
    %77 = tpu.matmul %74, %76, %cst_41 {dimension_numbers = #tpu.dot_dimension_numbers<[1], [0], [0], [1], [0, 0, 1, 1], [], []>} : vector<128x128xbf16>, vector<128x128xbf16>, vector<128x128xf32> -> vector<128x128xf32>
    %78 = arith.addf %73, %77 : vector<128x128xf32>
    %79 = vector.shape_cast %45 : vector<2x8x8x128xbf16> to vector<128x128xbf16>
    %c4 = arith.constant 4 : index
    %c0_42 = arith.constant 0 : index
    %c0_43 = arith.constant 0 : index
    %80 = vector.load %arg4[%c4, %c0_42, %c0_43] : memref<9x128x128xbf16, #tpu.memory_space<vmem>>, vector<1x128x128xbf16>
    %81 = vector.shape_cast %80 : vector<1x128x128xbf16> to vector<128x128xbf16>
    %cst_44 = arith.constant dense<0.000000e+00> : vector<128x128xf32>
    %82 = tpu.matmul %79, %81, %cst_44 {dimension_numbers = #tpu.dot_dimension_numbers<[1], [0], [0], [1], [0, 0, 1, 1], [], []>} : vector<128x128xbf16>, vector<128x128xbf16>, vector<128x128xf32> -> vector<128x128xf32>
    %83 = arith.addf %78, %82 : vector<128x128xf32>
    %84 = vector.shape_cast %51 : vector<2x8x8x128xbf16> to vector<128x128xbf16>
    %c5 = arith.constant 5 : index
    %c0_45 = arith.constant 0 : index
    %c0_46 = arith.constant 0 : index
    %85 = vector.load %arg4[%c5, %c0_45, %c0_46] : memref<9x128x128xbf16, #tpu.memory_space<vmem>>, vector<1x128x128xbf16>
    %86 = vector.shape_cast %85 : vector<1x128x128xbf16> to vector<128x128xbf16>
    %cst_47 = arith.constant dense<0.000000e+00> : vector<128x128xf32>
    %87 = tpu.matmul %84, %86, %cst_47 {dimension_numbers = #tpu.dot_dimension_numbers<[1], [0], [0], [1], [0, 0, 1, 1], [], []>} : vector<128x128xbf16>, vector<128x128xbf16>, vector<128x128xf32> -> vector<128x128xf32>
    %88 = arith.addf %83, %87 : vector<128x128xf32>
    %89 = vector.extract_strided_slice %49 {offsets = [0, 1, 0, 0], sizes = [2, 7, 8, 128], strides = [1, 1, 1, 1]} : vector<2x8x8x128xbf16> to vector<2x7x8x128xbf16>
    %90 = tpu.concatenate %89, %47 in 1 : vector<2x7x8x128xbf16>, vector<2x1x8x128xbf16> -> vector<2x8x8x128xbf16>
    %91 = vector.shape_cast %90 : vector<2x8x8x128xbf16> to vector<128x128xbf16>
    %c6 = arith.constant 6 : index
    %c0_48 = arith.constant 0 : index
    %c0_49 = arith.constant 0 : index
    %92 = vector.load %arg4[%c6, %c0_48, %c0_49] : memref<9x128x128xbf16, #tpu.memory_space<vmem>>, vector<1x128x128xbf16>
    %93 = vector.shape_cast %92 : vector<1x128x128xbf16> to vector<128x128xbf16>
    %cst_50 = arith.constant dense<0.000000e+00> : vector<128x128xf32>
    %94 = tpu.matmul %91, %93, %cst_50 {dimension_numbers = #tpu.dot_dimension_numbers<[1], [0], [0], [1], [0, 0, 1, 1], [], []>} : vector<128x128xbf16>, vector<128x128xbf16>, vector<128x128xf32> -> vector<128x128xf32>
    %95 = arith.addf %88, %94 : vector<128x128xf32>
    %96 = vector.extract_strided_slice %45 {offsets = [0, 1, 0, 0], sizes = [2, 7, 8, 128], strides = [1, 1, 1, 1]} : vector<2x8x8x128xbf16> to vector<2x7x8x128xbf16>
    %97 = tpu.concatenate %96, %47 in 1 : vector<2x7x8x128xbf16>, vector<2x1x8x128xbf16> -> vector<2x8x8x128xbf16>
    %98 = vector.shape_cast %97 : vector<2x8x8x128xbf16> to vector<128x128xbf16>
    %c7 = arith.constant 7 : index
    %c0_51 = arith.constant 0 : index
    %c0_52 = arith.constant 0 : index
    %99 = vector.load %arg4[%c7, %c0_51, %c0_52] : memref<9x128x128xbf16, #tpu.memory_space<vmem>>, vector<1x128x128xbf16>
    %100 = vector.shape_cast %99 : vector<1x128x128xbf16> to vector<128x128xbf16>
    %cst_53 = arith.constant dense<0.000000e+00> : vector<128x128xf32>
    %101 = tpu.matmul %98, %100, %cst_53 {dimension_numbers = #tpu.dot_dimension_numbers<[1], [0], [0], [1], [0, 0, 1, 1], [], []>} : vector<128x128xbf16>, vector<128x128xbf16>, vector<128x128xf32> -> vector<128x128xf32>
    %102 = arith.addf %95, %101 : vector<128x128xf32>
    %103 = vector.extract_strided_slice %51 {offsets = [0, 1, 0, 0], sizes = [2, 7, 8, 128], strides = [1, 1, 1, 1]} : vector<2x8x8x128xbf16> to vector<2x7x8x128xbf16>
    %104 = tpu.concatenate %103, %47 in 1 : vector<2x7x8x128xbf16>, vector<2x1x8x128xbf16> -> vector<2x8x8x128xbf16>
    %105 = vector.shape_cast %104 : vector<2x8x8x128xbf16> to vector<128x128xbf16>
    %c8 = arith.constant 8 : index
    %c0_54 = arith.constant 0 : index
    %c0_55 = arith.constant 0 : index
    %106 = vector.load %arg4[%c8, %c0_54, %c0_55] : memref<9x128x128xbf16, #tpu.memory_space<vmem>>, vector<1x128x128xbf16>
    %107 = vector.shape_cast %106 : vector<1x128x128xbf16> to vector<128x128xbf16>
    %cst_56 = arith.constant dense<0.000000e+00> : vector<128x128xf32>
    %108 = tpu.matmul %105, %107, %cst_56 {dimension_numbers = #tpu.dot_dimension_numbers<[1], [0], [0], [1], [0, 0, 1, 1], [], []>} : vector<128x128xbf16>, vector<128x128xbf16>, vector<128x128xf32> -> vector<128x128xf32>
    %109 = arith.addf %102, %108 : vector<128x128xf32>
    %c0_57 = arith.constant 0 : index
    %c0_58 = arith.constant 0 : index
    %110 = vector.load %arg5[%c0_57, %c0_58] : memref<1x128xf32, #tpu.memory_space<vmem>>, vector<1x128xf32>
    %111 = vector.broadcast %110 : vector<1x128xf32> to vector<128x128xf32>
    %112 = arith.addf %109, %111 : vector<128x128xf32>
    %cst_59 = arith.constant 0.000000e+00 : f32
    %113 = vector.broadcast %cst_59 : f32 to vector<128x128xf32>
    %114 = arith.maximumf %112, %113 : vector<128x128xf32>
    %115 = vector.shape_cast %114 : vector<128x128xf32> to vector<2x8x8x128xf32>
    %116 = vector.shape_cast %115 : vector<2x8x8x128xf32> to vector<8x2x8x128xf32>
    %117 = vector.extract_strided_slice %116 {offsets = [0, 0, 0, 0], sizes = [8, 1, 8, 128], strides = [1, 1, 1, 1]} : vector<8x2x8x128xf32> to vector<8x1x8x128xf32>
    %118 = vector.shape_cast %117 : vector<8x1x8x128xf32> to vector<8x8x128xf32>
    %119 = vector.extract_strided_slice %116 {offsets = [0, 1, 0, 0], sizes = [8, 1, 8, 128], strides = [1, 1, 1, 1]} : vector<8x2x8x128xf32> to vector<8x1x8x128xf32>
    %120 = vector.shape_cast %119 : vector<8x1x8x128xf32> to vector<8x8x128xf32>
    %121 = arith.maximumf %118, %120 : vector<8x8x128xf32>
    %122 = vector.extract_strided_slice %121 {offsets = [0, 0, 0], sizes = [8, 1, 128], strides = [1, 1, 1]} : vector<8x8x128xf32> to vector<8x1x128xf32>
    %123 = vector.extract_strided_slice %121 {offsets = [0, 1, 0], sizes = [8, 1, 128], strides = [1, 1, 1]} : vector<8x8x128xf32> to vector<8x1x128xf32>
    %124 = arith.maximumf %122, %123 : vector<8x1x128xf32>
    %125 = vector.extract_strided_slice %121 {offsets = [0, 2, 0], sizes = [8, 1, 128], strides = [1, 1, 1]} : vector<8x8x128xf32> to vector<8x1x128xf32>
    %126 = vector.extract_strided_slice %121 {offsets = [0, 3, 0], sizes = [8, 1, 128], strides = [1, 1, 1]} : vector<8x8x128xf32> to vector<8x1x128xf32>
    %127 = arith.maximumf %125, %126 : vector<8x1x128xf32>
    %128 = vector.extract_strided_slice %121 {offsets = [0, 4, 0], sizes = [8, 1, 128], strides = [1, 1, 1]} : vector<8x8x128xf32> to vector<8x1x128xf32>
    %129 = vector.extract_strided_slice %121 {offsets = [0, 5, 0], sizes = [8, 1, 128], strides = [1, 1, 1]} : vector<8x8x128xf32> to vector<8x1x128xf32>
    %130 = arith.maximumf %128, %129 : vector<8x1x128xf32>
    %131 = vector.extract_strided_slice %121 {offsets = [0, 6, 0], sizes = [8, 1, 128], strides = [1, 1, 1]} : vector<8x8x128xf32> to vector<8x1x128xf32>
    %132 = vector.extract_strided_slice %121 {offsets = [0, 7, 0], sizes = [8, 1, 128], strides = [1, 1, 1]} : vector<8x8x128xf32> to vector<8x1x128xf32>
    %133 = arith.maximumf %131, %132 : vector<8x1x128xf32>
    %cst_60 = arith.constant 0.000000e+00 : f32
    %134 = vector.broadcast %cst_60 : f32 to vector<8x4x128xf32>
    %135 = tpu.concatenate %124, %127, %130, %133, %134 in 1 : vector<8x1x128xf32>, vector<8x1x128xf32>, vector<8x1x128xf32>, vector<8x1x128xf32>, vector<8x4x128xf32> -> vector<8x8x128xf32>
    %136 = vector.shape_cast %135 : vector<8x8x128xf32> to vector<2x4x8x128xf32>
    %137 = arith.truncf %136 : vector<2x4x8x128xf32> to vector<2x4x8x128xbf16>
    %cst_61 = arith.constant 0.000000e+00 : bf16
    %138 = vector.broadcast %cst_61 : bf16 to vector<2x4x1x128xbf16>
    %cst_62 = arith.constant 0.000000e+00 : bf16
    %139 = vector.broadcast %cst_62 : bf16 to vector<2x1x8x128xbf16>
    %140 = vector.extract_strided_slice %137 {offsets = [0, 0, 0, 0], sizes = [2, 4, 7, 128], strides = [1, 1, 1, 1]} : vector<2x4x8x128xbf16> to vector<2x4x7x128xbf16>
    %141 = tpu.concatenate %138, %140 in 2 : vector<2x4x1x128xbf16>, vector<2x4x7x128xbf16> -> vector<2x4x8x128xbf16>
    %142 = vector.extract_strided_slice %137 {offsets = [0, 0, 1, 0], sizes = [2, 4, 7, 128], strides = [1, 1, 1, 1]} : vector<2x4x8x128xbf16> to vector<2x4x7x128xbf16>
    %143 = tpu.concatenate %142, %138 in 2 : vector<2x4x7x128xbf16>, vector<2x4x1x128xbf16> -> vector<2x4x8x128xbf16>
    %cst_63 = arith.constant 0.000000e+00 : f32
    %144 = vector.broadcast %cst_63 : f32 to vector<64x128xf32>
    %145 = vector.extract_strided_slice %141 {offsets = [0, 0, 0, 0], sizes = [2, 3, 8, 128], strides = [1, 1, 1, 1]} : vector<2x4x8x128xbf16> to vector<2x3x8x128xbf16>
    %146 = tpu.concatenate %139, %145 in 1 : vector<2x1x8x128xbf16>, vector<2x3x8x128xbf16> -> vector<2x4x8x128xbf16>
    %147 = vector.shape_cast %146 : vector<2x4x8x128xbf16> to vector<64x128xbf16>
    %c0_64 = arith.constant 0 : index
    %c0_65 = arith.constant 0 : index
    %c0_66 = arith.constant 0 : index
    %148 = vector.load %arg6[%c0_64, %c0_65, %c0_66] : memref<9x128x128xbf16, #tpu.memory_space<vmem>>, vector<1x128x128xbf16>
    %149 = vector.shape_cast %148 : vector<1x128x128xbf16> to vector<128x128xbf16>
    %cst_67 = arith.constant dense<0.000000e+00> : vector<64x128xf32>
    %150 = tpu.matmul %147, %149, %cst_67 {dimension_numbers = #tpu.dot_dimension_numbers<[1], [0], [0], [1], [0, 0, 1, 1], [], []>} : vector<64x128xbf16>, vector<128x128xbf16>, vector<64x128xf32> -> vector<64x128xf32>
    %151 = arith.addf %144, %150 : vector<64x128xf32>
    %152 = vector.extract_strided_slice %137 {offsets = [0, 0, 0, 0], sizes = [2, 3, 8, 128], strides = [1, 1, 1, 1]} : vector<2x4x8x128xbf16> to vector<2x3x8x128xbf16>
    %153 = tpu.concatenate %139, %152 in 1 : vector<2x1x8x128xbf16>, vector<2x3x8x128xbf16> -> vector<2x4x8x128xbf16>
    %154 = vector.shape_cast %153 : vector<2x4x8x128xbf16> to vector<64x128xbf16>
    %c1_68 = arith.constant 1 : index
    %c0_69 = arith.constant 0 : index
    %c0_70 = arith.constant 0 : index
    %155 = vector.load %arg6[%c1_68, %c0_69, %c0_70] : memref<9x128x128xbf16, #tpu.memory_space<vmem>>, vector<1x128x128xbf16>
    %156 = vector.shape_cast %155 : vector<1x128x128xbf16> to vector<128x128xbf16>
    %cst_71 = arith.constant dense<0.000000e+00> : vector<64x128xf32>
    %157 = tpu.matmul %154, %156, %cst_71 {dimension_numbers = #tpu.dot_dimension_numbers<[1], [0], [0], [1], [0, 0, 1, 1], [], []>} : vector<64x128xbf16>, vector<128x128xbf16>, vector<64x128xf32> -> vector<64x128xf32>
    %158 = arith.addf %151, %157 : vector<64x128xf32>
    %159 = vector.extract_strided_slice %143 {offsets = [0, 0, 0, 0], sizes = [2, 3, 8, 128], strides = [1, 1, 1, 1]} : vector<2x4x8x128xbf16> to vector<2x3x8x128xbf16>
    %160 = tpu.concatenate %139, %159 in 1 : vector<2x1x8x128xbf16>, vector<2x3x8x128xbf16> -> vector<2x4x8x128xbf16>
    %161 = vector.shape_cast %160 : vector<2x4x8x128xbf16> to vector<64x128xbf16>
    %c2_72 = arith.constant 2 : index
    %c0_73 = arith.constant 0 : index
    %c0_74 = arith.constant 0 : index
    %162 = vector.load %arg6[%c2_72, %c0_73, %c0_74] : memref<9x128x128xbf16, #tpu.memory_space<vmem>>, vector<1x128x128xbf16>
    %163 = vector.shape_cast %162 : vector<1x128x128xbf16> to vector<128x128xbf16>
    %cst_75 = arith.constant dense<0.000000e+00> : vector<64x128xf32>
    %164 = tpu.matmul %161, %163, %cst_75 {dimension_numbers = #tpu.dot_dimension_numbers<[1], [0], [0], [1], [0, 0, 1, 1], [], []>} : vector<64x128xbf16>, vector<128x128xbf16>, vector<64x128xf32> -> vector<64x128xf32>
    %165 = arith.addf %158, %164 : vector<64x128xf32>
    %166 = vector.shape_cast %141 : vector<2x4x8x128xbf16> to vector<64x128xbf16>
    %c3_76 = arith.constant 3 : index
    %c0_77 = arith.constant 0 : index
    %c0_78 = arith.constant 0 : index
    %167 = vector.load %arg6[%c3_76, %c0_77, %c0_78] : memref<9x128x128xbf16, #tpu.memory_space<vmem>>, vector<1x128x128xbf16>
    %168 = vector.shape_cast %167 : vector<1x128x128xbf16> to vector<128x128xbf16>
    %cst_79 = arith.constant dense<0.000000e+00> : vector<64x128xf32>
    %169 = tpu.matmul %166, %168, %cst_79 {dimension_numbers = #tpu.dot_dimension_numbers<[1], [0], [0], [1], [0, 0, 1, 1], [], []>} : vector<64x128xbf16>, vector<128x128xbf16>, vector<64x128xf32> -> vector<64x128xf32>
    %170 = arith.addf %165, %169 : vector<64x128xf32>
    %171 = vector.shape_cast %137 : vector<2x4x8x128xbf16> to vector<64x128xbf16>
    %c4_80 = arith.constant 4 : index
    %c0_81 = arith.constant 0 : index
    %c0_82 = arith.constant 0 : index
    %172 = vector.load %arg6[%c4_80, %c0_81, %c0_82] : memref<9x128x128xbf16, #tpu.memory_space<vmem>>, vector<1x128x128xbf16>
    %173 = vector.shape_cast %172 : vector<1x128x128xbf16> to vector<128x128xbf16>
    %cst_83 = arith.constant dense<0.000000e+00> : vector<64x128xf32>
    %174 = tpu.matmul %171, %173, %cst_83 {dimension_numbers = #tpu.dot_dimension_numbers<[1], [0], [0], [1], [0, 0, 1, 1], [], []>} : vector<64x128xbf16>, vector<128x128xbf16>, vector<64x128xf32> -> vector<64x128xf32>
    %175 = arith.addf %170, %174 : vector<64x128xf32>
    %176 = vector.shape_cast %143 : vector<2x4x8x128xbf16> to vector<64x128xbf16>
    %c5_84 = arith.constant 5 : index
    %c0_85 = arith.constant 0 : index
    %c0_86 = arith.constant 0 : index
    %177 = vector.load %arg6[%c5_84, %c0_85, %c0_86] : memref<9x128x128xbf16, #tpu.memory_space<vmem>>, vector<1x128x128xbf16>
    %178 = vector.shape_cast %177 : vector<1x128x128xbf16> to vector<128x128xbf16>
    %cst_87 = arith.constant dense<0.000000e+00> : vector<64x128xf32>
    %179 = tpu.matmul %176, %178, %cst_87 {dimension_numbers = #tpu.dot_dimension_numbers<[1], [0], [0], [1], [0, 0, 1, 1], [], []>} : vector<64x128xbf16>, vector<128x128xbf16>, vector<64x128xf32> -> vector<64x128xf32>
    %180 = arith.addf %175, %179 : vector<64x128xf32>
    %181 = vector.extract_strided_slice %141 {offsets = [0, 1, 0, 0], sizes = [2, 3, 8, 128], strides = [1, 1, 1, 1]} : vector<2x4x8x128xbf16> to vector<2x3x8x128xbf16>
    %182 = tpu.concatenate %181, %139 in 1 : vector<2x3x8x128xbf16>, vector<2x1x8x128xbf16> -> vector<2x4x8x128xbf16>
    %183 = vector.shape_cast %182 : vector<2x4x8x128xbf16> to vector<64x128xbf16>
    %c6_88 = arith.constant 6 : index
    %c0_89 = arith.constant 0 : index
    %c0_90 = arith.constant 0 : index
    %184 = vector.load %arg6[%c6_88, %c0_89, %c0_90] : memref<9x128x128xbf16, #tpu.memory_space<vmem>>, vector<1x128x128xbf16>
    %185 = vector.shape_cast %184 : vector<1x128x128xbf16> to vector<128x128xbf16>
    %cst_91 = arith.constant dense<0.000000e+00> : vector<64x128xf32>
    %186 = tpu.matmul %183, %185, %cst_91 {dimension_numbers = #tpu.dot_dimension_numbers<[1], [0], [0], [1], [0, 0, 1, 1], [], []>} : vector<64x128xbf16>, vector<128x128xbf16>, vector<64x128xf32> -> vector<64x128xf32>
    %187 = arith.addf %180, %186 : vector<64x128xf32>
    %188 = vector.extract_strided_slice %137 {offsets = [0, 1, 0, 0], sizes = [2, 3, 8, 128], strides = [1, 1, 1, 1]} : vector<2x4x8x128xbf16> to vector<2x3x8x128xbf16>
    %189 = tpu.concatenate %188, %139 in 1 : vector<2x3x8x128xbf16>, vector<2x1x8x128xbf16> -> vector<2x4x8x128xbf16>
    %190 = vector.shape_cast %189 : vector<2x4x8x128xbf16> to vector<64x128xbf16>
    %c7_92 = arith.constant 7 : index
    %c0_93 = arith.constant 0 : index
    %c0_94 = arith.constant 0 : index
    %191 = vector.load %arg6[%c7_92, %c0_93, %c0_94] : memref<9x128x128xbf16, #tpu.memory_space<vmem>>, vector<1x128x128xbf16>
    %192 = vector.shape_cast %191 : vector<1x128x128xbf16> to vector<128x128xbf16>
    %cst_95 = arith.constant dense<0.000000e+00> : vector<64x128xf32>
    %193 = tpu.matmul %190, %192, %cst_95 {dimension_numbers = #tpu.dot_dimension_numbers<[1], [0], [0], [1], [0, 0, 1, 1], [], []>} : vector<64x128xbf16>, vector<128x128xbf16>, vector<64x128xf32> -> vector<64x128xf32>
    %194 = arith.addf %187, %193 : vector<64x128xf32>
    %195 = vector.extract_strided_slice %143 {offsets = [0, 1, 0, 0], sizes = [2, 3, 8, 128], strides = [1, 1, 1, 1]} : vector<2x4x8x128xbf16> to vector<2x3x8x128xbf16>
    %196 = tpu.concatenate %195, %139 in 1 : vector<2x3x8x128xbf16>, vector<2x1x8x128xbf16> -> vector<2x4x8x128xbf16>
    %197 = vector.shape_cast %196 : vector<2x4x8x128xbf16> to vector<64x128xbf16>
    %c8_96 = arith.constant 8 : index
    %c0_97 = arith.constant 0 : index
    %c0_98 = arith.constant 0 : index
    %198 = vector.load %arg6[%c8_96, %c0_97, %c0_98] : memref<9x128x128xbf16, #tpu.memory_space<vmem>>, vector<1x128x128xbf16>
    %199 = vector.shape_cast %198 : vector<1x128x128xbf16> to vector<128x128xbf16>
    %cst_99 = arith.constant dense<0.000000e+00> : vector<64x128xf32>
    %200 = tpu.matmul %197, %199, %cst_99 {dimension_numbers = #tpu.dot_dimension_numbers<[1], [0], [0], [1], [0, 0, 1, 1], [], []>} : vector<64x128xbf16>, vector<128x128xbf16>, vector<64x128xf32> -> vector<64x128xf32>
    %201 = arith.addf %194, %200 : vector<64x128xf32>
    %c0_100 = arith.constant 0 : index
    %c0_101 = arith.constant 0 : index
    %202 = vector.load %arg7[%c0_100, %c0_101] : memref<1x128xf32, #tpu.memory_space<vmem>>, vector<1x128xf32>
    %203 = vector.broadcast %202 : vector<1x128xf32> to vector<64x128xf32>
    %204 = arith.addf %201, %203 : vector<64x128xf32>
    %cst_102 = arith.constant 0.000000e+00 : f32
    %205 = vector.broadcast %cst_102 : f32 to vector<64x128xf32>
    %206 = arith.maximumf %204, %205 : vector<64x128xf32>
    %207 = vector.shape_cast %206 : vector<64x128xf32> to vector<2x4x8x128xf32>
    %208 = vector.extract_strided_slice %207 {offsets = [0, 0, 0, 0], sizes = [2, 1, 1, 128], strides = [1, 1, 1, 1]} : vector<2x4x8x128xf32> to vector<2x1x1x128xf32>
    %209 = vector.shape_cast %208 : vector<2x1x1x128xf32> to vector<2x128xf32>
    %210 = vector.extract_strided_slice %207 {offsets = [0, 0, 1, 0], sizes = [2, 1, 1, 128], strides = [1, 1, 1, 1]} : vector<2x4x8x128xf32> to vector<2x1x1x128xf32>
    %211 = vector.shape_cast %210 : vector<2x1x1x128xf32> to vector<2x128xf32>
    %212 = arith.maximumf %209, %211 : vector<2x128xf32>
    %213 = vector.extract_strided_slice %207 {offsets = [0, 1, 0, 0], sizes = [2, 1, 1, 128], strides = [1, 1, 1, 1]} : vector<2x4x8x128xf32> to vector<2x1x1x128xf32>
    %214 = vector.shape_cast %213 : vector<2x1x1x128xf32> to vector<2x128xf32>
    %215 = vector.extract_strided_slice %207 {offsets = [0, 1, 1, 0], sizes = [2, 1, 1, 128], strides = [1, 1, 1, 1]} : vector<2x4x8x128xf32> to vector<2x1x1x128xf32>
    %216 = vector.shape_cast %215 : vector<2x1x1x128xf32> to vector<2x128xf32>
    %217 = arith.maximumf %214, %216 : vector<2x128xf32>
    %218 = arith.maximumf %212, %217 : vector<2x128xf32>
    %219 = vector.extract_strided_slice %207 {offsets = [0, 0, 2, 0], sizes = [2, 1, 1, 128], strides = [1, 1, 1, 1]} : vector<2x4x8x128xf32> to vector<2x1x1x128xf32>
    %220 = vector.shape_cast %219 : vector<2x1x1x128xf32> to vector<2x128xf32>
    %221 = vector.extract_strided_slice %207 {offsets = [0, 0, 3, 0], sizes = [2, 1, 1, 128], strides = [1, 1, 1, 1]} : vector<2x4x8x128xf32> to vector<2x1x1x128xf32>
    %222 = vector.shape_cast %221 : vector<2x1x1x128xf32> to vector<2x128xf32>
    %223 = arith.maximumf %220, %222 : vector<2x128xf32>
    %224 = vector.extract_strided_slice %207 {offsets = [0, 1, 2, 0], sizes = [2, 1, 1, 128], strides = [1, 1, 1, 1]} : vector<2x4x8x128xf32> to vector<2x1x1x128xf32>
    %225 = vector.shape_cast %224 : vector<2x1x1x128xf32> to vector<2x128xf32>
    %226 = vector.extract_strided_slice %207 {offsets = [0, 1, 3, 0], sizes = [2, 1, 1, 128], strides = [1, 1, 1, 1]} : vector<2x4x8x128xf32> to vector<2x1x1x128xf32>
    %227 = vector.shape_cast %226 : vector<2x1x1x128xf32> to vector<2x128xf32>
    %228 = arith.maximumf %225, %227 : vector<2x128xf32>
    %229 = arith.maximumf %223, %228 : vector<2x128xf32>
    %230 = arith.addf %218, %229 : vector<2x128xf32>
    %231 = vector.extract_strided_slice %207 {offsets = [0, 2, 0, 0], sizes = [2, 1, 1, 128], strides = [1, 1, 1, 1]} : vector<2x4x8x128xf32> to vector<2x1x1x128xf32>
    %232 = vector.shape_cast %231 : vector<2x1x1x128xf32> to vector<2x128xf32>
    %233 = vector.extract_strided_slice %207 {offsets = [0, 2, 1, 0], sizes = [2, 1, 1, 128], strides = [1, 1, 1, 1]} : vector<2x4x8x128xf32> to vector<2x1x1x128xf32>
    %234 = vector.shape_cast %233 : vector<2x1x1x128xf32> to vector<2x128xf32>
    %235 = arith.maximumf %232, %234 : vector<2x128xf32>
    %236 = vector.extract_strided_slice %207 {offsets = [0, 3, 0, 0], sizes = [2, 1, 1, 128], strides = [1, 1, 1, 1]} : vector<2x4x8x128xf32> to vector<2x1x1x128xf32>
    %237 = vector.shape_cast %236 : vector<2x1x1x128xf32> to vector<2x128xf32>
    %238 = vector.extract_strided_slice %207 {offsets = [0, 3, 1, 0], sizes = [2, 1, 1, 128], strides = [1, 1, 1, 1]} : vector<2x4x8x128xf32> to vector<2x1x1x128xf32>
    %239 = vector.shape_cast %238 : vector<2x1x1x128xf32> to vector<2x128xf32>
    %240 = arith.maximumf %237, %239 : vector<2x128xf32>
    %241 = arith.maximumf %235, %240 : vector<2x128xf32>
    %242 = arith.addf %230, %241 : vector<2x128xf32>
    %243 = vector.extract_strided_slice %207 {offsets = [0, 2, 2, 0], sizes = [2, 1, 1, 128], strides = [1, 1, 1, 1]} : vector<2x4x8x128xf32> to vector<2x1x1x128xf32>
    %244 = vector.shape_cast %243 : vector<2x1x1x128xf32> to vector<2x128xf32>
    %245 = vector.extract_strided_slice %207 {offsets = [0, 2, 3, 0], sizes = [2, 1, 1, 128], strides = [1, 1, 1, 1]} : vector<2x4x8x128xf32> to vector<2x1x1x128xf32>
    %246 = vector.shape_cast %245 : vector<2x1x1x128xf32> to vector<2x128xf32>
    %247 = arith.maximumf %244, %246 : vector<2x128xf32>
    %248 = vector.extract_strided_slice %207 {offsets = [0, 3, 2, 0], sizes = [2, 1, 1, 128], strides = [1, 1, 1, 1]} : vector<2x4x8x128xf32> to vector<2x1x1x128xf32>
    %249 = vector.shape_cast %248 : vector<2x1x1x128xf32> to vector<2x128xf32>
    %250 = vector.extract_strided_slice %207 {offsets = [0, 3, 3, 0], sizes = [2, 1, 1, 128], strides = [1, 1, 1, 1]} : vector<2x4x8x128xf32> to vector<2x1x1x128xf32>
    %251 = vector.shape_cast %250 : vector<2x1x1x128xf32> to vector<2x128xf32>
    %252 = arith.maximumf %249, %251 : vector<2x128xf32>
    %253 = arith.maximumf %247, %252 : vector<2x128xf32>
    %254 = arith.addf %242, %253 : vector<2x128xf32>
    %cst_103 = arith.constant 2.500000e-01 : f32
    %255 = vector.broadcast %cst_103 : f32 to vector<2x128xf32>
    %256 = arith.mulf %254, %255 : vector<2x128xf32>
    %257 = arith.truncf %256 : vector<2x128xf32> to vector<2x128xbf16>
    %c0_104 = arith.constant 0 : index
    %c0_105 = arith.constant 0 : index
    %258 = vector.load %arg8[%c0_104, %c0_105] : memref<128x256xbf16, #tpu.memory_space<vmem>>, vector<128x256xbf16>
    %cst_106 = arith.constant dense<0.000000e+00> : vector<2x256xf32>
    %259 = tpu.matmul %257, %258, %cst_106 {dimension_numbers = #tpu.dot_dimension_numbers<[1], [0], [0], [1], [0, 0, 1, 1], [], []>} : vector<2x128xbf16>, vector<128x256xbf16>, vector<2x256xf32> -> vector<2x256xf32>
    %c0_107 = arith.constant 0 : index
    %c0_108 = arith.constant 0 : index
    %260 = vector.load %arg9[%c0_107, %c0_108] : memref<1x256xf32, #tpu.memory_space<vmem>>, vector<1x256xf32>
    %261 = vector.broadcast %260 : vector<1x256xf32> to vector<2x256xf32>
    %262 = arith.addf %259, %261 : vector<2x256xf32>
    %cst_109 = arith.constant 0.000000e+00 : f32
    %263 = vector.broadcast %cst_109 : f32 to vector<2x256xf32>
    %264 = arith.maximumf %262, %263 : vector<2x256xf32>
    %265 = arith.truncf %264 : vector<2x256xf32> to vector<2x256xbf16>
    %c0_110 = arith.constant 0 : index
    %c0_111 = arith.constant 0 : index
    %266 = vector.load %arg10[%c0_110, %c0_111] : memref<256x128xbf16, #tpu.memory_space<vmem>>, vector<256x128xbf16>
    %cst_112 = arith.constant dense<0.000000e+00> : vector<2x128xf32>
    %267 = tpu.matmul %265, %266, %cst_112 {dimension_numbers = #tpu.dot_dimension_numbers<[1], [0], [0], [1], [0, 0, 1, 1], [], []>} : vector<2x256xbf16>, vector<256x128xbf16>, vector<2x128xf32> -> vector<2x128xf32>
    %c0_113 = arith.constant 0 : index
    %c0_114 = arith.constant 0 : index
    %268 = vector.load %arg11[%c0_113, %c0_114] : memref<1x128xf32, #tpu.memory_space<vmem>>, vector<1x128xf32>
    %269 = vector.broadcast %268 : vector<1x128xf32> to vector<2x128xf32>
    %270 = arith.addf %267, %269 : vector<2x128xf32>
    %cst_115 = arith.constant 0.000000e+00 : f32
    %271 = vector.broadcast %cst_115 : f32 to vector<2x128xf32>
    %272 = arith.maximumf %270, %271 : vector<2x128xf32>
    %273 = arith.truncf %272 : vector<2x128xf32> to vector<2x128xbf16>
    %c0_116 = arith.constant 0 : index
    %c0_117 = arith.constant 0 : index
    %274 = vector.load %arg12[%c0_116, %c0_117] : memref<128x128xbf16, #tpu.memory_space<vmem>>, vector<128x128xbf16>
    %cst_118 = arith.constant dense<0.000000e+00> : vector<2x128xf32>
    %275 = tpu.matmul %273, %274, %cst_118 {dimension_numbers = #tpu.dot_dimension_numbers<[1], [0], [0], [1], [0, 0, 1, 1], [], []>} : vector<2x128xbf16>, vector<128x128xbf16>, vector<2x128xf32> -> vector<2x128xf32>
    %c0_119 = arith.constant 0 : index
    %c0_120 = arith.constant 0 : index
    %276 = vector.load %arg13[%c0_119, %c0_120] : memref<1x128xf32, #tpu.memory_space<vmem>>, vector<1x128xf32>
    %277 = vector.broadcast %276 : vector<1x128xf32> to vector<2x128xf32>
    %278 = arith.addf %275, %277 : vector<2x128xf32>
    %c0_121 = arith.constant 0 : index
    %c0_122 = arith.constant 0 : index
    %279 = vector.load %arg14[%c0_121, %c0_122] : memref<2x128xf32, #tpu.memory_space<vmem>>, vector<2x128xf32>
    tpu.vector_store %arg14[%c0_121, %c0_122], %278 {strides = array<i32>} : memref<2x128xf32, #tpu.memory_space<vmem>>, vector<2x128xf32>,
    return
  }
  func.func @transform_0(%arg0: i32) -> (i32, i32, i32, i32) {
    %c0_i32 = arith.constant 0 : i32
    %c0_i32_0 = arith.constant 0 : i32
    %c0_i32_1 = arith.constant 0 : i32
    %c0_i32_2 = arith.constant 0 : i32
    return %arg0, %c0_i32, %c0_i32_0, %c0_i32_1 : i32, i32, i32, i32
  }
  func.func @transform_1(%arg0: i32) -> (i32, i32) {
    %c0_i32 = arith.constant 0 : i32
    %c0_i32_0 = arith.constant 0 : i32
    %c0_i32_1 = arith.constant 0 : i32
    return %c0_i32, %c0_i32_0 : i32, i32
  }
  func.func @transform_2(%arg0: i32) -> (i32, i32) {
    %c0_i32 = arith.constant 0 : i32
    %c0_i32_0 = arith.constant 0 : i32
    %c0_i32_1 = arith.constant 0 : i32
    return %c0_i32, %c0_i32_0 : i32, i32
  }
  func.func @transform_3(%arg0: i32) -> (i32, i32, i32) {
    %c0_i32 = arith.constant 0 : i32
    %c0_i32_0 = arith.constant 0 : i32
    %c0_i32_1 = arith.constant 0 : i32
    %c0_i32_2 = arith.constant 0 : i32
    return %c0_i32, %c0_i32_0, %c0_i32_1 : i32, i32, i32
  }
  func.func @transform_4(%arg0: i32) -> (i32, i32) {
    %c0_i32 = arith.constant 0 : i32
    %c0_i32_0 = arith.constant 0 : i32
    %c0_i32_1 = arith.constant 0 : i32
    return %c0_i32, %c0_i32_0 : i32, i32
  }
  func.func @transform_5(%arg0: i32) -> (i32, i32, i32) {
    %c0_i32 = arith.constant 0 : i32
    %c0_i32_0 = arith.constant 0 : i32
    %c0_i32_1 = arith.constant 0 : i32
    %c0_i32_2 = arith.constant 0 : i32
    return %c0_i32, %c0_i32_0, %c0_i32_1 : i32, i32, i32
  }
  func.func @transform_6(%arg0: i32) -> (i32, i32) {
    %c0_i32 = arith.constant 0 : i32
    %c0_i32_0 = arith.constant 0 : i32
    %c0_i32_1 = arith.constant 0 : i32
    return %c0_i32, %c0_i32_0 : i32, i32
  }
  func.func @transform_7(%arg0: i32) -> (i32, i32) {
    %c0_i32 = arith.constant 0 : i32
    %c0_i32_0 = arith.constant 0 : i32
    %c0_i32_1 = arith.constant 0 : i32
    return %c0_i32, %c0_i32_0 : i32, i32
  }
  func.func @transform_8(%arg0: i32) -> (i32, i32) {
    %c0_i32 = arith.constant 0 : i32
    %c0_i32_0 = arith.constant 0 : i32
    %c0_i32_1 = arith.constant 0 : i32
    return %c0_i32, %c0_i32_0 : i32, i32
  }
  func.func @transform_9(%arg0: i32) -> (i32, i32) {
    %c0_i32 = arith.constant 0 : i32
    %c0_i32_0 = arith.constant 0 : i32
    %c0_i32_1 = arith.constant 0 : i32
    return %c0_i32, %c0_i32_0 : i32, i32
  }
  func.func @transform_10(%arg0: i32) -> (i32, i32) {
    %c0_i32 = arith.constant 0 : i32
    %c0_i32_0 = arith.constant 0 : i32
    %c0_i32_1 = arith.constant 0 : i32
    return %c0_i32, %c0_i32_0 : i32, i32
  }
  func.func @transform_11(%arg0: i32) -> (i32, i32) {
    %c0_i32 = arith.constant 0 : i32
    %c0_i32_0 = arith.constant 0 : i32
    %c0_i32_1 = arith.constant 0 : i32
    return %c0_i32, %c0_i32_0 : i32, i32
  }
  func.func @transform_12(%arg0: i32) -> (i32, i32) {
    %c0_i32 = arith.constant 0 : i32
    %c0_i32_0 = arith.constant 0 : i32
    %c0_i32_1 = arith.constant 0 : i32
    return %c0_i32, %c0_i32_0 : i32, i32
  }
  func.func @transform_13(%arg0: i32) -> (i32, i32) {
    %c0_i32 = arith.constant 0 : i32
    %c0_i32_0 = arith.constant 0 : i32
    return %arg0, %c0_i32 : i32, i32
  }
}

</mosaic_0001>

<llo_original>
// kernel: tpu_custom_call.1
$region0: #{tpu_custom_call.1}
  #allocation0 [shape = 'u32[]', space=smem, size = 0x4, offset = 0x4, fixed_abs, tag = 'smem constant byte address 0x4 - core index']
  #allocation1 [shape = 'u32[144,128]{1,0:T(1,128)}', space=vmem, size = 0x12000, scoped, tag = 'internal scratch']
  %s0 = inlined_call_operand.vmem [shape: bf16[2,4,64,32], index: 0, kind: input, shape index: {}]
  %s1 = inlined_call_operand.vmem [shape: bf16[32,128], index: 1, kind: input, shape index: {}]
  %s2 = inlined_call_operand.vmem [shape: f32[1,128], index: 2, kind: input, shape index: {}]
  %s3 = inlined_call_operand.hbm [shape: bf16[9,128,128], index: 3, kind: input, shape index: {}]
  %s4 = inlined_call_operand.vmem [shape: f32[1,128], index: 4, kind: input, shape index: {}]
  %s5 = inlined_call_operand.hbm [shape: bf16[9,128,128], index: 5, kind: input, shape index: {}]
  %s6 = inlined_call_operand.vmem [shape: f32[1,128], index: 6, kind: input, shape index: {}]
  %s7 = inlined_call_operand.vmem [shape: bf16[128,256], index: 7, kind: input, shape index: {}]
  %s8 = inlined_call_operand.vmem [shape: f32[1,256], index: 8, kind: input, shape index: {}]
  %s9 = inlined_call_operand.vmem [shape: bf16[256,128], index: 9, kind: input, shape index: {}]
  %s10 = inlined_call_operand.vmem [shape: f32[1,128], index: 10, kind: input, shape index: {}]
  %s11 = inlined_call_operand.vmem [shape: bf16[128,128], index: 11, kind: input, shape index: {}]
  %s12 = inlined_call_operand.vmem [shape: f32[1,128], index: 12, kind: input, shape index: {}]
  %s13 = inlined_call_operand.hbm [shape: f32[2,128], index: 13, kind: output, shape index: {}]
  %s14 = sld [smem:[#allocation0]]
  $region70: #{tpu_custom_call.1} parent=0
    _
  %s16 = ssub.s32 1, %s14
  %s17 = scalar_select 0, %s16, %s14
  $region1: #{tpu_custom_call.1} parent=0
    #allocation2 [shape = 'u8[294912]{0}', space=vmem, size = 0x48000, scoped, tag = 'input window, operand 3, single buffered']
    #allocation3 [shape = 's32[1]{0}', space=sflag, size = 0x4, scoped, tag = 'scoped memory for tpu_custom_call.1']
    #allocation4 [shape = 's32[1]{0}', space=sflag, size = 0x4, scoped, tag = 'scoped memory for tpu_custom_call.1']
    #allocation5 [shape = 'u8[294912]{0}', space=vmem, size = 0x48000, scoped, tag = 'input window, operand 5, single buffered']
    #allocation6 [shape = 's32[1]{0}', space=sflag, size = 0x4, scoped, tag = 'scoped memory for tpu_custom_call.1']
    #allocation7 [shape = 'u8[1024]{0}', space=vmem, size = 0x400, scoped, tag = 'output window, operand 0, single buffered']
    %18 = vsyncpa [#allocation3], 0
    %19 = vsyncpa [#allocation6], 0
    %20 = vsyncpa [#allocation4], 0
    // Predicated region
    $region2: #{tpu_custom_call.1} parent=1 // pred_check
      _
    $region3: #{tpu_custom_call.1} parent=1 // pred_check_branch
      %22 = sbr.rel (0) target = $region5
    $region4: #{tpu_custom_call.1} parent=1 // pred_region
      _
    $region5: #{tpu_custom_call.1} parent=1 // pred_fallthru
      _
    // Predicated region
    $region6: #{tpu_custom_call.1} parent=1 // pred_check
      _
    $region7: #{tpu_custom_call.1} parent=1 // pred_check_branch
      %24 = sbr.rel (0) target = $region9
    $region8: #{tpu_custom_call.1} parent=1 // pred_region
      _
    $region9: #{tpu_custom_call.1} parent=1 // pred_fallthru
      _
    // Predicated region
    $region10: #{tpu_custom_call.1} parent=1 // pred_check
      _
    $region11: #{tpu_custom_call.1} parent=1 // pred_check_branch
      %26 = sbr.rel (0) target = $region13
    $region12: #{tpu_custom_call.1} parent=1 // pred_region
      _
    $region13: #{tpu_custom_call.1} parent=1 // pred_fallthru
      _
    // Predicated region
    $region14: #{tpu_custom_call.1} parent=1 // pred_check
      _
    $region15: #{tpu_custom_call.1} parent=1 // pred_check_branch
      %28 = sbr.rel (0) target = $region17
    $region16: #{tpu_custom_call.1} parent=1 // pred_region
      %s30 = ssub.s32 9216, 9216
      %31 = vsyncadd [#allocation3], %s30
      %s32 = sshll.u32 [#allocation2], 4
      %s33 = int_to_ptr.vmem [resolvable:$true] %s32
      %38 = dma.hbm_to_vmem [thread:$0]  %s3, 9216, %s33, [#allocation3], 64, 64, 4
    $region17: #{tpu_custom_call.1} parent=1 // pred_fallthru
      _
    // Predicated region
    $region18: #{tpu_custom_call.1} parent=1 // pred_check
      _
    $region19: #{tpu_custom_call.1} parent=1 // pred_check_branch
      %40 = sbr.rel (0) target = $region21
    $region20: #{tpu_custom_call.1} parent=1 // pred_region
      _
    $region21: #{tpu_custom_call.1} parent=1 // pred_fallthru
      _
    // Predicated region
    $region22: #{tpu_custom_call.1} parent=1 // pred_check
      _
    $region23: #{tpu_custom_call.1} parent=1 // pred_check_branch
      %42 = sbr.rel (0) target = $region25
    $region24: #{tpu_custom_call.1} parent=1 // pred_region
      %s44 = ssub.s32 9216, 9216
      %45 = vsyncadd [#allocation6], %s44
      %s46 = sshll.u32 [#allocation5], 4
      %s47 = int_to_ptr.vmem [resolvable:$true] %s46
      %52 = dma.hbm_to_vmem [thread:$0]  %s5, 9216, %s47, [#allocation6], 64, 64, 4
    $region25: #{tpu_custom_call.1} parent=1 // pred_fallthru
      _
    // Predicated region
    $region26: #{tpu_custom_call.1} parent=1 // pred_check
      _
    $region27: #{tpu_custom_call.1} parent=1 // pred_check_branch
      %54 = sbr.rel (0) target = $region29
    $region28: #{tpu_custom_call.1} parent=1 // pred_region
      _
    $region29: #{tpu_custom_call.1} parent=1 // pred_fallthru
      _
    // Predicated region
    $region30: #{tpu_custom_call.1} parent=1 // pred_check
      _
    $region31: #{tpu_custom_call.1} parent=1 // pred_check_branch
      %56 = sbr.rel (0) target = $region33
    $region32: #{tpu_custom_call.1} parent=1 // pred_region
      _
    $region33: #{tpu_custom_call.1} parent=1 // pred_fallthru
      _
    // Predicated region
    $region34: #{tpu_custom_call.1} parent=1 // pred_check
      _
    $region35: #{tpu_custom_call.1} parent=1 // pred_check_branch
      %58 = sbr.rel (0) target = $region37
    $region36: #{tpu_custom_call.1} parent=1 // pred_region
      _
    $region37: #{tpu_custom_call.1} parent=1 // pred_fallthru
      _
    // Predicated region
    $region38: #{tpu_custom_call.1} parent=1 // pred_check
      _
    $region39: #{tpu_custom_call.1} parent=1 // pred_check_branch
      %60 = sbr.rel (0) target = $region41
    $region40: #{tpu_custom_call.1} parent=1 // pred_region
      _
    $region41: #{tpu_custom_call.1} parent=1 // pred_fallthru
      _
    // Predicated region
    $region42: #{tpu_custom_call.1} parent=1 // pred_check
      _
    $region43: #{tpu_custom_call.1} parent=1 // pred_check_branch
      %62 = sbr.rel (0) target = $region45
    $region44: #{tpu_custom_call.1} parent=1 // pred_region
      _
    $region45: #{tpu_custom_call.1} parent=1 // pred_fallthru
      _
    // Predicated region
    $region46: #{tpu_custom_call.1} parent=1 // pred_check
      _
    $region47: #{tpu_custom_call.1} parent=1 // pred_check_branch
      %64 = sbr.rel (0) target = $region49
    $region48: #{tpu_custom_call.1} parent=1 // pred_region
      _
    $region49: #{tpu_custom_call.1} parent=1 // pred_fallthru
      _
    // Predicated region
    $region50: #{tpu_custom_call.1} parent=1 // pred_check
      _
    $region51: #{tpu_custom_call.1} parent=1 // pred_check_branch
      %66 = sbr.rel (0) target = $region53
    $region52: #{tpu_custom_call.1} parent=1 // pred_region
      _
    $region53: #{tpu_custom_call.1} parent=1 // pred_fallthru
      _
    // Predicated region
    $region54: #{tpu_custom_call.1} parent=1 // pred_check
      _
    $region55: #{tpu_custom_call.1} parent=1 // pred_check_branch
      %68 = sbr.rel (0) target = $region57
    $region56: #{tpu_custom_call.1} parent=1 // pred_region
      %69 = dma.done [#allocation3], 9216
    $region57: #{tpu_custom_call.1} parent=1 // pred_fallthru
      _
    // Predicated region
    $region58: #{tpu_custom_call.1} parent=1 // pred_check
      _
    $region59: #{tpu_custom_call.1} parent=1 // pred_check_branch
      %71 = sbr.rel (0) target = $region61
    $region60: #{tpu_custom_call.1} parent=1 // pred_region
      %72 = dma.done [#allocation6], 9216
    $region61: #{tpu_custom_call.1} parent=1 // pred_fallthru
      _
    %v74 = vld [vmem:[%s0] sm:$0xf]
    %v75 = vld [vmem:[%s0 + $0x4] sm:$0xf]
    %v76 = vld [vmem:[%s0 + $0x8] sm:$0xf]
    %v77 = vld [vmem:[%s0 + $0xc] sm:$0xf]
    %v78 = vld [vmem:[%s0 + $0x10] sm:$0xf]
    %v79 = vld [vmem:[%s0 + $0x14] sm:$0xf]
    %v80 = vld [vmem:[%s0 + $0x18] sm:$0xf]
    %v81 = vld [vmem:[%s0 + $0x1c] sm:$0xf]
    %v82 = vld [vmem:[%s0 + $0x20] sm:$0xf]
    %v83 = vld [vmem:[%s0 + $0x24] sm:$0xf]
    %v84 = vld [vmem:[%s0 + $0x28] sm:$0xf]
    %v85 = vld [vmem:[%s0 + $0x2c] sm:$0xf]
    %v86 = vld [vmem:[%s0 + $0x30] sm:$0xf]
    %v87 = vld [vmem:[%s0 + $0x34] sm:$0xf]
    %v88 = vld [vmem:[%s0 + $0x38] sm:$0xf]
    %v89 = vld [vmem:[%s0 + $0x3c] sm:$0xf]
    %v90 = vld [vmem:[%s0 + $0x40] sm:$0xf]
    %v91 = vld [vmem:[%s0 + $0x44] sm:$0xf]
    %v92 = vld [vmem:[%s0 + $0x48] sm:$0xf]
    %v93 = vld [vmem:[%s0 + $0x4c] sm:$0xf]
    %v94 = vld [vmem:[%s0 + $0x50] sm:$0xf]
    %v95 = vld [vmem:[%s0 + $0x54] sm:$0xf]
    %v96 = vld [vmem:[%s0 + $0x58] sm:$0xf]
    %v97 = vld [vmem:[%s0 + $0x5c] sm:$0xf]
    %v98 = vld [vmem:[%s0 + $0x60] sm:$0xf]
    %v99 = vld [vmem:[%s0 + $0x64] sm:$0xf]
    %v100 = vld [vmem:[%s0 + $0x68] sm:$0xf]
    %v101 = vld [vmem:[%s0 + $0x6c] sm:$0xf]
    %v102 = vld [vmem:[%s0 + $0x70] sm:$0xf]
    %v103 = vld [vmem:[%s0 + $0x74] sm:$0xf]
    %v104 = vld [vmem:[%s0 + $0x78] sm:$0xf]
    %v105 = vld [vmem:[%s0 + $0x7c] sm:$0xf]
    %v106 = vld [vmem:[%s0 + $0x80] sm:$0xf]
    %v107 = vld [vmem:[%s0 + $0x84] sm:$0xf]
    %v108 = vld [vmem:[%s0 + $0x88] sm:$0xf]
    %v109 = vld [vmem:[%s0 + $0x8c] sm:$0xf]
    %v110 = vld [vmem:[%s0 + $0x90] sm:$0xf]
    %v111 = vld [vmem:[%s0 + $0x94] sm:$0xf]
    %v112 = vld [vmem:[%s0 + $0x98] sm:$0xf]
    %v113 = vld [vmem:[%s0 + $0x9c] sm:$0xf]
    %v114 = vld [vmem:[%s0 + $0xa0] sm:$0xf]
    %v115 = vld [vmem:[%s0 + $0xa4] sm:$0xf]
    %v116 = vld [vmem:[%s0 + $0xa8] sm:$0xf]
    %v117 = vld [vmem:[%s0 + $0xac] sm:$0xf]
    %v118 = vld [vmem:[%s0 + $0xb0] sm:$0xf]
    %v119 = vld [vmem:[%s0 + $0xb4] sm:$0xf]
    %v120 = vld [vmem:[%s0 + $0xb8] sm:$0xf]
    %v121 = vld [vmem:[%s0 + $0xbc] sm:$0xf]
    %v122 = vld [vmem:[%s0 + $0xc0] sm:$0xf]
    %v123 = vld [vmem:[%s0 + $0xc4] sm:$0xf]
    %v124 = vld [vmem:[%s0 + $0xc8] sm:$0xf]
    %v125 = vld [vmem:[%s0 + $0xcc] sm:$0xf]
    %v126 = vld [vmem:[%s0 + $0xd0] sm:$0xf]
    %v127 = vld [vmem:[%s0 + $0xd4] sm:$0xf]
    %v128 = vld [vmem:[%s0 + $0xd8] sm:$0xf]
    %v129 = vld [vmem:[%s0 + $0xdc] sm:$0xf]
    %v130 = vld [vmem:[%s0 + $0xe0] sm:$0xf]
    %v131 = vld [vmem:[%s0 + $0xe4] sm:$0xf]
    %v132 = vld [vmem:[%s0 + $0xe8] sm:$0xf]
    %v133 = vld [vmem:[%s0 + $0xec] sm:$0xf]
    %v134 = vld [vmem:[%s0 + $0xf0] sm:$0xf]
    %v135 = vld [vmem:[%s0 + $0xf4] sm:$0xf]
    %v136 = vld [vmem:[%s0 + $0xf8] sm:$0xf]
    %v137 = vld [vmem:[%s0 + $0xfc] sm:$0xf]
    %v138 = vld [vmem:[%s1] sm:$0xf]
    %v139 = vld [vmem:[%s1 + $0x4] sm:$0xf]
    %v140 = vld [vmem:[%s1 + $0x8] sm:$0xf]
    %v141 = vld [vmem:[%s1 + $0xc] sm:$0xf]
    %v142 = vld [vmem:[%s2] sm:$0x1]
    %v144 = vlaneseq
    %v145 = vshrl.u32 %v144, 7
    %v146 = vsub.s32 0, %v145
    %v147 = vrot.slane %v142, %v146
    %v165 = vunpack.c.l.b16 %v74
    %v166 = vunpack.c.l.b16 %v75
    %v167 = vunpack.c.l.b16 %v76
    %v168 = vunpack.c.l.b16 %v77
    %v169 = vunpack.c.l.b16 %v78
    %v170 = vunpack.c.l.b16 %v79
    %v171 = vunpack.c.l.b16 %v80
    %v172 = vunpack.c.l.b16 %v81
    %v173 = vunpack.c.l.b16 %v106
    %v174 = vunpack.c.l.b16 %v107
    %v175 = vunpack.c.l.b16 %v108
    %v176 = vunpack.c.l.b16 %v109
    %v177 = vunpack.c.l.b16 %v110
    %v178 = vunpack.c.l.b16 %v111
    %v179 = vunpack.c.l.b16 %v112
    %v180 = vunpack.c.l.b16 %v113
    %v181 = vpack.c.b16 %v166, %v165
    %v182 = vpack.c.b16 %v168, %v167
    %v183 = vpack.c.b16 %v170, %v169
    %v184 = vpack.c.b16 %v172, %v171
    %v185 = vpack.c.b16 %v174, %v173
    %v186 = vpack.c.b16 %v176, %v175
    %v187 = vpack.c.b16 %v178, %v177
    %v188 = vpack.c.b16 %v180, %v179
    %v193 = vunpack.c.l.b16 %v138
    %v194 = vunpack.c.l.b16 %v139
    %v195 = vunpack.c.l.b16 %v140
    %v196 = vunpack.c.l.b16 %v141
    %v197 = vpack.c.b16 %v194, %v193
    %v198 = vpack.c.b16 %v196, %v195
    %vm201 = vcmask 261120
    %v203 = vsel %vm201, %v181, 0
    %v206 = vsel %vm201, %v182, 0
    %v209 = vsel %vm201, %v183, 0
    %v212 = vsel %vm201, %v184, 0
    %v215 = vsel %vm201, %v185, 0
    %v218 = vsel %vm201, %v186, 0
    %v221 = vsel %vm201, %v187, 0
    %v224 = vsel %vm201, %v188, 0
    %226 = vmatprep.subr.bf16.mxu0 0
    %227 = vmatpush1.bf16.msra.mxu0 %v197
    %228 = vmatprep.subr.bf16.mxu0 0
    %229 = vmatpush1.bf16.msra.mxu0 %v198
    %230 = vmatprep.subr.bf16.mxu0 0
    %231 = vmatpush1.bf16.msra.mxu0 0
    %232 = vmatprep.subr.bf16.mxu0 0
    %233 = vmatpush1.bf16.msra.mxu0 0
    %234 = vmatprep.subr.bf16.mxu0 0
    %235 = vmatpush1.bf16.msra.mxu0 0
    %236 = vmatprep.subr.bf16.mxu0 0
    %237 = vmatpush1.bf16.msra.mxu0 0
    %238 = vmatprep.subr.bf16.mxu0 0
    %239 = vmatpush1.bf16.msra.mxu0 0
    %240 = vmatprep.subr.bf16.mxu0 0
    %241 = vmatpush1.bf16.msra.mxu0 0
    %242 = vmatprep.subr.bf16.mxu0 0
    %243 = vmatpush1.bf16.msra.mxu0 0
    %244 = vmatprep.subr.bf16.mxu0 0
    %245 = vmatpush1.bf16.msra.mxu0 0
    %246 = vmatprep.subr.bf16.mxu0 0
    %247 = vmatpush1.bf16.msra.mxu0 0
    %248 = vmatprep.subr.bf16.mxu0 0
    %249 = vmatpush1.bf16.msra.mxu0 0
    %250 = vmatprep.subr.bf16.mxu0 0
    %251 = vmatpush1.bf16.msra.mxu0 0
    %252 = vmatprep.subr.bf16.mxu0 0
    %253 = vmatpush1.bf16.msra.mxu0 0
    %254 = vmatprep.subr.bf16.mxu0 0
    %255 = vmatpush1.bf16.msra.mxu0 0
    %256 = vmatprep.subr.bf16.mxu0 0
    %257 = vmatpush1.bf16.msra.mxu0 0
    %258 = vmatprep.mubr.bf16.mxu0 0
    %259 = vmatmul.mubr.bf16.gmra.mrb[0].mxu0 %v203
    %v260 = vpop.f32.mrb[0].mxu0
    %v261 = vadd.f32 %v147, %v260
    %v262 = vpop.f32.mrb[0].mxu0
    %v263 = vpop.f32.mrb[0].mxu0
    %v264 = vadd.f32 %v147, %v263
    %v265 = vpop.f32.mrb[0].mxu0
    %266 = vmatprep.mubr.bf16.mxu0 0
    %267 = vmatmul.mubr.bf16.gmra.mrb[0].mxu0 %v206
    %v268 = vpop.f32.mrb[0].mxu0
    %v269 = vadd.f32 %v147, %v268
    %v270 = vpop.f32.mrb[0].mxu0
    %v271 = vpop.f32.mrb[0].mxu0
    %v272 = vadd.f32 %v147, %v271
    %v273 = vpop.f32.mrb[0].mxu0
    %274 = vmatprep.mubr.bf16.mxu0 0
    %275 = vmatmul.mubr.bf16.gmra.mrb[0].mxu0 %v209
    %v276 = vpop.f32.mrb[0].mxu0
    %v277 = vadd.f32 %v147, %v276
    %v278 = vpop.f32.mrb[0].mxu0
    %v279 = vpop.f32.mrb[0].mxu0
    %v280 = vadd.f32 %v147, %v279
    %v281 = vpop.f32.mrb[0].mxu0
    %282 = vmatprep.mubr.bf16.mxu0 0
    %283 = vmatmul.mubr.bf16.gmra.mrb[0].mxu0 %v212
    %v284 = vpop.f32.mrb[0].mxu0
    %v285 = vadd.f32 %v147, %v284
    %v286 = vpop.f32.mrb[0].mxu0
    %v287 = vpop.f32.mrb[0].mxu0
    %v288 = vadd.f32 %v147, %v287
    %v289 = vpop.f32.mrb[0].mxu0
    %290 = vmatprep.mubr.bf16.mxu0 0
    %291 = vmatmul.mubr.bf16.gmra.mrb[0].mxu0 %v215
    %v292 = vpop.f32.mrb[0].mxu0
    %v293 = vadd.f32 %v147, %v292
    %v294 = vpop.f32.mrb[0].mxu0
    %v295 = vpop.f32.mrb[0].mxu0
    %v296 = vadd.f32 %v147, %v295
    %v297 = vpop.f32.mrb[0].mxu0
    %298 = vmatprep.mubr.bf16.mxu0 0
    %299 = vmatmul.mubr.bf16.gmra.mrb[0].mxu0 %v218
    %v300 = vpop.f32.mrb[0].mxu0
    %v301 = vadd.f32 %v147, %v300
    %v302 = vpop.f32.mrb[0].mxu0
    %v303 = vpop.f32.mrb[0].mxu0
    %v304 = vadd.f32 %v147, %v303
    %v305 = vpop.f32.mrb[0].mxu0
    %306 = vmatprep.mubr.bf16.mxu0 0
    %307 = vmatmul.mubr.bf16.gmra.mrb[0].mxu0 %v221
    %v308 = vpop.f32.mrb[0].mxu0
    %v309 = vadd.f32 %v147, %v308
    %v310 = vpop.f32.mrb[0].mxu0
    %v311 = vpop.f32.mrb[0].mxu0
    %v312 = vadd.f32 %v147, %v311
    %v313 = vpop.f32.mrb[0].mxu0
    %314 = vmatprep.mubr.bf16.mxu0 0
    %315 = vmatmul.mubr.bf16.gmra.mrb[0].mxu0 %v224
    %v316 = vpop.f32.mrb[0].mxu0
    %v317 = vadd.f32 %v147, %v316
    %v318 = vpop.f32.mrb[0].mxu0
    %v319 = vpop.f32.mrb[0].mxu0
    %v320 = vadd.f32 %v147, %v319
    %v321 = vpop.f32.mrb[0].mxu0
    %322 = vdwg.mxu0
    %v323 = vmax.f32 %v261, 0.0
    %v324 = vmax.f32 %v264, 0.0
    %v325 = vmax.f32 %v269, 0.0
    %v326 = vmax.f32 %v272, 0.0
    %v327 = vmax.f32 %v277, 0.0
    %v328 = vmax.f32 %v280, 0.0
    %v329 = vmax.f32 %v285, 0.0
    %v330 = vmax.f32 %v288, 0.0
    %v331 = vmax.f32 %v293, 0.0
    %v332 = vmax.f32 %v296, 0.0
    %v333 = vmax.f32 %v301, 0.0
    %v334 = vmax.f32 %v304, 0.0
    %v335 = vmax.f32 %v309, 0.0
    %v336 = vmax.f32 %v312, 0.0
    %v337 = vmax.f32 %v317, 0.0
    %v338 = vmax.f32 %v320, 0.0
    %v355 = vunpack.c.l.b16 %v82
    %v356 = vunpack.c.l.b16 %v83
    %v357 = vunpack.c.l.b16 %v84
    %v358 = vunpack.c.l.b16 %v85
    %v359 = vunpack.c.l.b16 %v86
    %v360 = vunpack.c.l.b16 %v87
    %v361 = vunpack.c.l.b16 %v88
    %v362 = vunpack.c.l.b16 %v89
    %v363 = vunpack.c.l.b16 %v114
    %v364 = vunpack.c.l.b16 %v115
    %v365 = vunpack.c.l.b16 %v116
    %v366 = vunpack.c.l.b16 %v117
    %v367 = vunpack.c.l.b16 %v118
    %v368 = vunpack.c.l.b16 %v119
    %v369 = vunpack.c.l.b16 %v120
    %v370 = vunpack.c.l.b16 %v121
    %v371 = vpack.c.b16 %v356, %v355
    %v372 = vpack.c.b16 %v358, %v357
    %v373 = vpack.c.b16 %v360, %v359
    %v374 = vpack.c.b16 %v362, %v361
    %v375 = vpack.c.b16 %v364, %v363
    %v376 = vpack.c.b16 %v366, %v365
    %v377 = vpack.c.b16 %v368, %v367
    %v378 = vpack.c.b16 %v370, %v369
    %v380 = vsel %vm201, %v371, 0
    %v383 = vsel %vm201, %v372, 0
    %v386 = vsel %vm201, %v373, 0
    %v389 = vsel %vm201, %v374, 0
    %v392 = vsel %vm201, %v375, 0
    %v395 = vsel %vm201, %v376, 0
    %v398 = vsel %vm201, %v377, 0
    %v401 = vsel %vm201, %v378, 0
    %403 = vmatprep.subr.bf16.mxu0 0
    %404 = vmatpush1.bf16.msra.mxu0 %v197
    %405 = vmatprep.subr.bf16.mxu0 0
    %406 = vmatpush1.bf16.msra.mxu0 %v198
    %407 = vmatprep.subr.bf16.mxu0 0
    %408 = vmatpush1.bf16.msra.mxu0 0
    %409 = vmatprep.subr.bf16.mxu0 0
    %410 = vmatpush1.bf16.msra.mxu0 0
    %411 = vmatprep.subr.bf16.mxu0 0
    %412 = vmatpush1.bf16.msra.mxu0 0
    %413 = vmatprep.subr.bf16.mxu0 0
    %414 = vmatpush1.bf16.msra.mxu0 0
    %415 = vmatprep.subr.bf16.mxu0 0
    %416 = vmatpush1.bf16.msra.mxu0 0
    %417 = vmatprep.subr.bf16.mxu0 0
    %418 = vmatpush1.bf16.msra.mxu0 0
    %419 = vmatprep.subr.bf16.mxu0 0
    %420 = vmatpush1.bf16.msra.mxu0 0
    %421 = vmatprep.subr.bf16.mxu0 0
    %422 = vmatpush1.bf16.msra.mxu0 0
    %423 = vmatprep.subr.bf16.mxu0 0
    %424 = vmatpush1.bf16.msra.mxu0 0
    %425 = vmatprep.subr.bf16.mxu0 0
    %426 = vmatpush1.bf16.msra.mxu0 0
    %427 = vmatprep.subr.bf16.mxu0 0
    %428 = vmatpush1.bf16.msra.mxu0 0
    %429 = vmatprep.subr.bf16.mxu0 0
    %430 = vmatpush1.bf16.msra.mxu0 0
    %431 = vmatprep.subr.bf16.mxu0 0
    %432 = vmatpush1.bf16.msra.mxu0 0
    %433 = vmatprep.subr.bf16.mxu0 0
    %434 = vmatpush1.bf16.msra.mxu0 0
    %435 = vmatprep.mubr.bf16.mxu0 0
    %436 = vmatmul.mubr.bf16.gmra.mrb[0].mxu0 %v380
    %v437 = vpop.f32.mrb[0].mxu0
    %v438 = vadd.f32 %v147, %v437
    %v439 = vpop.f32.mrb[0].mxu0
    %v440 = vpop.f32.mrb[0].mxu0
    %v441 = vadd.f32 %v147, %v440
    %v442 = vpop.f32.mrb[0].mxu0
    %443 = vmatprep.mubr.bf16.mxu0 0
    %444 = vmatmul.mubr.bf16.gmra.mrb[0].mxu0 %v383
    %v445 = vpop.f32.mrb[0].mxu0
    %v446 = vadd.f32 %v147, %v445
    %v447 = vpop.f32.mrb[0].mxu0
    %v448 = vpop.f32.mrb[0].mxu0
    %v449 = vadd.f32 %v147, %v448
    %v450 = vpop.f32.mrb[0].mxu0
    %451 = vmatprep.mubr.bf16.mxu0 0
    %452 = vmatmul.mubr.bf16.gmra.mrb[0].mxu0 %v386
    %v453 = vpop.f32.mrb[0].mxu0
    %v454 = vadd.f32 %v147, %v453
    %v455 = vpop.f32.mrb[0].mxu0
    %v456 = vpop.f32.mrb[0].mxu0
    %v457 = vadd.f32 %v147, %v456
    %v458 = vpop.f32.mrb[0].mxu0
    %459 = vmatprep.mubr.bf16.mxu0 0
    %460 = vmatmul.mubr.bf16.gmra.mrb[0].mxu0 %v389
    %v461 = vpop.f32.mrb[0].mxu0
    %v462 = vadd.f32 %v147, %v461
    %v463 = vpop.f32.mrb[0].mxu0
    %v464 = vpop.f32.mrb[0].mxu0
    %v465 = vadd.f32 %v147, %v464
    %v466 = vpop.f32.mrb[0].mxu0
    %467 = vmatprep.mubr.bf16.mxu0 0
    %468 = vmatmul.mubr.bf16.gmra.mrb[0].mxu0 %v392
    %v469 = vpop.f32.mrb[0].mxu0
    %v470 = vadd.f32 %v147, %v469
    %v471 = vpop.f32.mrb[0].mxu0
    %v472 = vpop.f32.mrb[0].mxu0
    %v473 = vadd.f32 %v147, %v472
    %v474 = vpop.f32.mrb[0].mxu0
    %475 = vmatprep.mubr.bf16.mxu0 0
    %476 = vmatmul.mubr.bf16.gmra.mrb[0].mxu0 %v395
    %v477 = vpop.f32.mrb[0].mxu0
    %v478 = vadd.f32 %v147, %v477
    %v479 = vpop.f32.mrb[0].mxu0
    %v480 = vpop.f32.mrb[0].mxu0
    %v481 = vadd.f32 %v147, %v480
    %v482 = vpop.f32.mrb[0].mxu0
    %483 = vmatprep.mubr.bf16.mxu0 0
    %484 = vmatmul.mubr.bf16.gmra.mrb[0].mxu0 %v398
    %v485 = vpop.f32.mrb[0].mxu0
    %v486 = vadd.f32 %v147, %v485
    %v487 = vpop.f32.mrb[0].mxu0
    %v488 = vpop.f32.mrb[0].mxu0
    %v489 = vadd.f32 %v147, %v488
    %v490 = vpop.f32.mrb[0].mxu0
    %491 = vmatprep.mubr.bf16.mxu0 0
    %492 = vmatmul.mubr.bf16.gmra.mrb[0].mxu0 %v401
    %v493 = vpop.f32.mrb[0].mxu0
    %v494 = vadd.f32 %v147, %v493
    %v495 = vpop.f32.mrb[0].mxu0
    %v496 = vpop.f32.mrb[0].mxu0
    %v497 = vadd.f32 %v147, %v496
    %v498 = vpop.f32.mrb[0].mxu0
    %499 = vdwg.mxu0
    %v500 = vmax.f32 %v438, 0.0
    %v501 = vmax.f32 %v441, 0.0
    %v502 = vmax.f32 %v446, 0.0
    %v503 = vmax.f32 %v449, 0.0
    %v504 = vmax.f32 %v454, 0.0
    %v505 = vmax.f32 %v457, 0.0
    %v506 = vmax.f32 %v462, 0.0
    %v507 = vmax.f32 %v465, 0.0
    %v508 = vmax.f32 %v470, 0.0
    %v509 = vmax.f32 %v473, 0.0
    %v510 = vmax.f32 %v478, 0.0
    %v511 = vmax.f32 %v481, 0.0
    %v512 = vmax.f32 %v486, 0.0
    %v513 = vmax.f32 %v489, 0.0
    %v514 = vmax.f32 %v494, 0.0
    %v515 = vmax.f32 %v497, 0.0
    %v516 = vmax.f32 %v323, %v500
    %v517 = vmax.f32 %v324, %v501
    %v518 = vmax.f32 %v325, %v502
    %v519 = vmax.f32 %v326, %v503
    %v520 = vmax.f32 %v327, %v504
    %v521 = vmax.f32 %v328, %v505
    %v522 = vmax.f32 %v329, %v506
    %v523 = vmax.f32 %v330, %v507
    %v524 = vmax.f32 %v331, %v508
    %v525 = vmax.f32 %v332, %v509
    %v526 = vmax.f32 %v333, %v510
    %v527 = vmax.f32 %v334, %v511
    %v528 = vmax.f32 %v335, %v512
    %v529 = vmax.f32 %v336, %v513
    %v530 = vmax.f32 %v337, %v514
    %v531 = vmax.f32 %v338, %v515
    %v548 = vunpack.c.l.b16 %v90
    %v549 = vunpack.c.l.b16 %v91
    %v550 = vunpack.c.l.b16 %v92
    %v551 = vunpack.c.l.b16 %v93
    %v552 = vunpack.c.l.b16 %v94
    %v553 = vunpack.c.l.b16 %v95
    %v554 = vunpack.c.l.b16 %v96
    %v555 = vunpack.c.l.b16 %v97
    %v556 = vunpack.c.l.b16 %v122
    %v557 = vunpack.c.l.b16 %v123
    %v558 = vunpack.c.l.b16 %v124
    %v559 = vunpack.c.l.b16 %v125
    %v560 = vunpack.c.l.b16 %v126
    %v561 = vunpack.c.l.b16 %v127
    %v562 = vunpack.c.l.b16 %v128
    %v563 = vunpack.c.l.b16 %v129
    %v564 = vpack.c.b16 %v549, %v548
    %v565 = vpack.c.b16 %v551, %v550
    %v566 = vpack.c.b16 %v553, %v552
    %v567 = vpack.c.b16 %v555, %v554
    %v568 = vpack.c.b16 %v557, %v556
    %v569 = vpack.c.b16 %v559, %v558
    %v570 = vpack.c.b16 %v561, %v560
    %v571 = vpack.c.b16 %v563, %v562
    %v573 = vsel %vm201, %v564, 0
    %v576 = vsel %vm201, %v565, 0
    %v579 = vsel %vm201, %v566, 0
    %v582 = vsel %vm201, %v567, 0
    %v585 = vsel %vm201, %v568, 0
    %v588 = vsel %vm201, %v569, 0
    %v591 = vsel %vm201, %v570, 0
    %v594 = vsel %vm201, %v571, 0
    %596 = vmatprep.subr.bf16.mxu0 0
    %597 = vmatpush1.bf16.msra.mxu0 %v197
    %598 = vmatprep.subr.bf16.mxu0 0
    %599 = vmatpush1.bf16.msra.mxu0 %v198
    %600 = vmatprep.subr.bf16.mxu0 0
    %601 = vmatpush1.bf16.msra.mxu0 0
    %602 = vmatprep.subr.bf16.mxu0 0
    %603 = vmatpush1.bf16.msra.mxu0 0
    %604 = vmatprep.subr.bf16.mxu0 0
    %605 = vmatpush1.bf16.msra.mxu0 0
    %606 = vmatprep.subr.bf16.mxu0 0
    %607 = vmatpush1.bf16.msra.mxu0 0
    %608 = vmatprep.subr.bf16.mxu0 0
    %609 = vmatpush1.bf16.msra.mxu0 0
    %610 = vmatprep.subr.bf16.mxu0 0
    %611 = vmatpush1.bf16.msra.mxu0 0
    %612 = vmatprep.subr.bf16.mxu0 0
    %613 = vmatpush1.bf16.msra.mxu0 0
    %614 = vmatprep.subr.bf16.mxu0 0
    %615 = vmatpush1.bf16.msra.mxu0 0
    %616 = vmatprep.subr.bf16.mxu0 0
    %617 = vmatpush1.bf16.msra.mxu0 0
    %618 = vmatprep.subr.bf16.mxu0 0
    %619 = vmatpush1.bf16.msra.mxu0 0
    %620 = vmatprep.subr.bf16.mxu0 0
    %621 = vmatpush1.bf16.msra.mxu0 0
    %622 = vmatprep.subr.bf16.mxu0 0
    %623 = vmatpush1.bf16.msra.mxu0 0
    %624 = vmatprep.subr.bf16.mxu0 0
    %625 = vmatpush1.bf16.msra.mxu0 0
    %626 = vmatprep.subr.bf16.mxu0 0
    %627 = vmatpush1.bf16.msra.mxu0 0
    %628 = vmatprep.mubr.bf16.mxu0 0
    %629 = vmatmul.mubr.bf16.gmra.mrb[0].mxu0 %v573
    %v630 = vpop.f32.mrb[0].mxu0
    %v631 = vadd.f32 %v147, %v630
    %v632 = vpop.f32.mrb[0].mxu0
    %v633 = vpop.f32.mrb[0].mxu0
    %v634 = vadd.f32 %v147, %v633
    %v635 = vpop.f32.mrb[0].mxu0
    %636 = vmatprep.mubr.bf16.mxu0 0
    %637 = vmatmul.mubr.bf16.gmra.mrb[0].mxu0 %v576
    %v638 = vpop.f32.mrb[0].mxu0
    %v639 = vadd.f32 %v147, %v638
    %v640 = vpop.f32.mrb[0].mxu0
    %v641 = vpop.f32.mrb[0].mxu0
    %v642 = vadd.f32 %v147, %v641
    %v643 = vpop.f32.mrb[0].mxu0
    %644 = vmatprep.mubr.bf16.mxu0 0
    %645 = vmatmul.mubr.bf16.gmra.mrb[0].mxu0 %v579
    %v646 = vpop.f32.mrb[0].mxu0
    %v647 = vadd.f32 %v147, %v646
    %v648 = vpop.f32.mrb[0].mxu0
    %v649 = vpop.f32.mrb[0].mxu0
    %v650 = vadd.f32 %v147, %v649
    %v651 = vpop.f32.mrb[0].mxu0
    %652 = vmatprep.mubr.bf16.mxu0 0
    %653 = vmatmul.mubr.bf16.gmra.mrb[0].mxu0 %v582
    %v654 = vpop.f32.mrb[0].mxu0
    %v655 = vadd.f32 %v147, %v654
    %v656 = vpop.f32.mrb[0].mxu0
    %v657 = vpop.f32.mrb[0].mxu0
    %v658 = vadd.f32 %v147, %v657
    %v659 = vpop.f32.mrb[0].mxu0
    %660 = vmatprep.mubr.bf16.mxu0 0
    %661 = vmatmul.mubr.bf16.gmra.mrb[0].mxu0 %v585
    %v662 = vpop.f32.mrb[0].mxu0
    %v663 = vadd.f32 %v147, %v662
    %v664 = vpop.f32.mrb[0].mxu0
    %v665 = vpop.f32.mrb[0].mxu0
    %v666 = vadd.f32 %v147, %v665
    %v667 = vpop.f32.mrb[0].mxu0
    %668 = vmatprep.mubr.bf16.mxu0 0
    %669 = vmatmul.mubr.bf16.gmra.mrb[0].mxu0 %v588
    %v670 = vpop.f32.mrb[0].mxu0
    %v671 = vadd.f32 %v147, %v670
    %v672 = vpop.f32.mrb[0].mxu0
    %v673 = vpop.f32.mrb[0].mxu0
    %v674 = vadd.f32 %v147, %v673
    %v675 = vpop.f32.mrb[0].mxu0
    %676 = vmatprep.mubr.bf16.mxu0 0
    %677 = vmatmul.mubr.bf16.gmra.mrb[0].mxu0 %v591
    %v678 = vpop.f32.mrb[0].mxu0
    %v679 = vadd.f32 %v147, %v678
    %v680 = vpop.f32.mrb[0].mxu0
    %v681 = vpop.f32.mrb[0].mxu0
    %v682 = vadd.f32 %v147, %v681
    %v683 = vpop.f32.mrb[0].mxu0
    %684 = vmatprep.mubr.bf16.mxu0 0
    %685 = vmatmul.mubr.bf16.gmra.mrb[0].mxu0 %v594
    %v686 = vpop.f32.mrb[0].mxu0
    %v687 = vadd.f32 %v147, %v686
    %v688 = vpop.f32.mrb[0].mxu0
    %v689 = vpop.f32.mrb[0].mxu0
    %v690 = vadd.f32 %v147, %v689
    %v691 = vpop.f32.mrb[0].mxu0
    %692 = vdwg.mxu0
    %v693 = vmax.f32 %v631, 0.0
    %v694 = vmax.f32 %v634, 0.0
    %v695 = vmax.f32 %v639, 0.0
    %v696 = vmax.f32 %v642, 0.0
    %v697 = vmax.f32 %v647, 0.0
    %v698 = vmax.f32 %v650, 0.0
    %v699 = vmax.f32 %v655, 0.0
    %v700 = vmax.f32 %v658, 0.0
    %v701 = vmax.f32 %v663, 0.0
    %v702 = vmax.f32 %v666, 0.0
    %v703 = vmax.f32 %v671, 0.0
    %v704 = vmax.f32 %v674, 0.0
    %v705 = vmax.f32 %v679, 0.0
    %v706 = vmax.f32 %v682, 0.0
    %v707 = vmax.f32 %v687, 0.0
    %v708 = vmax.f32 %v690, 0.0
    %v709 = vmax.f32 %v516, %v693
    %v710 = vmax.f32 %v517, %v694
    %v711 = vmax.f32 %v518, %v695
    %v712 = vmax.f32 %v519, %v696
    %v713 = vmax.f32 %v520, %v697
    %v714 = vmax.f32 %v521, %v698
    %v715 = vmax.f32 %v522, %v699
    %v716 = vmax.f32 %v523, %v700
    %v717 = vmax.f32 %v524, %v701
    %v718 = vmax.f32 %v525, %v702
    %v719 = vmax.f32 %v526, %v703
    %v720 = vmax.f32 %v527, %v704
    %v721 = vmax.f32 %v528, %v705
    %v722 = vmax.f32 %v529, %v706
    %v723 = vmax.f32 %v530, %v707
    %v724 = vmax.f32 %v531, %v708
    %v741 = vunpack.c.l.b16 %v98
    %v742 = vunpack.c.l.b16 %v99
    %v743 = vunpack.c.l.b16 %v100
    %v744 = vunpack.c.l.b16 %v101
    %v745 = vunpack.c.l.b16 %v102
    %v746 = vunpack.c.l.b16 %v103
    %v747 = vunpack.c.l.b16 %v104
    %v748 = vunpack.c.l.b16 %v105
    %v749 = vunpack.c.l.b16 %v130
    %v750 = vunpack.c.l.b16 %v131
    %v751 = vunpack.c.l.b16 %v132
    %v752 = vunpack.c.l.b16 %v133
    %v753 = vunpack.c.l.b16 %v134
    %v754 = vunpack.c.l.b16 %v135
    %v755 = vunpack.c.l.b16 %v136
    %v756 = vunpack.c.l.b16 %v137
    %v757 = vpack.c.b16 %v742, %v741
    %v758 = vpack.c.b16 %v744, %v743
    %v759 = vpack.c.b16 %v746, %v745
    %v760 = vpack.c.b16 %v748, %v747
    %v761 = vpack.c.b16 %v750, %v749
    %v762 = vpack.c.b16 %v752, %v751
    %v763 = vpack.c.b16 %v754, %v753
    %v764 = vpack.c.b16 %v756, %v755
    %v766 = vsel %vm201, %v757, 0
    %v769 = vsel %vm201, %v758, 0
    %v772 = vsel %vm201, %v759, 0
    %v775 = vsel %vm201, %v760, 0
    %v778 = vsel %vm201, %v761, 0
    %v781 = vsel %vm201, %v762, 0
    %v784 = vsel %vm201, %v763, 0
    %v787 = vsel %vm201, %v764, 0
    %789 = vmatprep.subr.bf16.mxu0 0
    %790 = vmatpush1.bf16.msra.mxu0 %v197
    %791 = vmatprep.subr.bf16.mxu0 0
    %792 = vmatpush1.bf16.msra.mxu0 %v198
    %793 = vmatprep.subr.bf16.mxu0 0
    %794 = vmatpush1.bf16.msra.mxu0 0
    %795 = vmatprep.subr.bf16.mxu0 0
    %796 = vmatpush1.bf16.msra.mxu0 0
    %797 = vmatprep.subr.bf16.mxu0 0
    %798 = vmatpush1.bf16.msra.mxu0 0
    %799 = vmatprep.subr.bf16.mxu0 0
    %800 = vmatpush1.bf16.msra.mxu0 0
    %801 = vmatprep.subr.bf16.mxu0 0
    %802 = vmatpush1.bf16.msra.mxu0 0
    %803 = vmatprep.subr.bf16.mxu0 0
    %804 = vmatpush1.bf16.msra.mxu0 0
    %805 = vmatprep.subr.bf16.mxu0 0
    %806 = vmatpush1.bf16.msra.mxu0 0
    %807 = vmatprep.subr.bf16.mxu0 0
    %808 = vmatpush1.bf16.msra.mxu0 0
    %809 = vmatprep.subr.bf16.mxu0 0
    %810 = vmatpush1.bf16.msra.mxu0 0
    %811 = vmatprep.subr.bf16.mxu0 0
    %812 = vmatpush1.bf16.msra.mxu0 0
    %813 = vmatprep.subr.bf16.mxu0 0
    %814 = vmatpush1.bf16.msra.mxu0 0
    %815 = vmatprep.subr.bf16.mxu0 0
    %816 = vmatpush1.bf16.msra.mxu0 0
    %817 = vmatprep.subr.bf16.mxu0 0
    %818 = vmatpush1.bf16.msra.mxu0 0
    %819 = vmatprep.subr.bf16.mxu0 0
    %820 = vmatpush1.bf16.msra.mxu0 0
    %821 = vmatprep.mubr.bf16.mxu0 0
    %822 = vmatmul.mubr.bf16.gmra.mrb[0].mxu0 %v766
    %v823 = vpop.f32.mrb[0].mxu0
    %v824 = vadd.f32 %v147, %v823
    %v825 = vpop.f32.mrb[0].mxu0
    %v826 = vpop.f32.mrb[0].mxu0
    %v827 = vadd.f32 %v147, %v826
    %v828 = vpop.f32.mrb[0].mxu0
    %829 = vmatprep.mubr.bf16.mxu0 0
    %830 = vmatmul.mubr.bf16.gmra.mrb[0].mxu0 %v769
    %v831 = vpop.f32.mrb[0].mxu0
    %v832 = vadd.f32 %v147, %v831
    %v833 = vpop.f32.mrb[0].mxu0
    %v834 = vpop.f32.mrb[0].mxu0
    %v835 = vadd.f32 %v147, %v834
    %v836 = vpop.f32.mrb[0].mxu0
    %837 = vmatprep.mubr.bf16.mxu0 0
    %838 = vmatmul.mubr.bf16.gmra.mrb[0].mxu0 %v772
    %v839 = vpop.f32.mrb[0].mxu0
    %v840 = vadd.f32 %v147, %v839
    %v841 = vpop.f32.mrb[0].mxu0
    %v842 = vpop.f32.mrb[0].mxu0
    %v843 = vadd.f32 %v147, %v842
    %v844 = vpop.f32.mrb[0].mxu0
    %845 = vmatprep.mubr.bf16.mxu0 0
    %846 = vmatmul.mubr.bf16.gmra.mrb[0].mxu0 %v775
    %v847 = vpop.f32.mrb[0].mxu0
    %v848 = vadd.f32 %v147, %v847
    %v849 = vpop.f32.mrb[0].mxu0
    %v850 = vpop.f32.mrb[0].mxu0
    %v851 = vadd.f32 %v147, %v850
    %v852 = vpop.f32.mrb[0].mxu0
    %853 = vmatprep.mubr.bf16.mxu0 0
    %854 = vmatmul.mubr.bf16.gmra.mrb[0].mxu0 %v778
    %v855 = vpop.f32.mrb[0].mxu0
    %v856 = vadd.f32 %v147, %v855
    %v857 = vpop.f32.mrb[0].mxu0
    %v858 = vpop.f32.mrb[0].mxu0
    %v859 = vadd.f32 %v147, %v858
    %v860 = vpop.f32.mrb[0].mxu0
    %861 = vmatprep.mubr.bf16.mxu0 0
    %862 = vmatmul.mubr.bf16.gmra.mrb[0].mxu0 %v781
    %v863 = vpop.f32.mrb[0].mxu0
    %v864 = vadd.f32 %v147, %v863
    %v865 = vpop.f32.mrb[0].mxu0
    %v866 = vpop.f32.mrb[0].mxu0
    %v867 = vadd.f32 %v147, %v866
    %v868 = vpop.f32.mrb[0].mxu0
    %869 = vmatprep.mubr.bf16.mxu0 0
    %870 = vmatmul.mubr.bf16.gmra.mrb[0].mxu0 %v784
    %v871 = vpop.f32.mrb[0].mxu0
    %v872 = vadd.f32 %v147, %v871
    %v873 = vpop.f32.mrb[0].mxu0
    %v874 = vpop.f32.mrb[0].mxu0
    %v875 = vadd.f32 %v147, %v874
    %v876 = vpop.f32.mrb[0].mxu0
    %877 = vmatprep.mubr.bf16.mxu0 0
    %878 = vmatmul.mubr.bf16.gmra.mrb[0].mxu0 %v787
    %v879 = vpop.f32.mrb[0].mxu0
    %v880 = vadd.f32 %v147, %v879
    %v881 = vpop.f32.mrb[0].mxu0
    %v882 = vpop.f32.mrb[0].mxu0
    %v883 = vadd.f32 %v147, %v882
    %v884 = vpop.f32.mrb[0].mxu0
    %885 = vdwg.mxu0
    %v886 = vmax.f32 %v824, 0.0
    %v887 = vmax.f32 %v827, 0.0
    %v888 = vmax.f32 %v832, 0.0
    %v889 = vmax.f32 %v835, 0.0
    %v890 = vmax.f32 %v840, 0.0
    %v891 = vmax.f32 %v843, 0.0
    %v892 = vmax.f32 %v848, 0.0
    %v893 = vmax.f32 %v851, 0.0
    %v894 = vmax.f32 %v856, 0.0
    %v895 = vmax.f32 %v859, 0.0
    %v896 = vmax.f32 %v864, 0.0
    %v897 = vmax.f32 %v867, 0.0
    %v898 = vmax.f32 %v872, 0.0
    %v899 = vmax.f32 %v875, 0.0
    %v900 = vmax.f32 %v880, 0.0
    %v901 = vmax.f32 %v883, 0.0
    %v902 = vmax.f32 %v709, %v886
    %v903 = vmax.f32 %v710, %v887
    %v904 = vmax.f32 %v711, %v888
    %v905 = vmax.f32 %v712, %v889
    %v906 = vmax.f32 %v713, %v890
    %v907 = vmax.f32 %v714, %v891
    %v908 = vmax.f32 %v715, %v892
    %v909 = vmax.f32 %v716, %v893
    %v910 = vmax.f32 %v717, %v894
    %v911 = vmax.f32 %v718, %v895
    %v912 = vmax.f32 %v719, %v896
    %v913 = vmax.f32 %v720, %v897
    %v914 = vmax.f32 %v721, %v898
    %v915 = vmax.f32 %v722, %v899
    %v916 = vmax.f32 %v723, %v900
    %v917 = vmax.f32 %v724, %v901
    %v918 = vpack.c.bf16 %v902, %v902
    %v919 = vpack.c.bf16 %v903, %v903
    %v920 = vpack.c.bf16 %v904, %v904
    %v921 = vpack.c.bf16 %v905, %v905
    %v922 = vpack.c.bf16 %v906, %v906
    %v923 = vpack.c.bf16 %v907, %v907
    %v924 = vpack.c.bf16 %v908, %v908
    %v925 = vpack.c.bf16 %v909, %v909
    %v926 = vpack.c.bf16 %v910, %v910
    %v927 = vpack.c.bf16 %v911, %v911
    %v928 = vpack.c.bf16 %v912, %v912
    %v929 = vpack.c.bf16 %v913, %v913
    %v930 = vpack.c.bf16 %v914, %v914
    %v931 = vpack.c.bf16 %v915, %v915
    %v932 = vpack.c.bf16 %v916, %v916
    %v933 = vpack.c.bf16 %v917, %v917
    %v935 = vshrl.u32 %v918, 16
    %v937 = vrot.slane %v935, 7
    %v938 = vshll.u32 %v918, 16
    %v940 = vor.u32 %v937, %v938
    %v942 = vshrl.u32 %v919, 16
    %v944 = vrot.slane %v942, 7
    %v945 = vshll.u32 %v919, 16
    %v947 = vor.u32 %v944, %v945
    %v949 = vshrl.u32 %v920, 16
    %v951 = vrot.slane %v949, 7
    %v952 = vshll.u32 %v920, 16
    %v954 = vor.u32 %v951, %v952
    %v956 = vshrl.u32 %v921, 16
    %v958 = vrot.slane %v956, 7
    %v959 = vshll.u32 %v921, 16
    %v961 = vor.u32 %v958, %v959
    %v963 = vshrl.u32 %v922, 16
    %v965 = vrot.slane %v963, 7
    %v966 = vshll.u32 %v922, 16
    %v968 = vor.u32 %v965, %v966
    %v970 = vshrl.u32 %v923, 16
    %v972 = vrot.slane %v970, 7
    %v973 = vshll.u32 %v923, 16
    %v975 = vor.u32 %v972, %v973
    %v977 = vshrl.u32 %v924, 16
    %v979 = vrot.slane %v977, 7
    %v980 = vshll.u32 %v924, 16
    %v982 = vor.u32 %v979, %v980
    %v984 = vshrl.u32 %v925, 16
    %v986 = vrot.slane %v984, 7
    %v987 = vshll.u32 %v925, 16
    %v989 = vor.u32 %v986, %v987
    %v991 = vshrl.u32 %v926, 16
    %v993 = vrot.slane %v991, 7
    %v994 = vshll.u32 %v926, 16
    %v996 = vor.u32 %v993, %v994
    %v998 = vshrl.u32 %v927, 16
    %v1000 = vrot.slane %v998, 7
    %v1001 = vshll.u32 %v927, 16
    %v1003 = vor.u32 %v1000, %v1001
    %v1005 = vshrl.u32 %v928, 16
    %v1007 = vrot.slane %v1005, 7
    %v1008 = vshll.u32 %v928, 16
    %v1010 = vor.u32 %v1007, %v1008
    %v1012 = vshrl.u32 %v929, 16
    %v1014 = vrot.slane %v1012, 7
    %v1015 = vshll.u32 %v929, 16
    %v1017 = vor.u32 %v1014, %v1015
    %v1019 = vshrl.u32 %v930, 16
    %v1021 = vrot.slane %v1019, 7
    %v1022 = vshll.u32 %v930, 16
    %v1024 = vor.u32 %v1021, %v1022
    %v1026 = vshrl.u32 %v931, 16
    %v1028 = vrot.slane %v1026, 7
    %v1029 = vshll.u32 %v931, 16
    %v1031 = vor.u32 %v1028, %v1029
    %v1033 = vshrl.u32 %v932, 16
    %v1035 = vrot.slane %v1033, 7
    %v1036 = vshll.u32 %v932, 16
    %v1038 = vor.u32 %v1035, %v1036
    %v1040 = vshrl.u32 %v933, 16
    %v1042 = vrot.slane %v1040, 7
    %v1043 = vshll.u32 %v933, 16
    %v1045 = vor.u32 %v1042, %v1043
    %vm1062 = vcmask 1040384
    %vm1063 = vsmask.f32 256
    %vm1064 = vmand %vm1062, %vm1063
    %v1065 = vsel %vm1064, 0, %v940
    %v1066 = vsel %vm1064, 0, %v947
    %v1067 = vsel %vm1064, 0, %v954
    %v1068 = vsel %vm1064, 0, %v961
    %v1069 = vsel %vm1064, 0, %v968
    %v1070 = vsel %vm1064, 0, %v975
    %v1071 = vsel %vm1064, 0, %v982
    %v1072 = vsel %vm1064, 0, %v989
    %v1073 = vsel %vm1064, 0, %v996
    %v1074 = vsel %vm1064, 0, %v1003
    %v1075 = vsel %vm1064, 0, %v1010
    %v1076 = vsel %vm1064, 0, %v1017
    %v1077 = vsel %vm1064, 0, %v1024
    %v1078 = vsel %vm1064, 0, %v1031
    %v1079 = vsel %vm1064, 0, %v1038
    %v1080 = vsel %vm1064, 0, %v1045
    %v1081 = vrot.slane %v938, 1
    %v1082 = vor.u32 %v935, %v1081
    %v1083 = vrot.slane %v945, 1
    %v1084 = vor.u32 %v942, %v1083
    %v1085 = vrot.slane %v952, 1
    %v1086 = vor.u32 %v949, %v1085
    %v1087 = vrot.slane %v959, 1
    %v1088 = vor.u32 %v956, %v1087
    %v1089 = vrot.slane %v966, 1
    %v1090 = vor.u32 %v963, %v1089
    %v1091 = vrot.slane %v973, 1
    %v1092 = vor.u32 %v970, %v1091
    %v1093 = vrot.slane %v980, 1
    %v1094 = vor.u32 %v977, %v1093
    %v1095 = vrot.slane %v987, 1
    %v1096 = vor.u32 %v984, %v1095
    %v1097 = vrot.slane %v994, 1
    %v1098 = vor.u32 %v991, %v1097
    %v1099 = vrot.slane %v1001, 1
    %v1100 = vor.u32 %v998, %v1099
    %v1101 = vrot.slane %v1008, 1
    %v1102 = vor.u32 %v1005, %v1101
    %v1103 = vrot.slane %v1015, 1
    %v1104 = vor.u32 %v1012, %v1103
    %v1105 = vrot.slane %v1022, 1
    %v1106 = vor.u32 %v1019, %v1105
    %v1107 = vrot.slane %v1029, 1
    %v1108 = vor.u32 %v1026, %v1107
    %v1109 = vrot.slane %v1036, 1
    %v1110 = vor.u32 %v1033, %v1109
    %v1111 = vrot.slane %v1043, 1
    %v1112 = vor.u32 %v1040, %v1111
    %vm1129 = vcmask 1043456
    %vm1130 = vsmask.f32 3328
    %vm1131 = vmand %vm1129, %vm1130
    %v1132 = vsel %vm1131, %v1082, 0
    %v1133 = vsel %vm1131, %v1084, 0
    %v1134 = vsel %vm1131, %v1086, 0
    %v1135 = vsel %vm1131, %v1088, 0
    %v1136 = vsel %vm1131, %v1090, 0
    %v1137 = vsel %vm1131, %v1092, 0
    %v1138 = vsel %vm1131, %v1094, 0
    %v1139 = vsel %vm1131, %v1096, 0
    %v1140 = vsel %vm1131, %v1098, 0
    %v1141 = vsel %vm1131, %v1100, 0
    %v1142 = vsel %vm1131, %v1102, 0
    %v1143 = vsel %vm1131, %v1104, 0
    %v1144 = vsel %vm1131, %v1106, 0
    %v1145 = vsel %vm1131, %v1108, 0
    %v1146 = vsel %vm1131, %v1110, 0
    %v1147 = vsel %vm1131, %v1112, 0
    %v1148 = vld [vmem:[#allocation2] sm:$0xf]
    %v1149 = vld [vmem:[#allocation2 + $0x4] sm:$0xf]
    %v1150 = vld [vmem:[#allocation2 + $0x8] sm:$0xf]
    %v1151 = vld [vmem:[#allocation2 + $0xc] sm:$0xf]
    %v1152 = vld [vmem:[#allocation2 + $0x10] sm:$0xf]
    %v1153 = vld [vmem:[#allocation2 + $0x14] sm:$0xf]
    %v1154 = vld [vmem:[#allocation2 + $0x18] sm:$0xf]
    %v1155 = vld [vmem:[#allocation2 + $0x1c] sm:$0xf]
    %v1156 = vld [vmem:[#allocation2 + $0x20] sm:$0xf]
    %v1157 = vld [vmem:[#allocation2 + $0x24] sm:$0xf]
    %v1158 = vld [vmem:[#allocation2 + $0x28] sm:$0xf]
    %v1159 = vld [vmem:[#allocation2 + $0x2c] sm:$0xf]
    %v1160 = vld [vmem:[#allocation2 + $0x30] sm:$0xf]
    %v1161 = vld [vmem:[#allocation2 + $0x34] sm:$0xf]
    %v1162 = vld [vmem:[#allocation2 + $0x38] sm:$0xf]
    %v1163 = vld [vmem:[#allocation2 + $0x3c] sm:$0xf]
    %s1164 = scalar_lea.vmem [#allocation2], 64
    %v1165 = vld [vmem:[%s1164] sm:$0xf]
    %v1166 = vld [vmem:[%s1164 + $0x4] sm:$0xf]
    %v1167 = vld [vmem:[%s1164 + $0x8] sm:$0xf]
    %v1168 = vld [vmem:[%s1164 + $0xc] sm:$0xf]
    %v1169 = vld [vmem:[%s1164 + $0x10] sm:$0xf]
    %v1170 = vld [vmem:[%s1164 + $0x14] sm:$0xf]
    %v1171 = vld [vmem:[%s1164 + $0x18] sm:$0xf]
    %v1172 = vld [vmem:[%s1164 + $0x1c] sm:$0xf]
    %v1173 = vld [vmem:[%s1164 + $0x20] sm:$0xf]
    %v1174 = vld [vmem:[%s1164 + $0x24] sm:$0xf]
    %v1175 = vld [vmem:[%s1164 + $0x28] sm:$0xf]
    %v1176 = vld [vmem:[%s1164 + $0x2c] sm:$0xf]
    %v1177 = vld [vmem:[%s1164 + $0x30] sm:$0xf]
    %v1178 = vld [vmem:[%s1164 + $0x34] sm:$0xf]
    %v1179 = vld [vmem:[%s1164 + $0x38] sm:$0xf]
    %v1180 = vld [vmem:[%s1164 + $0x3c] sm:$0xf]
    %v1196 = vunpack.c.l.b16 0
    %v1197 = vunpack.c.l.b16 %v918
    %v1198 = vunpack.c.l.b16 %v919
    %v1199 = vunpack.c.l.b16 %v920
    %v1200 = vunpack.c.l.b16 %v921
    %v1201 = vunpack.c.l.b16 %v922
    %v1202 = vunpack.c.l.b16 %v923
    %v1203 = vunpack.c.l.b16 %v924
    %v1204 = vunpack.c.l.b16 %v926
    %v1205 = vunpack.c.l.b16 %v927
    %v1206 = vunpack.c.l.b16 %v928
    %v1207 = vunpack.c.l.b16 %v929
    %v1208 = vunpack.c.l.b16 %v930
    %v1209 = vunpack.c.l.b16 %v931
    %v1210 = vunpack.c.l.b16 %v932
    %v1211 = vpack.c.b16 %v1197, %v1196
    %v1212 = vpack.c.b16 %v1199, %v1198
    %v1213 = vpack.c.b16 %v1201, %v1200
    %v1214 = vpack.c.b16 %v1203, %v1202
    %v1215 = vpack.c.b16 %v1204, %v1196
    %v1216 = vpack.c.b16 %v1206, %v1205
    %v1217 = vpack.c.b16 %v1208, %v1207
    %v1218 = vpack.c.b16 %v1210, %v1209
    %v1243 = vunpack.c.l.b16 %v1165
    %v1244 = vunpack.c.l.b16 %v1166
    %v1245 = vunpack.c.l.b16 %v1167
    %v1246 = vunpack.c.l.b16 %v1168
    %v1247 = vunpack.c.l.b16 %v1169
    %v1248 = vunpack.c.l.b16 %v1170
    %v1249 = vunpack.c.l.b16 %v1171
    %v1250 = vunpack.c.l.b16 %v1172
    %v1251 = vunpack.c.l.b16 %v1173
    %v1252 = vunpack.c.l.b16 %v1174
    %v1253 = vunpack.c.l.b16 %v1175
    %v1254 = vunpack.c.l.b16 %v1176
    %v1255 = vunpack.c.l.b16 %v1177
    %v1256 = vunpack.c.l.b16 %v1178
    %v1257 = vunpack.c.l.b16 %v1179
    %v1258 = vunpack.c.l.b16 %v1180
    %v1259 = vpack.c.b16 %v1244, %v1243
    %v1260 = vpack.c.b16 %v1246, %v1245
    %v1261 = vpack.c.b16 %v1248, %v1247
    %v1262 = vpack.c.b16 %v1250, %v1249
    %v1263 = vpack.c.b16 %v1252, %v1251
    %v1264 = vpack.c.b16 %v1254, %v1253
    %v1265 = vpack.c.b16 %v1256, %v1255
    %v1266 = vpack.c.b16 %v1258, %v1257
    %1275 = vmatprep.subr.bf16.mxu0 0
    %1276 = vmatpush1.bf16.msra.mxu0 %v1259
    %1277 = vmatprep.subr.bf16.mxu0 0
    %1278 = vmatpush1.bf16.msra.mxu0 %v1260
    %1279 = vmatprep.subr.bf16.mxu0 0
    %1280 = vmatpush1.bf16.msra.mxu0 %v1261
    %1281 = vmatprep.subr.bf16.mxu0 0
    %1282 = vmatpush1.bf16.msra.mxu0 %v1262
    %1283 = vmatprep.subr.bf16.mxu0 0
    %1284 = vmatpush1.bf16.msra.mxu0 %v1263
    %1285 = vmatprep.subr.bf16.mxu0 0
    %1286 = vmatpush1.bf16.msra.mxu0 %v1264
    %1287 = vmatprep.subr.bf16.mxu0 0
    %1288 = vmatpush1.bf16.msra.mxu0 %v1265
    %1289 = vmatprep.subr.bf16.mxu0 0
    %1290 = vmatpush1.bf16.msra.mxu0 %v1266
    %1291 = vmatprep.subr.bf16.mxu0 0
    %1292 = vmatpush1.bf16.msra.mxu0 0
    %1293 = vmatprep.subr.bf16.mxu0 0
    %1294 = vmatpush1.bf16.msra.mxu0 0
    %1295 = vmatprep.subr.bf16.mxu0 0
    %1296 = vmatpush1.bf16.msra.mxu0 0
    %1297 = vmatprep.subr.bf16.mxu0 0
    %1298 = vmatpush1.bf16.msra.mxu0 0
    %1299 = vmatprep.subr.bf16.mxu0 0
    %1300 = vmatpush1.bf16.msra.mxu0 0
    %1301 = vmatprep.subr.bf16.mxu0 0
    %1302 = vmatpush1.bf16.msra.mxu0 0
    %1303 = vmatprep.subr.bf16.mxu0 0
    %1304 = vmatpush1.bf16.msra.mxu0 0
    %1305 = vmatprep.subr.bf16.mxu0 0
    %1306 = vmatpush1.bf16.msra.mxu0 0
    %1307 = vmatprep.mubr.bf16.mxu0 0
    %1308 = vmatmul.mubr.bf16.gmra.mrb[0].mxu0 %v1211
    %v1309 = vpop.f32.mrb[0].mxu0
    %v1310 = vadd.f32 0.0, %v1309
    %v1311 = vpop.f32.mrb[0].mxu0
    %v1312 = vpop.f32.mrb[0].mxu0
    %v1313 = vadd.f32 0.0, %v1312
    %v1314 = vpop.f32.mrb[0].mxu0
    %1315 = vmatprep.mubr.bf16.mxu0 0
    %1316 = vmatmul.mubr.bf16.gmra.mrb[0].mxu0 %v1212
    %v1317 = vpop.f32.mrb[0].mxu0
    %v1318 = vadd.f32 0.0, %v1317
    %v1319 = vpop.f32.mrb[0].mxu0
    %v1320 = vpop.f32.mrb[0].mxu0
    %v1321 = vadd.f32 0.0, %v1320
    %v1322 = vpop.f32.mrb[0].mxu0
    %1323 = vmatprep.mubr.bf16.mxu0 0
    %1324 = vmatmul.mubr.bf16.gmra.mrb[0].mxu0 %v1213
    %v1325 = vpop.f32.mrb[0].mxu0
    %v1326 = vadd.f32 0.0, %v1325
    %v1327 = vpop.f32.mrb[0].mxu0
    %v1328 = vpop.f32.mrb[0].mxu0
    %v1329 = vadd.f32 0.0, %v1328
    %v1330 = vpop.f32.mrb[0].mxu0
    %1331 = vmatprep.mubr.bf16.mxu0 0
    %1332 = vmatmul.mubr.bf16.gmra.mrb[0].mxu0 %v1214
    %v1333 = vpop.f32.mrb[0].mxu0
    %v1334 = vadd.f32 0.0, %v1333
    %v1335 = vpop.f32.mrb[0].mxu0
    %v1336 = vpop.f32.mrb[0].mxu0
    %v1337 = vadd.f32 0.0, %v1336
    %v1338 = vpop.f32.mrb[0].mxu0
    %1339 = vmatprep.mubr.bf16.mxu0 0
    %1340 = vmatmul.mubr.bf16.gmra.mrb[0].mxu0 %v1215
    %v1341 = vpop.f32.mrb[0].mxu0
    %v1342 = vadd.f32 0.0, %v1341
    %v1343 = vpop.f32.mrb[0].mxu0
    %v1344 = vpop.f32.mrb[0].mxu0
    %v1345 = vadd.f32 0.0, %v1344
    %v1346 = vpop.f32.mrb[0].mxu0
    %1347 = vmatprep.mubr.bf16.mxu0 0
    %1348 = vmatmul.mubr.bf16.gmra.mrb[0].mxu0 %v1216
    %v1349 = vpop.f32.mrb[0].mxu0
    %v1350 = vadd.f32 0.0, %v1349
    %v1351 = vpop.f32.mrb[0].mxu0
    %v1352 = vpop.f32.mrb[0].mxu0
    %v1353 = vadd.f32 0.0, %v1352
    %v1354 = vpop.f32.mrb[0].mxu0
    %1355 = vmatprep.mubr.bf16.mxu0 0
    %1356 = vmatmul.mubr.bf16.gmra.mrb[0].mxu0 %v1217
    %v1357 = vpop.f32.mrb[0].mxu0
    %v1358 = vadd.f32 0.0, %v1357
    %v1359 = vpop.f32.mrb[0].mxu0
    %v1360 = vpop.f32.mrb[0].mxu0
    %v1361 = vadd.f32 0.0, %v1360
    %v1362 = vpop.f32.mrb[0].mxu0
    %1363 = vmatprep.mubr.bf16.mxu0 0
    %1364 = vmatmul.mubr.bf16.gmra.mrb[0].mxu0 %v1218
    %v1365 = vpop.f32.mrb[0].mxu0
    %v1366 = vadd.f32 0.0, %v1365
    %v1367 = vpop.f32.mrb[0].mxu0
    %v1368 = vpop.f32.mrb[0].mxu0
    %v1369 = vadd.f32 0.0, %v1368
    %v1370 = vpop.f32.mrb[0].mxu0
    %1371 = vdwg.mxu0
    %v1386 = vunpack.c.l.b16 %v1065
    %v1387 = vunpack.c.l.b16 %v1066
    %v1388 = vunpack.c.l.b16 %v1067
    %v1389 = vunpack.c.l.b16 %v1068
    %v1390 = vunpack.c.l.b16 %v1069
    %v1391 = vunpack.c.l.b16 %v1070
    %v1392 = vunpack.c.l.b16 %v1071
    %v1393 = vunpack.c.l.b16 %v1073
    %v1394 = vunpack.c.l.b16 %v1074
    %v1395 = vunpack.c.l.b16 %v1075
    %v1396 = vunpack.c.l.b16 %v1076
    %v1397 = vunpack.c.l.b16 %v1077
    %v1398 = vunpack.c.l.b16 %v1078
    %v1399 = vunpack.c.l.b16 %v1079
    %v1400 = vpack.c.b16 %v1386, %v1196
    %v1401 = vpack.c.b16 %v1388, %v1387
    %v1402 = vpack.c.b16 %v1390, %v1389
    %v1403 = vpack.c.b16 %v1392, %v1391
    %v1404 = vpack.c.b16 %v1393, %v1196
    %v1405 = vpack.c.b16 %v1395, %v1394
    %v1406 = vpack.c.b16 %v1397, %v1396
    %v1407 = vpack.c.b16 %v1399, %v1398
    %v1432 = vunpack.c.l.b16 %v1148
    %v1433 = vunpack.c.l.b16 %v1149
    %v1434 = vunpack.c.l.b16 %v1150
    %v1435 = vunpack.c.l.b16 %v1151
    %v1436 = vunpack.c.l.b16 %v1152
    %v1437 = vunpack.c.l.b16 %v1153
    %v1438 = vunpack.c.l.b16 %v1154
    %v1439 = vunpack.c.l.b16 %v1155
    %v1440 = vunpack.c.l.b16 %v1156
    %v1441 = vunpack.c.l.b16 %v1157
    %v1442 = vunpack.c.l.b16 %v1158
    %v1443 = vunpack.c.l.b16 %v1159
    %v1444 = vunpack.c.l.b16 %v1160
    %v1445 = vunpack.c.l.b16 %v1161
    %v1446 = vunpack.c.l.b16 %v1162
    %v1447 = vunpack.c.l.b16 %v1163
    %v1448 = vpack.c.b16 %v1433, %v1432
    %v1449 = vpack.c.b16 %v1435, %v1434
    %v1450 = vpack.c.b16 %v1437, %v1436
    %v1451 = vpack.c.b16 %v1439, %v1438
    %v1452 = vpack.c.b16 %v1441, %v1440
    %v1453 = vpack.c.b16 %v1443, %v1442
    %v1454 = vpack.c.b16 %v1445, %v1444
    %v1455 = vpack.c.b16 %v1447, %v1446
    %1464 = vmatprep.subr.bf16.mxu0 0
    %1465 = vmatpush1.bf16.msra.mxu0 %v1448
    %1466 = vmatprep.subr.bf16.mxu0 0
    %1467 = vmatpush1.bf16.msra.mxu0 %v1449
    %1468 = vmatprep.subr.bf16.mxu0 0
    %1469 = vmatpush1.bf16.msra.mxu0 %v1450
    %1470 = vmatprep.subr.bf16.mxu0 0
    %1471 = vmatpush1.bf16.msra.mxu0 %v1451
    %1472 = vmatprep.subr.bf16.mxu0 0
    %1473 = vmatpush1.bf16.msra.mxu0 %v1452
    %1474 = vmatprep.subr.bf16.mxu0 0
    %1475 = vmatpush1.bf16.msra.mxu0 %v1453
    %1476 = vmatprep.subr.bf16.mxu0 0
    %1477 = vmatpush1.bf16.msra.mxu0 %v1454
    %1478 = vmatprep.subr.bf16.mxu0 0
    %1479 = vmatpush1.bf16.msra.mxu0 %v1455
    %1480 = vmatprep.subr.bf16.mxu0 0
    %1481 = vmatpush1.bf16.msra.mxu0 0
    %1482 = vmatprep.subr.bf16.mxu0 0
    %1483 = vmatpush1.bf16.msra.mxu0 0
    %1484 = vmatprep.subr.bf16.mxu0 0
    %1485 = vmatpush1.bf16.msra.mxu0 0
    %1486 = vmatprep.subr.bf16.mxu0 0
    %1487 = vmatpush1.bf16.msra.mxu0 0
    %1488 = vmatprep.subr.bf16.mxu0 0
    %1489 = vmatpush1.bf16.msra.mxu0 0
    %1490 = vmatprep.subr.bf16.mxu0 0
    %1491 = vmatpush1.bf16.msra.mxu0 0
    %1492 = vmatprep.subr.bf16.mxu0 0
    %1493 = vmatpush1.bf16.msra.mxu0 0
    %1494 = vmatprep.subr.bf16.mxu0 0
    %1495 = vmatpush1.bf16.msra.mxu0 0
    %1496 = vmatprep.mubr.bf16.mxu0 0
    %1497 = vmatmul.mubr.bf16.gmra.mrb[0].mxu0 %v1400
    %v1498 = vpop.f32.mrb[0].mxu0
    %v1499 = vadd.f32 %v1310, %v1498
    %v1500 = vpop.f32.mrb[0].mxu0
    %v1501 = vpop.f32.mrb[0].mxu0
    %v1502 = vadd.f32 %v1313, %v1501
    %v1503 = vpop.f32.mrb[0].mxu0
    %1504 = vmatprep.mubr.bf16.mxu0 0
    %1505 = vmatmul.mubr.bf16.gmra.mrb[0].mxu0 %v1401
    %v1506 = vpop.f32.mrb[0].mxu0
    %v1507 = vadd.f32 %v1318, %v1506
    %v1508 = vpop.f32.mrb[0].mxu0
    %v1509 = vpop.f32.mrb[0].mxu0
    %v1510 = vadd.f32 %v1321, %v1509
    %v1511 = vpop.f32.mrb[0].mxu0
    %1512 = vmatprep.mubr.bf16.mxu0 0
    %1513 = vmatmul.mubr.bf16.gmra.mrb[0].mxu0 %v1402
    %v1514 = vpop.f32.mrb[0].mxu0
    %v1515 = vadd.f32 %v1326, %v1514
    %v1516 = vpop.f32.mrb[0].mxu0
    %v1517 = vpop.f32.mrb[0].mxu0
    %v1518 = vadd.f32 %v1329, %v1517
    %v1519 = vpop.f32.mrb[0].mxu0
    %1520 = vmatprep.mubr.bf16.mxu0 0
    %1521 = vmatmul.mubr.bf16.gmra.mrb[0].mxu0 %v1403
    %v1522 = vpop.f32.mrb[0].mxu0
    %v1523 = vadd.f32 %v1334, %v1522
    %v1524 = vpop.f32.mrb[0].mxu0
    %v1525 = vpop.f32.mrb[0].mxu0
    %v1526 = vadd.f32 %v1337, %v1525
    %v1527 = vpop.f32.mrb[0].mxu0
    %1528 = vmatprep.mubr.bf16.mxu0 0
    %1529 = vmatmul.mubr.bf16.gmra.mrb[0].mxu0 %v1404
    %v1530 = vpop.f32.mrb[0].mxu0
    %v1531 = vadd.f32 %v1342, %v1530
    %v1532 = vpop.f32.mrb[0].mxu0
    %v1533 = vpop.f32.mrb[0].mxu0
    %v1534 = vadd.f32 %v1345, %v1533
    %v1535 = vpop.f32.mrb[0].mxu0
    %1536 = vmatprep.mubr.bf16.mxu0 0
    %1537 = vmatmul.mubr.bf16.gmra.mrb[0].mxu0 %v1405
    %v1538 = vpop.f32.mrb[0].mxu0
    %v1539 = vadd.f32 %v1350, %v1538
    %v1540 = vpop.f32.mrb[0].mxu0
    %v1541 = vpop.f32.mrb[0].mxu0
    %v1542 = vadd.f32 %v1353, %v1541
    %v1543 = vpop.f32.mrb[0].mxu0
    %1544 = vmatprep.mubr.bf16.mxu0 0
    %1545 = vmatmul.mubr.bf16.gmra.mrb[0].mxu0 %v1406
    %v1546 = vpop.f32.mrb[0].mxu0
    %v1547 = vadd.f32 %v1358, %v1546
    %v1548 = vpop.f32.mrb[0].mxu0
    %v1549 = vpop.f32.mrb[0].mxu0
    %v1550 = vadd.f32 %v1361, %v1549
    %v1551 = vpop.f32.mrb[0].mxu0
    %1552 = vmatprep.mubr.bf16.mxu0 0
    %1553 = vmatmul.mubr.bf16.gmra.mrb[0].mxu0 %v1407
    %v1554 = vpop.f32.mrb[0].mxu0
    %v1555 = vadd.f32 %v1366, %v1554
    %v1556 = vpop.f32.mrb[0].mxu0
    %v1557 = vpop.f32.mrb[0].mxu0
    %v1558 = vadd.f32 %v1369, %v1557
    %v1559 = vpop.f32.mrb[0].mxu0
    %1560 = vdwg.mxu0
    %s1561 = scalar_lea.vmem [#allocation2], 128
    %v1562 = vld [vmem:[%s1561] sm:$0xf]
    %v1563 = vld [vmem:[%s1561 + $0x4] sm:$0xf]
    %v1564 = vld [vmem:[%s1561 + $0x8] sm:$0xf]
    %v1565 = vld [vmem:[%s1561 + $0xc] sm:$0xf]
    %v1566 = vld [vmem:[%s1561 + $0x10] sm:$0xf]
    %v1567 = vld [vmem:[%s1561 + $0x14] sm:$0xf]
    %v1568 = vld [vmem:[%s1561 + $0x18] sm:$0xf]
    %v1569 = vld [vmem:[%s1561 + $0x1c] sm:$0xf]
    %v1570 = vld [vmem:[%s1561 + $0x20] sm:$0xf]
    %v1571 = vld [vmem:[%s1561 + $0x24] sm:$0xf]
    %v1572 = vld [vmem:[%s1561 + $0x28] sm:$0xf]
    %v1573 = vld [vmem:[%s1561 + $0x2c] sm:$0xf]
    %v1574 = vld [vmem:[%s1561 + $0x30] sm:$0xf]
    %v1575 = vld [vmem:[%s1561 + $0x34] sm:$0xf]
    %v1576 = vld [vmem:[%s1561 + $0x38] sm:$0xf]
    %v1577 = vld [vmem:[%s1561 + $0x3c] sm:$0xf]
    %v1592 = vunpack.c.l.b16 %v1132
    %v1593 = vunpack.c.l.b16 %v1133
    %v1594 = vunpack.c.l.b16 %v1134
    %v1595 = vunpack.c.l.b16 %v1135
    %v1596 = vunpack.c.l.b16 %v1136
    %v1597 = vunpack.c.l.b16 %v1137
    %v1598 = vunpack.c.l.b16 %v1138
    %v1599 = vunpack.c.l.b16 %v1140
    %v1600 = vunpack.c.l.b16 %v1141
    %v1601 = vunpack.c.l.b16 %v1142
    %v1602 = vunpack.c.l.b16 %v1143
    %v1603 = vunpack.c.l.b16 %v1144
    %v1604 = vunpack.c.l.b16 %v1145
    %v1605 = vunpack.c.l.b16 %v1146
    %v1606 = vpack.c.b16 %v1592, %v1196
    %v1607 = vpack.c.b16 %v1594, %v1593
    %v1608 = vpack.c.b16 %v1596, %v1595
    %v1609 = vpack.c.b16 %v1598, %v1597
    %v1610 = vpack.c.b16 %v1599, %v1196
    %v1611 = vpack.c.b16 %v1601, %v1600
    %v1612 = vpack.c.b16 %v1603, %v1602
    %v1613 = vpack.c.b16 %v1605, %v1604
    %v1638 = vunpack.c.l.b16 %v1562
    %v1639 = vunpack.c.l.b16 %v1563
    %v1640 = vunpack.c.l.b16 %v1564
    %v1641 = vunpack.c.l.b16 %v1565
    %v1642 = vunpack.c.l.b16 %v1566
    %v1643 = vunpack.c.l.b16 %v1567
    %v1644 = vunpack.c.l.b16 %v1568
    %v1645 = vunpack.c.l.b16 %v1569
    %v1646 = vunpack.c.l.b16 %v1570
    %v1647 = vunpack.c.l.b16 %v1571
    %v1648 = vunpack.c.l.b16 %v1572
    %v1649 = vunpack.c.l.b16 %v1573
    %v1650 = vunpack.c.l.b16 %v1574
    %v1651 = vunpack.c.l.b16 %v1575
    %v1652 = vunpack.c.l.b16 %v1576
    %v1653 = vunpack.c.l.b16 %v1577
    %v1654 = vpack.c.b16 %v1639, %v1638
    %v1655 = vpack.c.b16 %v1641, %v1640
    %v1656 = vpack.c.b16 %v1643, %v1642
    %v1657 = vpack.c.b16 %v1645, %v1644
    %v1658 = vpack.c.b16 %v1647, %v1646
    %v1659 = vpack.c.b16 %v1649, %v1648
    %v1660 = vpack.c.b16 %v1651, %v1650
    %v1661 = vpack.c.b16 %v1653, %v1652
    %1670 = vmatprep.subr.bf16.mxu0 0
    %1671 = vmatpush1.bf16.msra.mxu0 %v1654
    %1672 = vmatprep.subr.bf16.mxu0 0
    %1673 = vmatpush1.bf16.msra.mxu0 %v1655
    %1674 = vmatprep.subr.bf16.mxu0 0
    %1675 = vmatpush1.bf16.msra.mxu0 %v1656
    %1676 = vmatprep.subr.bf16.mxu0 0
    %1677 = vmatpush1.bf16.msra.mxu0 %v1657
    %1678 = vmatprep.subr.bf16.mxu0 0
    %1679 = vmatpush1.bf16.msra.mxu0 %v1658
    %1680 = vmatprep.subr.bf16.mxu0 0
    %1681 = vmatpush1.bf16.msra.mxu0 %v1659
    %1682 = vmatprep.subr.bf16.mxu0 0
    %1683 = vmatpush1.bf16.msra.mxu0 %v1660
    %1684 = vmatprep.subr.bf16.mxu0 0
    %1685 = vmatpush1.bf16.msra.mxu0 %v1661
    %1686 = vmatprep.subr.bf16.mxu0 0
    %1687 = vmatpush1.bf16.msra.mxu0 0
    %1688 = vmatprep.subr.bf16.mxu0 0
    %1689 = vmatpush1.bf16.msra.mxu0 0
    %1690 = vmatprep.subr.bf16.mxu0 0
    %1691 = vmatpush1.bf16.msra.mxu0 0
    %1692 = vmatprep.subr.bf16.mxu0 0
    %1693 = vmatpush1.bf16.msra.mxu0 0
    %1694 = vmatprep.subr.bf16.mxu0 0
    %1695 = vmatpush1.bf16.msra.mxu0 0
    %1696 = vmatprep.subr.bf16.mxu0 0
    %1697 = vmatpush1.bf16.msra.mxu0 0
    %1698 = vmatprep.subr.bf16.mxu0 0
    %1699 = vmatpush1.bf16.msra.mxu0 0
    %1700 = vmatprep.subr.bf16.mxu0 0
    %1701 = vmatpush1.bf16.msra.mxu0 0
    %1702 = vmatprep.mubr.bf16.mxu0 0
    %1703 = vmatmul.mubr.bf16.gmra.mrb[0].mxu0 %v1606
    %v1704 = vpop.f32.mrb[0].mxu0
    %v1705 = vadd.f32 0.0, %v1704
    %v1706 = vpop.f32.mrb[0].mxu0
    %v1707 = vpop.f32.mrb[0].mxu0
    %v1708 = vadd.f32 0.0, %v1707
    %v1709 = vpop.f32.mrb[0].mxu0
    %1710 = vmatprep.mubr.bf16.mxu0 0
    %1711 = vmatmul.mubr.bf16.gmra.mrb[0].mxu0 %v1607
    %v1712 = vpop.f32.mrb[0].mxu0
    %v1713 = vadd.f32 0.0, %v1712
    %v1714 = vpop.f32.mrb[0].mxu0
    %v1715 = vpop.f32.mrb[0].mxu0
    %v1716 = vadd.f32 0.0, %v1715
    %v1717 = vpop.f32.mrb[0].mxu0
    %1718 = vmatprep.mubr.bf16.mxu0 0
    %1719 = vmatmul.mubr.bf16.gmra.mrb[0].mxu0 %v1608
    %v1720 = vpop.f32.mrb[0].mxu0
    %v1721 = vadd.f32 0.0, %v1720
    %v1722 = vpop.f32.mrb[0].mxu0
    %v1723 = vpop.f32.mrb[0].mxu0
    %v1724 = vadd.f32 0.0, %v1723
    %v1725 = vpop.f32.mrb[0].mxu0
    %1726 = vmatprep.mubr.bf16.mxu0 0
    %1727 = vmatmul.mubr.bf16.gmra.mrb[0].mxu0 %v1609
    %v1728 = vpop.f32.mrb[0].mxu0
    %v1729 = vadd.f32 0.0, %v1728
    %v1730 = vpop.f32.mrb[0].mxu0
    %v1731 = vpop.f32.mrb[0].mxu0
    %v1732 = vadd.f32 0.0, %v1731
    %v1733 = vpop.f32.mrb[0].mxu0
    %1734 = vmatprep.mubr.bf16.mxu0 0
    %1735 = vmatmul.mubr.bf16.gmra.mrb[0].mxu0 %v1610
    %v1736 = vpop.f32.mrb[0].mxu0
    %v1737 = vadd.f32 0.0, %v1736
    %v1738 = vpop.f32.mrb[0].mxu0
    %v1739 = vpop.f32.mrb[0].mxu0
    %v1740 = vadd.f32 0.0, %v1739
    %v1741 = vpop.f32.mrb[0].mxu0
    %1742 = vmatprep.mubr.bf16.mxu0 0
    %1743 = vmatmul.mubr.bf16.gmra.mrb[0].mxu0 %v1611
    %v1744 = vpop.f32.mrb[0].mxu0
    %v1745 = vadd.f32 0.0, %v1744
    %v1746 = vpop.f32.mrb[0].mxu0
    %v1747 = vpop.f32.mrb[0].mxu0
    %v1748 = vadd.f32 0.0, %v1747
    %v1749 = vpop.f32.mrb[0].mxu0
    %1750 = vmatprep.mubr.bf16.mxu0 0
    %1751 = vmatmul.mubr.bf16.gmra.mrb[0].mxu0 %v1612
    %v1752 = vpop.f32.mrb[0].mxu0
    %v1753 = vadd.f32 0.0, %v1752
    %v1754 = vpop.f32.mrb[0].mxu0
    %v1755 = vpop.f32.mrb[0].mxu0
    %v1756 = vadd.f32 0.0, %v1755
    %v1757 = vpop.f32.mrb[0].mxu0
    %1758 = vmatprep.mubr.bf16.mxu0 0
    %1759 = vmatmul.mubr.bf16.gmra.mrb[0].mxu0 %v1613
    %v1760 = vpop.f32.mrb[0].mxu0
    %v1761 = vadd.f32 0.0, %v1760
    %v1762 = vpop.f32.mrb[0].mxu0
    %v1763 = vpop.f32.mrb[0].mxu0
    %v1764 = vadd.f32 0.0, %v1763
    %v1765 = vpop.f32.mrb[0].mxu0
    %1766 = vdwg.mxu0
    %v1767 = vadd.f32 %v1499, %v1705
    %v1768 = vadd.f32 %v1502, %v1708
    %v1769 = vadd.f32 %v1507, %v1713
    %v1770 = vadd.f32 %v1510, %v1716
    %v1771 = vadd.f32 %v1515, %v1721
    %v1772 = vadd.f32 %v1518, %v1724
    %v1773 = vadd.f32 %v1523, %v1729
    %v1774 = vadd.f32 %v1526, %v1732
    %v1775 = vadd.f32 %v1531, %v1737
    %v1776 = vadd.f32 %v1534, %v1740
    %v1777 = vadd.f32 %v1539, %v1745
    %v1778 = vadd.f32 %v1542, %v1748
    %v1779 = vadd.f32 %v1547, %v1753
    %v1780 = vadd.f32 %v1550, %v1756
    %v1781 = vadd.f32 %v1555, %v1761
    %v1782 = vadd.f32 %v1558, %v1764
    %s1783 = scalar_lea.vmem [#allocation2], 192
    %v1784 = vld [vmem:[%s1783] sm:$0xf]
    %v1785 = vld [vmem:[%s1783 + $0x4] sm:$0xf]
    %v1786 = vld [vmem:[%s1783 + $0x8] sm:$0xf]
    %v1787 = vld [vmem:[%s1783 + $0xc] sm:$0xf]
    %v1788 = vld [vmem:[%s1783 + $0x10] sm:$0xf]
    %v1789 = vld [vmem:[%s1783 + $0x14] sm:$0xf]
    %v1790 = vld [vmem:[%s1783 + $0x18] sm:$0xf]
    %v1791 = vld [vmem:[%s1783 + $0x1c] sm:$0xf]
    %v1792 = vld [vmem:[%s1783 + $0x20] sm:$0xf]
    %v1793 = vld [vmem:[%s1783 + $0x24] sm:$0xf]
    %v1794 = vld [vmem:[%s1783 + $0x28] sm:$0xf]
    %v1795 = vld [vmem:[%s1783 + $0x2c] sm:$0xf]
    %v1796 = vld [vmem:[%s1783 + $0x30] sm:$0xf]
    %v1797 = vld [vmem:[%s1783 + $0x34] sm:$0xf]
    %v1798 = vld [vmem:[%s1783 + $0x38] sm:$0xf]
    %v1799 = vld [vmem:[%s1783 + $0x3c] sm:$0xf]
    %v1802 = vunpack.c.l.b16 %v1072
    %v1803 = vunpack.c.l.b16 %v1080
    %v1804 = vpack.c.b16 %v1387, %v1386
    %v1805 = vpack.c.b16 %v1389, %v1388
    %v1806 = vpack.c.b16 %v1391, %v1390
    %v1807 = vpack.c.b16 %v1802, %v1392
    %v1808 = vpack.c.b16 %v1394, %v1393
    %v1809 = vpack.c.b16 %v1396, %v1395
    %v1810 = vpack.c.b16 %v1398, %v1397
    %v1811 = vpack.c.b16 %v1803, %v1399
    %v1836 = vunpack.c.l.b16 %v1784
    %v1837 = vunpack.c.l.b16 %v1785
    %v1838 = vunpack.c.l.b16 %v1786
    %v1839 = vunpack.c.l.b16 %v1787
    %v1840 = vunpack.c.l.b16 %v1788
    %v1841 = vunpack.c.l.b16 %v1789
    %v1842 = vunpack.c.l.b16 %v1790
    %v1843 = vunpack.c.l.b16 %v1791
    %v1844 = vunpack.c.l.b16 %v1792
    %v1845 = vunpack.c.l.b16 %v1793
    %v1846 = vunpack.c.l.b16 %v1794
    %v1847 = vunpack.c.l.b16 %v1795
    %v1848 = vunpack.c.l.b16 %v1796
    %v1849 = vunpack.c.l.b16 %v1797
    %v1850 = vunpack.c.l.b16 %v1798
    %v1851 = vunpack.c.l.b16 %v1799
    %v1852 = vpack.c.b16 %v1837, %v1836
    %v1853 = vpack.c.b16 %v1839, %v1838
    %v1854 = vpack.c.b16 %v1841, %v1840
    %v1855 = vpack.c.b16 %v1843, %v1842
    %v1856 = vpack.c.b16 %v1845, %v1844
    %v1857 = vpack.c.b16 %v1847, %v1846
    %v1858 = vpack.c.b16 %v1849, %v1848
    %v1859 = vpack.c.b16 %v1851, %v1850
    %1868 = vmatprep.subr.bf16.mxu0 0
    %1869 = vmatpush1.bf16.msra.mxu0 %v1852
    %1870 = vmatprep.subr.bf16.mxu0 0
    %1871 = vmatpush1.bf16.msra.mxu0 %v1853
    %1872 = vmatprep.subr.bf16.mxu0 0
    %1873 = vmatpush1.bf16.msra.mxu0 %v1854
    %1874 = vmatprep.subr.bf16.mxu0 0
    %1875 = vmatpush1.bf16.msra.mxu0 %v1855
    %1876 = vmatprep.subr.bf16.mxu0 0
    %1877 = vmatpush1.bf16.msra.mxu0 %v1856
    %1878 = vmatprep.subr.bf16.mxu0 0
    %1879 = vmatpush1.bf16.msra.mxu0 %v1857
    %1880 = vmatprep.subr.bf16.mxu0 0
    %1881 = vmatpush1.bf16.msra.mxu0 %v1858
    %1882 = vmatprep.subr.bf16.mxu0 0
    %1883 = vmatpush1.bf16.msra.mxu0 %v1859
    %1884 = vmatprep.subr.bf16.mxu0 0
    %1885 = vmatpush1.bf16.msra.mxu0 0
    %1886 = vmatprep.subr.bf16.mxu0 0
    %1887 = vmatpush1.bf16.msra.mxu0 0
    %1888 = vmatprep.subr.bf16.mxu0 0
    %1889 = vmatpush1.bf16.msra.mxu0 0
    %1890 = vmatprep.subr.bf16.mxu0 0
    %1891 = vmatpush1.bf16.msra.mxu0 0
    %1892 = vmatprep.subr.bf16.mxu0 0
    %1893 = vmatpush1.bf16.msra.mxu0 0
    %1894 = vmatprep.subr.bf16.mxu0 0
    %1895 = vmatpush1.bf16.msra.mxu0 0
    %1896 = vmatprep.subr.bf16.mxu0 0
    %1897 = vmatpush1.bf16.msra.mxu0 0
    %1898 = vmatprep.subr.bf16.mxu0 0
    %1899 = vmatpush1.bf16.msra.mxu0 0
    %1900 = vmatprep.mubr.bf16.mxu0 0
    %1901 = vmatmul.mubr.bf16.gmra.mrb[0].mxu0 %v1804
    %v1902 = vpop.f32.mrb[0].mxu0
    %v1903 = vadd.f32 0.0, %v1902
    %v1904 = vpop.f32.mrb[0].mxu0
    %v1905 = vpop.f32.mrb[0].mxu0
    %v1906 = vadd.f32 0.0, %v1905
    %v1907 = vpop.f32.mrb[0].mxu0
    %1908 = vmatprep.mubr.bf16.mxu0 0
    %1909 = vmatmul.mubr.bf16.gmra.mrb[0].mxu0 %v1805
    %v1910 = vpop.f32.mrb[0].mxu0
    %v1911 = vadd.f32 0.0, %v1910
    %v1912 = vpop.f32.mrb[0].mxu0
    %v1913 = vpop.f32.mrb[0].mxu0
    %v1914 = vadd.f32 0.0, %v1913
    %v1915 = vpop.f32.mrb[0].mxu0
    %1916 = vmatprep.mubr.bf16.mxu0 0
    %1917 = vmatmul.mubr.bf16.gmra.mrb[0].mxu0 %v1806
    %v1918 = vpop.f32.mrb[0].mxu0
    %v1919 = vadd.f32 0.0, %v1918
    %v1920 = vpop.f32.mrb[0].mxu0
    %v1921 = vpop.f32.mrb[0].mxu0
    %v1922 = vadd.f32 0.0, %v1921
    %v1923 = vpop.f32.mrb[0].mxu0
    %1924 = vmatprep.mubr.bf16.mxu0 0
    %1925 = vmatmul.mubr.bf16.gmra.mrb[0].mxu0 %v1807
    %v1926 = vpop.f32.mrb[0].mxu0
    %v1927 = vadd.f32 0.0, %v1926
    %v1928 = vpop.f32.mrb[0].mxu0
    %v1929 = vpop.f32.mrb[0].mxu0
    %v1930 = vadd.f32 0.0, %v1929
    %v1931 = vpop.f32.mrb[0].mxu0
    %1932 = vmatprep.mubr.bf16.mxu0 0
    %1933 = vmatmul.mubr.bf16.gmra.mrb[0].mxu0 %v1808
    %v1934 = vpop.f32.mrb[0].mxu0
    %v1935 = vadd.f32 0.0, %v1934
    %v1936 = vpop.f32.mrb[0].mxu0
    %v1937 = vpop.f32.mrb[0].mxu0
    %v1938 = vadd.f32 0.0, %v1937
    %v1939 = vpop.f32.mrb[0].mxu0
    %1940 = vmatprep.mubr.bf16.mxu0 0
    %1941 = vmatmul.mubr.bf16.gmra.mrb[0].mxu0 %v1809
    %v1942 = vpop.f32.mrb[0].mxu0
    %v1943 = vadd.f32 0.0, %v1942
    %v1944 = vpop.f32.mrb[0].mxu0
    %v1945 = vpop.f32.mrb[0].mxu0
    %v1946 = vadd.f32 0.0, %v1945
    %v1947 = vpop.f32.mrb[0].mxu0
    %1948 = vmatprep.mubr.bf16.mxu0 0
    %1949 = vmatmul.mubr.bf16.gmra.mrb[0].mxu0 %v1810
    %v1950 = vpop.f32.mrb[0].mxu0
    %v1951 = vadd.f32 0.0, %v1950
    %v1952 = vpop.f32.mrb[0].mxu0
    %v1953 = vpop.f32.mrb[0].mxu0
    %v1954 = vadd.f32 0.0, %v1953
    %v1955 = vpop.f32.mrb[0].mxu0
    %1956 = vmatprep.mubr.bf16.mxu0 0
    %1957 = vmatmul.mubr.bf16.gmra.mrb[0].mxu0 %v1811
    %v1958 = vpop.f32.mrb[0].mxu0
    %v1959 = vadd.f32 0.0, %v1958
    %v1960 = vpop.f32.mrb[0].mxu0
    %v1961 = vpop.f32.mrb[0].mxu0
    %v1962 = vadd.f32 0.0, %v1961
    %v1963 = vpop.f32.mrb[0].mxu0
    %1964 = vdwg.mxu0
    %v1965 = vadd.f32 %v1767, %v1903
    %v1966 = vadd.f32 %v1768, %v1906
    %v1967 = vadd.f32 %v1769, %v1911
    %v1968 = vadd.f32 %v1770, %v1914
    %v1969 = vadd.f32 %v1771, %v1919
    %v1970 = vadd.f32 %v1772, %v1922
    %v1971 = vadd.f32 %v1773, %v1927
    %v1972 = vadd.f32 %v1774, %v1930
    %v1973 = vadd.f32 %v1775, %v1935
    %v1974 = vadd.f32 %v1776, %v1938
    %v1975 = vadd.f32 %v1777, %v1943
    %v1976 = vadd.f32 %v1778, %v1946
    %v1977 = vadd.f32 %v1779, %v1951
    %v1978 = vadd.f32 %v1780, %v1954
    %v1979 = vadd.f32 %v1781, %v1959
    %v1980 = vadd.f32 %v1782, %v1962
    %s1981 = scalar_lea.vmem [#allocation2], 256
    %v1982 = vld [vmem:[%s1981] sm:$0xf]
    %v1983 = vld [vmem:[%s1981 + $0x4] sm:$0xf]
    %v1984 = vld [vmem:[%s1981 + $0x8] sm:$0xf]
    %v1985 = vld [vmem:[%s1981 + $0xc] sm:$0xf]
    %v1986 = vld [vmem:[%s1981 + $0x10] sm:$0xf]
    %v1987 = vld [vmem:[%s1981 + $0x14] sm:$0xf]
    %v1988 = vld [vmem:[%s1981 + $0x18] sm:$0xf]
    %v1989 = vld [vmem:[%s1981 + $0x1c] sm:$0xf]
    %v1990 = vld [vmem:[%s1981 + $0x20] sm:$0xf]
    %v1991 = vld [vmem:[%s1981 + $0x24] sm:$0xf]
    %v1992 = vld [vmem:[%s1981 + $0x28] sm:$0xf]
    %v1993 = vld [vmem:[%s1981 + $0x2c] sm:$0xf]
    %v1994 = vld [vmem:[%s1981 + $0x30] sm:$0xf]
    %v1995 = vld [vmem:[%s1981 + $0x34] sm:$0xf]
    %v1996 = vld [vmem:[%s1981 + $0x38] sm:$0xf]
    %v1997 = vld [vmem:[%s1981 + $0x3c] sm:$0xf]
    %v2000 = vunpack.c.l.b16 %v925
    %v2001 = vunpack.c.l.b16 %v933
    %v2002 = vpack.c.b16 %v1198, %v1197
    %v2003 = vpack.c.b16 %v1200, %v1199
    %v2004 = vpack.c.b16 %v1202, %v1201
    %v2005 = vpack.c.b16 %v2000, %v1203
    %v2006 = vpack.c.b16 %v1205, %v1204
    %v2007 = vpack.c.b16 %v1207, %v1206
    %v2008 = vpack.c.b16 %v1209, %v1208
    %v2009 = vpack.c.b16 %v2001, %v1210
    %v2034 = vunpack.c.l.b16 %v1982
    %v2035 = vunpack.c.l.b16 %v1983
    %v2036 = vunpack.c.l.b16 %v1984
    %v2037 = vunpack.c.l.b16 %v1985
    %v2038 = vunpack.c.l.b16 %v1986
    %v2039 = vunpack.c.l.b16 %v1987
    %v2040 = vunpack.c.l.b16 %v1988
    %v2041 = vunpack.c.l.b16 %v1989
    %v2042 = vunpack.c.l.b16 %v1990
    %v2043 = vunpack.c.l.b16 %v1991
    %v2044 = vunpack.c.l.b16 %v1992
    %v2045 = vunpack.c.l.b16 %v1993
    %v2046 = vunpack.c.l.b16 %v1994
    %v2047 = vunpack.c.l.b16 %v1995
    %v2048 = vunpack.c.l.b16 %v1996
    %v2049 = vunpack.c.l.b16 %v1997
    %v2050 = vpack.c.b16 %v2035, %v2034
    %v2051 = vpack.c.b16 %v2037, %v2036
    %v2052 = vpack.c.b16 %v2039, %v2038
    %v2053 = vpack.c.b16 %v2041, %v2040
    %v2054 = vpack.c.b16 %v2043, %v2042
    %v2055 = vpack.c.b16 %v2045, %v2044
    %v2056 = vpack.c.b16 %v2047, %v2046
    %v2057 = vpack.c.b16 %v2049, %v2048
    %2066 = vmatprep.subr.bf16.mxu0 0
    %2067 = vmatpush1.bf16.msra.mxu0 %v2050
    %2068 = vmatprep.subr.bf16.mxu0 0
    %2069 = vmatpush1.bf16.msra.mxu0 %v2051
    %2070 = vmatprep.subr.bf16.mxu0 0
    %2071 = vmatpush1.bf16.msra.mxu0 %v2052
    %2072 = vmatprep.subr.bf16.mxu0 0
    %2073 = vmatpush1.bf16.msra.mxu0 %v2053
    %2074 = vmatprep.subr.bf16.mxu0 0
    %2075 = vmatpush1.bf16.msra.mxu0 %v2054
    %2076 = vmatprep.subr.bf16.mxu0 0
    %2077 = vmatpush1.bf16.msra.mxu0 %v2055
    %2078 = vmatprep.subr.bf16.mxu0 0
    %2079 = vmatpush1.bf16.msra.mxu0 %v2056
    %2080 = vmatprep.subr.bf16.mxu0 0
    %2081 = vmatpush1.bf16.msra.mxu0 %v2057
    %2082 = vmatprep.subr.bf16.mxu0 0
    %2083 = vmatpush1.bf16.msra.mxu0 0
    %2084 = vmatprep.subr.bf16.mxu0 0
    %2085 = vmatpush1.bf16.msra.mxu0 0
    %2086 = vmatprep.subr.bf16.mxu0 0
    %2087 = vmatpush1.bf16.msra.mxu0 0
    %2088 = vmatprep.subr.bf16.mxu0 0
    %2089 = vmatpush1.bf16.msra.mxu0 0
    %2090 = vmatprep.subr.bf16.mxu0 0
    %2091 = vmatpush1.bf16.msra.mxu0 0
    %2092 = vmatprep.subr.bf16.mxu0 0
    %2093 = vmatpush1.bf16.msra.mxu0 0
    %2094 = vmatprep.subr.bf16.mxu0 0
    %2095 = vmatpush1.bf16.msra.mxu0 0
    %2096 = vmatprep.subr.bf16.mxu0 0
    %2097 = vmatpush1.bf16.msra.mxu0 0
    %2098 = vmatprep.mubr.bf16.mxu0 0
    %2099 = vmatmul.mubr.bf16.gmra.mrb[0].mxu0 %v2002
    %v2100 = vpop.f32.mrb[0].mxu0
    %v2101 = vadd.f32 0.0, %v2100
    %v2102 = vpop.f32.mrb[0].mxu0
    %v2103 = vpop.f32.mrb[0].mxu0
    %v2104 = vadd.f32 0.0, %v2103
    %v2105 = vpop.f32.mrb[0].mxu0
    %2106 = vmatprep.mubr.bf16.mxu0 0
    %2107 = vmatmul.mubr.bf16.gmra.mrb[0].mxu0 %v2003
    %v2108 = vpop.f32.mrb[0].mxu0
    %v2109 = vadd.f32 0.0, %v2108
    %v2110 = vpop.f32.mrb[0].mxu0
    %v2111 = vpop.f32.mrb[0].mxu0
    %v2112 = vadd.f32 0.0, %v2111
    %v2113 = vpop.f32.mrb[0].mxu0
    %2114 = vmatprep.mubr.bf16.mxu0 0
    %2115 = vmatmul.mubr.bf16.gmra.mrb[0].mxu0 %v2004
    %v2116 = vpop.f32.mrb[0].mxu0
    %v2117 = vadd.f32 0.0, %v2116
    %v2118 = vpop.f32.mrb[0].mxu0
    %v2119 = vpop.f32.mrb[0].mxu0
    %v2120 = vadd.f32 0.0, %v2119
    %v2121 = vpop.f32.mrb[0].mxu0
    %2122 = vmatprep.mubr.bf16.mxu0 0
    %2123 = vmatmul.mubr.bf16.gmra.mrb[0].mxu0 %v2005
    %v2124 = vpop.f32.mrb[0].mxu0
    %v2125 = vadd.f32 0.0, %v2124
    %v2126 = vpop.f32.mrb[0].mxu0
    %v2127 = vpop.f32.mrb[0].mxu0
    %v2128 = vadd.f32 0.0, %v2127
    %v2129 = vpop.f32.mrb[0].mxu0
    %2130 = vmatprep.mubr.bf16.mxu0 0
    %2131 = vmatmul.mubr.bf16.gmra.mrb[0].mxu0 %v2006
    %v2132 = vpop.f32.mrb[0].mxu0
    %v2133 = vadd.f32 0.0, %v2132
    %v2134 = vpop.f32.mrb[0].mxu0
    %v2135 = vpop.f32.mrb[0].mxu0
    %v2136 = vadd.f32 0.0, %v2135
    %v2137 = vpop.f32.mrb[0].mxu0
    %2138 = vmatprep.mubr.bf16.mxu0 0
    %2139 = vmatmul.mubr.bf16.gmra.mrb[0].mxu0 %v2007
    %v2140 = vpop.f32.mrb[0].mxu0
    %v2141 = vadd.f32 0.0, %v2140
    %v2142 = vpop.f32.mrb[0].mxu0
    %v2143 = vpop.f32.mrb[0].mxu0
    %v2144 = vadd.f32 0.0, %v2143
    %v2145 = vpop.f32.mrb[0].mxu0
    %2146 = vmatprep.mubr.bf16.mxu0 0
    %2147 = vmatmul.mubr.bf16.gmra.mrb[0].mxu0 %v2008
    %v2148 = vpop.f32.mrb[0].mxu0
    %v2149 = vadd.f32 0.0, %v2148
    %v2150 = vpop.f32.mrb[0].mxu0
    %v2151 = vpop.f32.mrb[0].mxu0
    %v2152 = vadd.f32 0.0, %v2151
    %v2153 = vpop.f32.mrb[0].mxu0
    %2154 = vmatprep.mubr.bf16.mxu0 0
    %2155 = vmatmul.mubr.bf16.gmra.mrb[0].mxu0 %v2009
    %v2156 = vpop.f32.mrb[0].mxu0
    %v2157 = vadd.f32 0.0, %v2156
    %v2158 = vpop.f32.mrb[0].mxu0
    %v2159 = vpop.f32.mrb[0].mxu0
    %v2160 = vadd.f32 0.0, %v2159
    %v2161 = vpop.f32.mrb[0].mxu0
    %2162 = vdwg.mxu0
    %v2163 = vadd.f32 %v1965, %v2101
    %v2164 = vadd.f32 %v1966, %v2104
    %v2165 = vadd.f32 %v1967, %v2109
    %v2166 = vadd.f32 %v1968, %v2112
    %v2167 = vadd.f32 %v1969, %v2117
    %v2168 = vadd.f32 %v1970, %v2120
    %v2169 = vadd.f32 %v1971, %v2125
    %v2170 = vadd.f32 %v1972, %v2128
    %v2171 = vadd.f32 %v1973, %v2133
    %v2172 = vadd.f32 %v1974, %v2136
    %v2173 = vadd.f32 %v1975, %v2141
    %v2174 = vadd.f32 %v1976, %v2144
    %v2175 = vadd.f32 %v1977, %v2149
    %v2176 = vadd.f32 %v1978, %v2152
    %v2177 = vadd.f32 %v1979, %v2157
    %v2178 = vadd.f32 %v1980, %v2160
    %s2179 = scalar_lea.vmem [#allocation2], 320
    %v2180 = vld [vmem:[%s2179] sm:$0xf]
    %v2181 = vld [vmem:[%s2179 + $0x4] sm:$0xf]
    %v2182 = vld [vmem:[%s2179 + $0x8] sm:$0xf]
    %v2183 = vld [vmem:[%s2179 + $0xc] sm:$0xf]
    %v2184 = vld [vmem:[%s2179 + $0x10] sm:$0xf]
    %v2185 = vld [vmem:[%s2179 + $0x14] sm:$0xf]
    %v2186 = vld [vmem:[%s2179 + $0x18] sm:$0xf]
    %v2187 = vld [vmem:[%s2179 + $0x1c] sm:$0xf]
    %v2188 = vld [vmem:[%s2179 + $0x20] sm:$0xf]
    %v2189 = vld [vmem:[%s2179 + $0x24] sm:$0xf]
    %v2190 = vld [vmem:[%s2179 + $0x28] sm:$0xf]
    %v2191 = vld [vmem:[%s2179 + $0x2c] sm:$0xf]
    %v2192 = vld [vmem:[%s2179 + $0x30] sm:$0xf]
    %v2193 = vld [vmem:[%s2179 + $0x34] sm:$0xf]
    %v2194 = vld [vmem:[%s2179 + $0x38] sm:$0xf]
    %v2195 = vld [vmem:[%s2179 + $0x3c] sm:$0xf]
    %v2198 = vunpack.c.l.b16 %v1139
    %v2199 = vunpack.c.l.b16 %v1147
    %v2200 = vpack.c.b16 %v1593, %v1592
    %v2201 = vpack.c.b16 %v1595, %v1594
    %v2202 = vpack.c.b16 %v1597, %v1596
    %v2203 = vpack.c.b16 %v2198, %v1598
    %v2204 = vpack.c.b16 %v1600, %v1599
    %v2205 = vpack.c.b16 %v1602, %v1601
    %v2206 = vpack.c.b16 %v1604, %v1603
    %v2207 = vpack.c.b16 %v2199, %v1605
    %v2232 = vunpack.c.l.b16 %v2180
    %v2233 = vunpack.c.l.b16 %v2181
    %v2234 = vunpack.c.l.b16 %v2182
    %v2235 = vunpack.c.l.b16 %v2183
    %v2236 = vunpack.c.l.b16 %v2184
    %v2237 = vunpack.c.l.b16 %v2185
    %v2238 = vunpack.c.l.b16 %v2186
    %v2239 = vunpack.c.l.b16 %v2187
    %v2240 = vunpack.c.l.b16 %v2188
    %v2241 = vunpack.c.l.b16 %v2189
    %v2242 = vunpack.c.l.b16 %v2190
    %v2243 = vunpack.c.l.b16 %v2191
    %v2244 = vunpack.c.l.b16 %v2192
    %v2245 = vunpack.c.l.b16 %v2193
    %v2246 = vunpack.c.l.b16 %v2194
    %v2247 = vunpack.c.l.b16 %v2195
    %v2248 = vpack.c.b16 %v2233, %v2232
    %v2249 = vpack.c.b16 %v2235, %v2234
    %v2250 = vpack.c.b16 %v2237, %v2236
    %v2251 = vpack.c.b16 %v2239, %v2238
    %v2252 = vpack.c.b16 %v2241, %v2240
    %v2253 = vpack.c.b16 %v2243, %v2242
    %v2254 = vpack.c.b16 %v2245, %v2244
    %v2255 = vpack.c.b16 %v2247, %v2246
    %2264 = vmatprep.subr.bf16.mxu0 0
    %2265 = vmatpush1.bf16.msra.mxu0 %v2248
    %2266 = vmatprep.subr.bf16.mxu0 0
    %2267 = vmatpush1.bf16.msra.mxu0 %v2249
    %2268 = vmatprep.subr.bf16.mxu0 0
    %2269 = vmatpush1.bf16.msra.mxu0 %v2250
    %2270 = vmatprep.subr.bf16.mxu0 0
    %2271 = vmatpush1.bf16.msra.mxu0 %v2251
    %2272 = vmatprep.subr.bf16.mxu0 0
    %2273 = vmatpush1.bf16.msra.mxu0 %v2252
    %2274 = vmatprep.subr.bf16.mxu0 0
    %2275 = vmatpush1.bf16.msra.mxu0 %v2253
    %2276 = vmatprep.subr.bf16.mxu0 0
    %2277 = vmatpush1.bf16.msra.mxu0 %v2254
    %2278 = vmatprep.subr.bf16.mxu0 0
    %2279 = vmatpush1.bf16.msra.mxu0 %v2255
    %2280 = vmatprep.subr.bf16.mxu0 0
    %2281 = vmatpush1.bf16.msra.mxu0 0
    %2282 = vmatprep.subr.bf16.mxu0 0
    %2283 = vmatpush1.bf16.msra.mxu0 0
    %2284 = vmatprep.subr.bf16.mxu0 0
    %2285 = vmatpush1.bf16.msra.mxu0 0
    %2286 = vmatprep.subr.bf16.mxu0 0
    %2287 = vmatpush1.bf16.msra.mxu0 0
    %2288 = vmatprep.subr.bf16.mxu0 0
    %2289 = vmatpush1.bf16.msra.mxu0 0
    %2290 = vmatprep.subr.bf16.mxu0 0
    %2291 = vmatpush1.bf16.msra.mxu0 0
    %2292 = vmatprep.subr.bf16.mxu0 0
    %2293 = vmatpush1.bf16.msra.mxu0 0
    %2294 = vmatprep.subr.bf16.mxu0 0
    %2295 = vmatpush1.bf16.msra.mxu0 0
    %2296 = vmatprep.mubr.bf16.mxu0 0
    %2297 = vmatmul.mubr.bf16.gmra.mrb[0].mxu0 %v2200
    %v2298 = vpop.f32.mrb[0].mxu0
    %v2299 = vadd.f32 0.0, %v2298
    %v2300 = vpop.f32.mrb[0].mxu0
    %v2301 = vpop.f32.mrb[0].mxu0
    %v2302 = vadd.f32 0.0, %v2301
    %v2303 = vpop.f32.mrb[0].mxu0
    %2304 = vmatprep.mubr.bf16.mxu0 0
    %2305 = vmatmul.mubr.bf16.gmra.mrb[0].mxu0 %v2201
    %v2306 = vpop.f32.mrb[0].mxu0
    %v2307 = vadd.f32 0.0, %v2306
    %v2308 = vpop.f32.mrb[0].mxu0
    %v2309 = vpop.f32.mrb[0].mxu0
    %v2310 = vadd.f32 0.0, %v2309
    %v2311 = vpop.f32.mrb[0].mxu0
    %2312 = vmatprep.mubr.bf16.mxu0 0
    %2313 = vmatmul.mubr.bf16.gmra.mrb[0].mxu0 %v2202
    %v2314 = vpop.f32.mrb[0].mxu0
    %v2315 = vadd.f32 0.0, %v2314
    %v2316 = vpop.f32.mrb[0].mxu0
    %v2317 = vpop.f32.mrb[0].mxu0
    %v2318 = vadd.f32 0.0, %v2317
    %v2319 = vpop.f32.mrb[0].mxu0
    %2320 = vmatprep.mubr.bf16.mxu0 0
    %2321 = vmatmul.mubr.bf16.gmra.mrb[0].mxu0 %v2203
    %v2322 = vpop.f32.mrb[0].mxu0
    %v2323 = vadd.f32 0.0, %v2322
    %v2324 = vpop.f32.mrb[0].mxu0
    %v2325 = vpop.f32.mrb[0].mxu0
    %v2326 = vadd.f32 0.0, %v2325
    %v2327 = vpop.f32.mrb[0].mxu0
    %2328 = vmatprep.mubr.bf16.mxu0 0
    %2329 = vmatmul.mubr.bf16.gmra.mrb[0].mxu0 %v2204
    %v2330 = vpop.f32.mrb[0].mxu0
    %v2331 = vadd.f32 0.0, %v2330
    %v2332 = vpop.f32.mrb[0].mxu0
    %v2333 = vpop.f32.mrb[0].mxu0
    %v2334 = vadd.f32 0.0, %v2333
    %v2335 = vpop.f32.mrb[0].mxu0
    %2336 = vmatprep.mubr.bf16.mxu0 0
    %2337 = vmatmul.mubr.bf16.gmra.mrb[0].mxu0 %v2205
    %v2338 = vpop.f32.mrb[0].mxu0
    %v2339 = vadd.f32 0.0, %v2338
    %v2340 = vpop.f32.mrb[0].mxu0
    %v2341 = vpop.f32.mrb[0].mxu0
    %v2342 = vadd.f32 0.0, %v2341
    %v2343 = vpop.f32.mrb[0].mxu0
    %2344 = vmatprep.mubr.bf16.mxu0 0
    %2345 = vmatmul.mubr.bf16.gmra.mrb[0].mxu0 %v2206
    %v2346 = vpop.f32.mrb[0].mxu0
    %v2347 = vadd.f32 0.0, %v2346
    %v2348 = vpop.f32.mrb[0].mxu0
    %v2349 = vpop.f32.mrb[0].mxu0
    %v2350 = vadd.f32 0.0, %v2349
    %v2351 = vpop.f32.mrb[0].mxu0
    %2352 = vmatprep.mubr.bf16.mxu0 0
    %2353 = vmatmul.mubr.bf16.gmra.mrb[0].mxu0 %v2207
    %v2354 = vpop.f32.mrb[0].mxu0
    %v2355 = vadd.f32 0.0, %v2354
    %v2356 = vpop.f32.mrb[0].mxu0
    %v2357 = vpop.f32.mrb[0].mxu0
    %v2358 = vadd.f32 0.0, %v2357
    %v2359 = vpop.f32.mrb[0].mxu0
    %2360 = vdwg.mxu0
    %v2361 = vadd.f32 %v2163, %v2299
    %v2362 = vadd.f32 %v2164, %v2302
    %v2363 = vadd.f32 %v2165, %v2307
    %v2364 = vadd.f32 %v2166, %v2310
    %v2365 = vadd.f32 %v2167, %v2315
    %v2366 = vadd.f32 %v2168, %v2318
    %v2367 = vadd.f32 %v2169, %v2323
    %v2368 = vadd.f32 %v2170, %v2326
    %v2369 = vadd.f32 %v2171, %v2331
    %v2370 = vadd.f32 %v2172, %v2334
    %v2371 = vadd.f32 %v2173, %v2339
    %v2372 = vadd.f32 %v2174, %v2342
    %v2373 = vadd.f32 %v2175, %v2347
    %v2374 = vadd.f32 %v2176, %v2350
    %v2375 = vadd.f32 %v2177, %v2355
    %v2376 = vadd.f32 %v2178, %v2358
    %s2377 = scalar_lea.vmem [#allocation2], 384
    %v2378 = vld [vmem:[%s2377] sm:$0xf]
    %v2379 = vld [vmem:[%s2377 + $0x4] sm:$0xf]
    %v2380 = vld [vmem:[%s2377 + $0x8] sm:$0xf]
    %v2381 = vld [vmem:[%s2377 + $0xc] sm:$0xf]
    %v2382 = vld [vmem:[%s2377 + $0x10] sm:$0xf]
    %v2383 = vld [vmem:[%s2377 + $0x14] sm:$0xf]
    %v2384 = vld [vmem:[%s2377 + $0x18] sm:$0xf]
    %v2385 = vld [vmem:[%s2377 + $0x1c] sm:$0xf]
    %v2386 = vld [vmem:[%s2377 + $0x20] sm:$0xf]
    %v2387 = vld [vmem:[%s2377 + $0x24] sm:$0xf]
    %v2388 = vld [vmem:[%s2377 + $0x28] sm:$0xf]
    %v2389 = vld [vmem:[%s2377 + $0x2c] sm:$0xf]
    %v2390 = vld [vmem:[%s2377 + $0x30] sm:$0xf]
    %v2391 = vld [vmem:[%s2377 + $0x34] sm:$0xf]
    %v2392 = vld [vmem:[%s2377 + $0x38] sm:$0xf]
    %v2393 = vld [vmem:[%s2377 + $0x3c] sm:$0xf]
    %v2394 = vpack.c.b16 %v1196, %v1802
    %v2395 = vpack.c.b16 %v1196, %v1803
    %v2414 = vunpack.c.l.b16 %v2378
    %v2415 = vunpack.c.l.b16 %v2379
    %v2416 = vunpack.c.l.b16 %v2380
    %v2417 = vunpack.c.l.b16 %v2381
    %v2418 = vunpack.c.l.b16 %v2382
    %v2419 = vunpack.c.l.b16 %v2383
    %v2420 = vunpack.c.l.b16 %v2384
    %v2421 = vunpack.c.l.b16 %v2385
    %v2422 = vunpack.c.l.b16 %v2386
    %v2423 = vunpack.c.l.b16 %v2387
    %v2424 = vunpack.c.l.b16 %v2388
    %v2425 = vunpack.c.l.b16 %v2389
    %v2426 = vunpack.c.l.b16 %v2390
    %v2427 = vunpack.c.l.b16 %v2391
    %v2428 = vunpack.c.l.b16 %v2392
    %v2429 = vunpack.c.l.b16 %v2393
    %v2430 = vpack.c.b16 %v2415, %v2414
    %v2431 = vpack.c.b16 %v2417, %v2416
    %v2432 = vpack.c.b16 %v2419, %v2418
    %v2433 = vpack.c.b16 %v2421, %v2420
    %v2434 = vpack.c.b16 %v2423, %v2422
    %v2435 = vpack.c.b16 %v2425, %v2424
    %v2436 = vpack.c.b16 %v2427, %v2426
    %v2437 = vpack.c.b16 %v2429, %v2428
    %2446 = vmatprep.subr.bf16.mxu0 0
    %2447 = vmatpush1.bf16.msra.mxu0 %v2430
    %2448 = vmatprep.subr.bf16.mxu0 0
    %2449 = vmatpush1.bf16.msra.mxu0 %v2431
    %2450 = vmatprep.subr.bf16.mxu0 0
    %2451 = vmatpush1.bf16.msra.mxu0 %v2432
    %2452 = vmatprep.subr.bf16.mxu0 0
    %2453 = vmatpush1.bf16.msra.mxu0 %v2433
    %2454 = vmatprep.subr.bf16.mxu0 0
    %2455 = vmatpush1.bf16.msra.mxu0 %v2434
    %2456 = vmatprep.subr.bf16.mxu0 0
    %2457 = vmatpush1.bf16.msra.mxu0 %v2435
    %2458 = vmatprep.subr.bf16.mxu0 0
    %2459 = vmatpush1.bf16.msra.mxu0 %v2436
    %2460 = vmatprep.subr.bf16.mxu0 0
    %2461 = vmatpush1.bf16.msra.mxu0 %v2437
    %2462 = vmatprep.subr.bf16.mxu0 0
    %2463 = vmatpush1.bf16.msra.mxu0 0
    %2464 = vmatprep.subr.bf16.mxu0 0
    %2465 = vmatpush1.bf16.msra.mxu0 0
    %2466 = vmatprep.subr.bf16.mxu0 0
    %2467 = vmatpush1.bf16.msra.mxu0 0
    %2468 = vmatprep.subr.bf16.mxu0 0
    %2469 = vmatpush1.bf16.msra.mxu0 0
    %2470 = vmatprep.subr.bf16.mxu0 0
    %2471 = vmatpush1.bf16.msra.mxu0 0
    %2472 = vmatprep.subr.bf16.mxu0 0
    %2473 = vmatpush1.bf16.msra.mxu0 0
    %2474 = vmatprep.subr.bf16.mxu0 0
    %2475 = vmatpush1.bf16.msra.mxu0 0
    %2476 = vmatprep.subr.bf16.mxu0 0
    %2477 = vmatpush1.bf16.msra.mxu0 0
    %2478 = vmatprep.mubr.bf16.mxu0 0
    %2479 = vmatmul.mubr.bf16.gmra.mrb[0].mxu0 %v1401
    %v2480 = vpop.f32.mrb[0].mxu0
    %v2481 = vadd.f32 0.0, %v2480
    %v2482 = vpop.f32.mrb[0].mxu0
    %v2483 = vpop.f32.mrb[0].mxu0
    %v2484 = vadd.f32 0.0, %v2483
    %v2485 = vpop.f32.mrb[0].mxu0
    %2486 = vmatprep.mubr.bf16.mxu0 0
    %2487 = vmatmul.mubr.bf16.gmra.mrb[0].mxu0 %v1402
    %v2488 = vpop.f32.mrb[0].mxu0
    %v2489 = vadd.f32 0.0, %v2488
    %v2490 = vpop.f32.mrb[0].mxu0
    %v2491 = vpop.f32.mrb[0].mxu0
    %v2492 = vadd.f32 0.0, %v2491
    %v2493 = vpop.f32.mrb[0].mxu0
    %2494 = vmatprep.mubr.bf16.mxu0 0
    %2495 = vmatmul.mubr.bf16.gmra.mrb[0].mxu0 %v1403
    %v2496 = vpop.f32.mrb[0].mxu0
    %v2497 = vadd.f32 0.0, %v2496
    %v2498 = vpop.f32.mrb[0].mxu0
    %v2499 = vpop.f32.mrb[0].mxu0
    %v2500 = vadd.f32 0.0, %v2499
    %v2501 = vpop.f32.mrb[0].mxu0
    %2502 = vmatprep.mubr.bf16.mxu0 0
    %2503 = vmatmul.mubr.bf16.gmra.mrb[0].mxu0 %v2394
    %v2504 = vpop.f32.mrb[0].mxu0
    %v2505 = vadd.f32 0.0, %v2504
    %v2506 = vpop.f32.mrb[0].mxu0
    %v2507 = vpop.f32.mrb[0].mxu0
    %v2508 = vadd.f32 0.0, %v2507
    %v2509 = vpop.f32.mrb[0].mxu0
    %2510 = vmatprep.mubr.bf16.mxu0 0
    %2511 = vmatmul.mubr.bf16.gmra.mrb[0].mxu0 %v1405
    %v2512 = vpop.f32.mrb[0].mxu0
    %v2513 = vadd.f32 0.0, %v2512
    %v2514 = vpop.f32.mrb[0].mxu0
    %v2515 = vpop.f32.mrb[0].mxu0
    %v2516 = vadd.f32 0.0, %v2515
    %v2517 = vpop.f32.mrb[0].mxu0
    %2518 = vmatprep.mubr.bf16.mxu0 0
    %2519 = vmatmul.mubr.bf16.gmra.mrb[0].mxu0 %v1406
    %v2520 = vpop.f32.mrb[0].mxu0
    %v2521 = vadd.f32 0.0, %v2520
    %v2522 = vpop.f32.mrb[0].mxu0
    %v2523 = vpop.f32.mrb[0].mxu0
    %v2524 = vadd.f32 0.0, %v2523
    %v2525 = vpop.f32.mrb[0].mxu0
    %2526 = vmatprep.mubr.bf16.mxu0 0
    %2527 = vmatmul.mubr.bf16.gmra.mrb[0].mxu0 %v1407
    %v2528 = vpop.f32.mrb[0].mxu0
    %v2529 = vadd.f32 0.0, %v2528
    %v2530 = vpop.f32.mrb[0].mxu0
    %v2531 = vpop.f32.mrb[0].mxu0
    %v2532 = vadd.f32 0.0, %v2531
    %v2533 = vpop.f32.mrb[0].mxu0
    %2534 = vmatprep.mubr.bf16.mxu0 0
    %2535 = vmatmul.mubr.bf16.gmra.mrb[0].mxu0 %v2395
    %v2536 = vpop.f32.mrb[0].mxu0
    %v2537 = vadd.f32 0.0, %v2536
    %v2538 = vpop.f32.mrb[0].mxu0
    %v2539 = vpop.f32.mrb[0].mxu0
    %v2540 = vadd.f32 0.0, %v2539
    %v2541 = vpop.f32.mrb[0].mxu0
    %2542 = vdwg.mxu0
    %v2543 = vadd.f32 %v2361, %v2481
    %v2544 = vadd.f32 %v2362, %v2484
    %v2545 = vadd.f32 %v2363, %v2489
    %v2546 = vadd.f32 %v2364, %v2492
    %v2547 = vadd.f32 %v2365, %v2497
    %v2548 = vadd.f32 %v2366, %v2500
    %v2549 = vadd.f32 %v2367, %v2505
    %v2550 = vadd.f32 %v2368, %v2508
    %v2551 = vadd.f32 %v2369, %v2513
    %v2552 = vadd.f32 %v2370, %v2516
    %v2553 = vadd.f32 %v2371, %v2521
    %v2554 = vadd.f32 %v2372, %v2524
    %v2555 = vadd.f32 %v2373, %v2529
    %v2556 = vadd.f32 %v2374, %v2532
    %v2557 = vadd.f32 %v2375, %v2537
    %v2558 = vadd.f32 %v2376, %v2540
    %s2559 = scalar_lea.vmem [#allocation2], 448
    %v2560 = vld [vmem:[%s2559] sm:$0xf]
    %v2561 = vld [vmem:[%s2559 + $0x4] sm:$0xf]
    %v2562 = vld [vmem:[%s2559 + $0x8] sm:$0xf]
    %v2563 = vld [vmem:[%s2559 + $0xc] sm:$0xf]
    %v2564 = vld [vmem:[%s2559 + $0x10] sm:$0xf]
    %v2565 = vld [vmem:[%s2559 + $0x14] sm:$0xf]
    %v2566 = vld [vmem:[%s2559 + $0x18] sm:$0xf]
    %v2567 = vld [vmem:[%s2559 + $0x1c] sm:$0xf]
    %v2568 = vld [vmem:[%s2559 + $0x20] sm:$0xf]
    %v2569 = vld [vmem:[%s2559 + $0x24] sm:$0xf]
    %v2570 = vld [vmem:[%s2559 + $0x28] sm:$0xf]
    %v2571 = vld [vmem:[%s2559 + $0x2c] sm:$0xf]
    %v2572 = vld [vmem:[%s2559 + $0x30] sm:$0xf]
    %v2573 = vld [vmem:[%s2559 + $0x34] sm:$0xf]
    %v2574 = vld [vmem:[%s2559 + $0x38] sm:$0xf]
    %v2575 = vld [vmem:[%s2559 + $0x3c] sm:$0xf]
    %v2576 = vpack.c.b16 %v1196, %v2000
    %v2577 = vpack.c.b16 %v1196, %v2001
    %v2596 = vunpack.c.l.b16 %v2560
    %v2597 = vunpack.c.l.b16 %v2561
    %v2598 = vunpack.c.l.b16 %v2562
    %v2599 = vunpack.c.l.b16 %v2563
    %v2600 = vunpack.c.l.b16 %v2564
    %v2601 = vunpack.c.l.b16 %v2565
    %v2602 = vunpack.c.l.b16 %v2566
    %v2603 = vunpack.c.l.b16 %v2567
    %v2604 = vunpack.c.l.b16 %v2568
    %v2605 = vunpack.c.l.b16 %v2569
    %v2606 = vunpack.c.l.b16 %v2570
    %v2607 = vunpack.c.l.b16 %v2571
    %v2608 = vunpack.c.l.b16 %v2572
    %v2609 = vunpack.c.l.b16 %v2573
    %v2610 = vunpack.c.l.b16 %v2574
    %v2611 = vunpack.c.l.b16 %v2575
    %v2612 = vpack.c.b16 %v2597, %v2596
    %v2613 = vpack.c.b16 %v2599, %v2598
    %v2614 = vpack.c.b16 %v2601, %v2600
    %v2615 = vpack.c.b16 %v2603, %v2602
    %v2616 = vpack.c.b16 %v2605, %v2604
    %v2617 = vpack.c.b16 %v2607, %v2606
    %v2618 = vpack.c.b16 %v2609, %v2608
    %v2619 = vpack.c.b16 %v2611, %v2610
    %2628 = vmatprep.subr.bf16.mxu0 0
    %2629 = vmatpush1.bf16.msra.mxu0 %v2612
    %2630 = vmatprep.subr.bf16.mxu0 0
    %2631 = vmatpush1.bf16.msra.mxu0 %v2613
    %2632 = vmatprep.subr.bf16.mxu0 0
    %2633 = vmatpush1.bf16.msra.mxu0 %v2614
    %2634 = vmatprep.subr.bf16.mxu0 0
    %2635 = vmatpush1.bf16.msra.mxu0 %v2615
    %2636 = vmatprep.subr.bf16.mxu0 0
    %2637 = vmatpush1.bf16.msra.mxu0 %v2616
    %2638 = vmatprep.subr.bf16.mxu0 0
    %2639 = vmatpush1.bf16.msra.mxu0 %v2617
    %2640 = vmatprep.subr.bf16.mxu0 0
    %2641 = vmatpush1.bf16.msra.mxu0 %v2618
    %2642 = vmatprep.subr.bf16.mxu0 0
    %2643 = vmatpush1.bf16.msra.mxu0 %v2619
    %2644 = vmatprep.subr.bf16.mxu0 0
    %2645 = vmatpush1.bf16.msra.mxu0 0
    %2646 = vmatprep.subr.bf16.mxu0 0
    %2647 = vmatpush1.bf16.msra.mxu0 0
    %2648 = vmatprep.subr.bf16.mxu0 0
    %2649 = vmatpush1.bf16.msra.mxu0 0
    %2650 = vmatprep.subr.bf16.mxu0 0
    %2651 = vmatpush1.bf16.msra.mxu0 0
    %2652 = vmatprep.subr.bf16.mxu0 0
    %2653 = vmatpush1.bf16.msra.mxu0 0
    %2654 = vmatprep.subr.bf16.mxu0 0
    %2655 = vmatpush1.bf16.msra.mxu0 0
    %2656 = vmatprep.subr.bf16.mxu0 0
    %2657 = vmatpush1.bf16.msra.mxu0 0
    %2658 = vmatprep.subr.bf16.mxu0 0
    %2659 = vmatpush1.bf16.msra.mxu0 0
    %2660 = vmatprep.mubr.bf16.mxu0 0
    %2661 = vmatmul.mubr.bf16.gmra.mrb[0].mxu0 %v1212
    %v2662 = vpop.f32.mrb[0].mxu0
    %v2663 = vadd.f32 0.0, %v2662
    %v2664 = vpop.f32.mrb[0].mxu0
    %v2665 = vpop.f32.mrb[0].mxu0
    %v2666 = vadd.f32 0.0, %v2665
    %v2667 = vpop.f32.mrb[0].mxu0
    %2668 = vmatprep.mubr.bf16.mxu0 0
    %2669 = vmatmul.mubr.bf16.gmra.mrb[0].mxu0 %v1213
    %v2670 = vpop.f32.mrb[0].mxu0
    %v2671 = vadd.f32 0.0, %v2670
    %v2672 = vpop.f32.mrb[0].mxu0
    %v2673 = vpop.f32.mrb[0].mxu0
    %v2674 = vadd.f32 0.0, %v2673
    %v2675 = vpop.f32.mrb[0].mxu0
    %2676 = vmatprep.mubr.bf16.mxu0 0
    %2677 = vmatmul.mubr.bf16.gmra.mrb[0].mxu0 %v1214
    %v2678 = vpop.f32.mrb[0].mxu0
    %v2679 = vadd.f32 0.0, %v2678
    %v2680 = vpop.f32.mrb[0].mxu0
    %v2681 = vpop.f32.mrb[0].mxu0
    %v2682 = vadd.f32 0.0, %v2681
    %v2683 = vpop.f32.mrb[0].mxu0
    %2684 = vmatprep.mubr.bf16.mxu0 0
    %2685 = vmatmul.mubr.bf16.gmra.mrb[0].mxu0 %v2576
    %v2686 = vpop.f32.mrb[0].mxu0
    %v2687 = vadd.f32 0.0, %v2686
    %v2688 = vpop.f32.mrb[0].mxu0
    %v2689 = vpop.f32.mrb[0].mxu0
    %v2690 = vadd.f32 0.0, %v2689
    %v2691 = vpop.f32.mrb[0].mxu0
    %2692 = vmatprep.mubr.bf16.mxu0 0
    %2693 = vmatmul.mubr.bf16.gmra.mrb[0].mxu0 %v1216
    %v2694 = vpop.f32.mrb[0].mxu0
    %v2695 = vadd.f32 0.0, %v2694
    %v2696 = vpop.f32.mrb[0].mxu0
    %v2697 = vpop.f32.mrb[0].mxu0
    %v2698 = vadd.f32 0.0, %v2697
    %v2699 = vpop.f32.mrb[0].mxu0
    %2700 = vmatprep.mubr.bf16.mxu0 0
    %2701 = vmatmul.mubr.bf16.gmra.mrb[0].mxu0 %v1217
    %v2702 = vpop.f32.mrb[0].mxu0
    %v2703 = vadd.f32 0.0, %v2702
    %v2704 = vpop.f32.mrb[0].mxu0
    %v2705 = vpop.f32.mrb[0].mxu0
    %v2706 = vadd.f32 0.0, %v2705
    %v2707 = vpop.f32.mrb[0].mxu0
    %2708 = vmatprep.mubr.bf16.mxu0 0
    %2709 = vmatmul.mubr.bf16.gmra.mrb[0].mxu0 %v1218
    %v2710 = vpop.f32.mrb[0].mxu0
    %v2711 = vadd.f32 0.0, %v2710
    %v2712 = vpop.f32.mrb[0].mxu0
    %v2713 = vpop.f32.mrb[0].mxu0
    %v2714 = vadd.f32 0.0, %v2713
    %v2715 = vpop.f32.mrb[0].mxu0
    %2716 = vmatprep.mubr.bf16.mxu0 0
    %2717 = vmatmul.mubr.bf16.gmra.mrb[0].mxu0 %v2577
    %v2718 = vpop.f32.mrb[0].mxu0
    %v2719 = vadd.f32 0.0, %v2718
    %v2720 = vpop.f32.mrb[0].mxu0
    %v2721 = vpop.f32.mrb[0].mxu0
    %v2722 = vadd.f32 0.0, %v2721
    %v2723 = vpop.f32.mrb[0].mxu0
    %2724 = vdwg.mxu0
    %v2725 = vadd.f32 %v2543, %v2663
    %v2726 = vadd.f32 %v2544, %v2666
    %v2727 = vadd.f32 %v2545, %v2671
    %v2728 = vadd.f32 %v2546, %v2674
    %v2729 = vadd.f32 %v2547, %v2679
    %v2730 = vadd.f32 %v2548, %v2682
    %v2731 = vadd.f32 %v2549, %v2687
    %v2732 = vadd.f32 %v2550, %v2690
    %v2733 = vadd.f32 %v2551, %v2695
    %v2734 = vadd.f32 %v2552, %v2698
    %v2735 = vadd.f32 %v2553, %v2703
    %v2736 = vadd.f32 %v2554, %v2706
    %v2737 = vadd.f32 %v2555, %v2711
    %v2738 = vadd.f32 %v2556, %v2714
    %v2739 = vadd.f32 %v2557, %v2719
    %v2740 = vadd.f32 %v2558, %v2722
    %s2741 = scalar_lea.vmem [#allocation2], 512
    %v2742 = vld [vmem:[%s2741] sm:$0xf]
    %v2743 = vld [vmem:[%s2741 + $0x4] sm:$0xf]
    %v2744 = vld [vmem:[%s2741 + $0x8] sm:$0xf]
    %v2745 = vld [vmem:[%s2741 + $0xc] sm:$0xf]
    %v2746 = vld [vmem:[%s2741 + $0x10] sm:$0xf]
    %v2747 = vld [vmem:[%s2741 + $0x14] sm:$0xf]
    %v2748 = vld [vmem:[%s2741 + $0x18] sm:$0xf]
    %v2749 = vld [vmem:[%s2741 + $0x1c] sm:$0xf]
    %v2750 = vld [vmem:[%s2741 + $0x20] sm:$0xf]
    %v2751 = vld [vmem:[%s2741 + $0x24] sm:$0xf]
    %v2752 = vld [vmem:[%s2741 + $0x28] sm:$0xf]
    %v2753 = vld [vmem:[%s2741 + $0x2c] sm:$0xf]
    %v2754 = vld [vmem:[%s2741 + $0x30] sm:$0xf]
    %v2755 = vld [vmem:[%s2741 + $0x34] sm:$0xf]
    %v2756 = vld [vmem:[%s2741 + $0x38] sm:$0xf]
    %v2757 = vld [vmem:[%s2741 + $0x3c] sm:$0xf]
    %v2758 = vpack.c.b16 %v1196, %v2198
    %v2759 = vpack.c.b16 %v1196, %v2199
    %v2778 = vunpack.c.l.b16 %v2742
    %v2779 = vunpack.c.l.b16 %v2743
    %v2780 = vunpack.c.l.b16 %v2744
    %v2781 = vunpack.c.l.b16 %v2745
    %v2782 = vunpack.c.l.b16 %v2746
    %v2783 = vunpack.c.l.b16 %v2747
    %v2784 = vunpack.c.l.b16 %v2748
    %v2785 = vunpack.c.l.b16 %v2749
    %v2786 = vunpack.c.l.b16 %v2750
    %v2787 = vunpack.c.l.b16 %v2751
    %v2788 = vunpack.c.l.b16 %v2752
    %v2789 = vunpack.c.l.b16 %v2753
    %v2790 = vunpack.c.l.b16 %v2754
    %v2791 = vunpack.c.l.b16 %v2755
    %v2792 = vunpack.c.l.b16 %v2756
    %v2793 = vunpack.c.l.b16 %v2757
    %v2794 = vpack.c.b16 %v2779, %v2778
    %v2795 = vpack.c.b16 %v2781, %v2780
    %v2796 = vpack.c.b16 %v2783, %v2782
    %v2797 = vpack.c.b16 %v2785, %v2784
    %v2798 = vpack.c.b16 %v2787, %v2786
    %v2799 = vpack.c.b16 %v2789, %v2788
    %v2800 = vpack.c.b16 %v2791, %v2790
    %v2801 = vpack.c.b16 %v2793, %v2792
    %2810 = vmatprep.subr.bf16.mxu0 0
    %2811 = vmatpush1.bf16.msra.mxu0 %v2794
    %2812 = vmatprep.subr.bf16.mxu0 0
    %2813 = vmatpush1.bf16.msra.mxu0 %v2795
    %2814 = vmatprep.subr.bf16.mxu0 0
    %2815 = vmatpush1.bf16.msra.mxu0 %v2796
    %2816 = vmatprep.subr.bf16.mxu0 0
    %2817 = vmatpush1.bf16.msra.mxu0 %v2797
    %2818 = vmatprep.subr.bf16.mxu0 0
    %2819 = vmatpush1.bf16.msra.mxu0 %v2798
    %2820 = vmatprep.subr.bf16.mxu0 0
    %2821 = vmatpush1.bf16.msra.mxu0 %v2799
    %2822 = vmatprep.subr.bf16.mxu0 0
    %2823 = vmatpush1.bf16.msra.mxu0 %v2800
    %2824 = vmatprep.subr.bf16.mxu0 0
    %2825 = vmatpush1.bf16.msra.mxu0 %v2801
    %2826 = vmatprep.subr.bf16.mxu0 0
    %2827 = vmatpush1.bf16.msra.mxu0 0
    %2828 = vmatprep.subr.bf16.mxu0 0
    %2829 = vmatpush1.bf16.msra.mxu0 0
    %2830 = vmatprep.subr.bf16.mxu0 0
    %2831 = vmatpush1.bf16.msra.mxu0 0
    %2832 = vmatprep.subr.bf16.mxu0 0
    %2833 = vmatpush1.bf16.msra.mxu0 0
    %2834 = vmatprep.subr.bf16.mxu0 0
    %2835 = vmatpush1.bf16.msra.mxu0 0
    %2836 = vmatprep.subr.bf16.mxu0 0
    %2837 = vmatpush1.bf16.msra.mxu0 0
    %2838 = vmatprep.subr.bf16.mxu0 0
    %2839 = vmatpush1.bf16.msra.mxu0 0
    %2840 = vmatprep.subr.bf16.mxu0 0
    %2841 = vmatpush1.bf16.msra.mxu0 0
    %2842 = vmatprep.mubr.bf16.mxu0 0
    %2843 = vmatmul.mubr.bf16.gmra.mrb[0].mxu0 %v1607
    %v2844 = vpop.f32.mrb[0].mxu0
    %v2845 = vadd.f32 0.0, %v2844
    %v2846 = vpop.f32.mrb[0].mxu0
    %v2847 = vpop.f32.mrb[0].mxu0
    %v2848 = vadd.f32 0.0, %v2847
    %v2849 = vpop.f32.mrb[0].mxu0
    %2850 = vmatprep.mubr.bf16.mxu0 0
    %2851 = vmatmul.mubr.bf16.gmra.mrb[0].mxu0 %v1608
    %v2852 = vpop.f32.mrb[0].mxu0
    %v2853 = vadd.f32 0.0, %v2852
    %v2854 = vpop.f32.mrb[0].mxu0
    %v2855 = vpop.f32.mrb[0].mxu0
    %v2856 = vadd.f32 0.0, %v2855
    %v2857 = vpop.f32.mrb[0].mxu0
    %2858 = vmatprep.mubr.bf16.mxu0 0
    %2859 = vmatmul.mubr.bf16.gmra.mrb[0].mxu0 %v1609
    %v2860 = vpop.f32.mrb[0].mxu0
    %v2861 = vadd.f32 0.0, %v2860
    %v2862 = vpop.f32.mrb[0].mxu0
    %v2863 = vpop.f32.mrb[0].mxu0
    %v2864 = vadd.f32 0.0, %v2863
    %v2865 = vpop.f32.mrb[0].mxu0
    %2866 = vmatprep.mubr.bf16.mxu0 0
    %2867 = vmatmul.mubr.bf16.gmra.mrb[0].mxu0 %v2758
    %v2868 = vpop.f32.mrb[0].mxu0
    %v2869 = vadd.f32 0.0, %v2868
    %v2870 = vpop.f32.mrb[0].mxu0
    %v2871 = vpop.f32.mrb[0].mxu0
    %v2872 = vadd.f32 0.0, %v2871
    %v2873 = vpop.f32.mrb[0].mxu0
    %2874 = vmatprep.mubr.bf16.mxu0 0
    %2875 = vmatmul.mubr.bf16.gmra.mrb[0].mxu0 %v1611
    %v2876 = vpop.f32.mrb[0].mxu0
    %v2877 = vadd.f32 0.0, %v2876
    %v2878 = vpop.f32.mrb[0].mxu0
    %v2879 = vpop.f32.mrb[0].mxu0
    %v2880 = vadd.f32 0.0, %v2879
    %v2881 = vpop.f32.mrb[0].mxu0
    %2882 = vmatprep.mubr.bf16.mxu0 0
    %2883 = vmatmul.mubr.bf16.gmra.mrb[0].mxu0 %v1612
    %v2884 = vpop.f32.mrb[0].mxu0
    %v2885 = vadd.f32 0.0, %v2884
    %v2886 = vpop.f32.mrb[0].mxu0
    %v2887 = vpop.f32.mrb[0].mxu0
    %v2888 = vadd.f32 0.0, %v2887
    %v2889 = vpop.f32.mrb[0].mxu0
    %2890 = vmatprep.mubr.bf16.mxu0 0
    %2891 = vmatmul.mubr.bf16.gmra.mrb[0].mxu0 %v1613
    %v2892 = vpop.f32.mrb[0].mxu0
    %v2893 = vadd.f32 0.0, %v2892
    %v2894 = vpop.f32.mrb[0].mxu0
    %v2895 = vpop.f32.mrb[0].mxu0
    %v2896 = vadd.f32 0.0, %v2895
    %v2897 = vpop.f32.mrb[0].mxu0
    %2898 = vmatprep.mubr.bf16.mxu0 0
    %2899 = vmatmul.mubr.bf16.gmra.mrb[0].mxu0 %v2759
    %v2900 = vpop.f32.mrb[0].mxu0
    %v2901 = vadd.f32 0.0, %v2900
    %v2902 = vpop.f32.mrb[0].mxu0
    %v2903 = vpop.f32.mrb[0].mxu0
    %v2904 = vadd.f32 0.0, %v2903
    %v2905 = vpop.f32.mrb[0].mxu0
    %2906 = vdwg.mxu0
    %v2907 = vadd.f32 %v2725, %v2845
    %v2908 = vadd.f32 %v2726, %v2848
    %v2909 = vadd.f32 %v2727, %v2853
    %v2910 = vadd.f32 %v2728, %v2856
    %v2911 = vadd.f32 %v2729, %v2861
    %v2912 = vadd.f32 %v2730, %v2864
    %v2913 = vadd.f32 %v2731, %v2869
    %v2914 = vadd.f32 %v2732, %v2872
    %v2915 = vadd.f32 %v2733, %v2877
    %v2916 = vadd.f32 %v2734, %v2880
    %v2917 = vadd.f32 %v2735, %v2885
    %v2918 = vadd.f32 %v2736, %v2888
    %v2919 = vadd.f32 %v2737, %v2893
    %v2920 = vadd.f32 %v2738, %v2896
    %v2921 = vadd.f32 %v2739, %v2901
    %v2922 = vadd.f32 %v2740, %v2904
    %v2923 = vld [vmem:[%s4] sm:$0x1]
    %v2925 = vlaneseq
    %v2926 = vshrl.u32 %v2925, 7
    %v2927 = vsub.s32 0, %v2926
    %v2928 = vrot.slane %v2923, %v2927
    %v2930 = vadd.f32 %v2907, %v2928
    %v2931 = vadd.f32 %v2908, %v2928
    %v2932 = vadd.f32 %v2909, %v2928
    %v2933 = vadd.f32 %v2910, %v2928
    %v2934 = vadd.f32 %v2911, %v2928
    %v2935 = vadd.f32 %v2912, %v2928
    %v2936 = vadd.f32 %v2913, %v2928
    %v2937 = vadd.f32 %v2914, %v2928
    %v2938 = vadd.f32 %v2915, %v2928
    %v2939 = vadd.f32 %v2916, %v2928
    %v2940 = vadd.f32 %v2917, %v2928
    %v2941 = vadd.f32 %v2918, %v2928
    %v2942 = vadd.f32 %v2919, %v2928
    %v2943 = vadd.f32 %v2920, %v2928
    %v2944 = vadd.f32 %v2921, %v2928
    %v2945 = vadd.f32 %v2922, %v2928
    %v2946 = vmax.f32 %v2930, 0.0
    %v2947 = vmax.f32 %v2931, 0.0
    %v2948 = vmax.f32 %v2932, 0.0
    %v2949 = vmax.f32 %v2933, 0.0
    %v2950 = vmax.f32 %v2934, 0.0
    %v2951 = vmax.f32 %v2935, 0.0
    %v2952 = vmax.f32 %v2936, 0.0
    %v2953 = vmax.f32 %v2937, 0.0
    %v2954 = vmax.f32 %v2938, 0.0
    %v2955 = vmax.f32 %v2939, 0.0
    %v2956 = vmax.f32 %v2940, 0.0
    %v2957 = vmax.f32 %v2941, 0.0
    %v2958 = vmax.f32 %v2942, 0.0
    %v2959 = vmax.f32 %v2943, 0.0
    %v2960 = vmax.f32 %v2944, 0.0
    %v2961 = vmax.f32 %v2945, 0.0
    %v2962 = vmax.f32 %v2946, %v2947
    %v2963 = vmax.f32 %v2948, %v2949
    %v2964 = vmax.f32 %v2950, %v2951
    %v2965 = vmax.f32 %v2952, %v2953
    %v2966 = vmax.f32 %v2954, %v2955
    %v2967 = vmax.f32 %v2956, %v2957
    %v2968 = vmax.f32 %v2958, %v2959
    %v2969 = vmax.f32 %v2960, %v2961
    %v2978 = vrot.slane %v2962, 1
    %v2979 = vrot.slane %v2963, 1
    %v2980 = vrot.slane %v2964, 1
    %v2981 = vrot.slane %v2965, 1
    %v2982 = vrot.slane %v2966, 1
    %v2983 = vrot.slane %v2967, 1
    %v2984 = vrot.slane %v2968, 1
    %v2985 = vrot.slane %v2969, 1
    %v2994 = vmax.f32 %v2962, %v2978
    %v2995 = vmax.f32 %v2963, %v2979
    %v2996 = vmax.f32 %v2964, %v2980
    %v2997 = vmax.f32 %v2965, %v2981
    %v2998 = vmax.f32 %v2966, %v2982
    %v2999 = vmax.f32 %v2967, %v2983
    %v3000 = vmax.f32 %v2968, %v2984
    %v3001 = vmax.f32 %v2969, %v2985
    %v3010 = vrot.slane %v2994, 1
    %v3011 = vrot.slane %v2995, 1
    %v3012 = vrot.slane %v2996, 1
    %v3013 = vrot.slane %v2997, 1
    %v3014 = vrot.slane %v2998, 1
    %v3015 = vrot.slane %v2999, 1
    %v3016 = vrot.slane %v3000, 1
    %v3017 = vrot.slane %v3001, 1
    %v3026 = vrot.slane %v2994, 2
    %v3027 = vrot.slane %v2995, 2
    %v3028 = vrot.slane %v2996, 2
    %v3029 = vrot.slane %v2997, 2
    %v3030 = vrot.slane %v2998, 2
    %v3031 = vrot.slane %v2999, 2
    %v3032 = vrot.slane %v3000, 2
    %v3033 = vrot.slane %v3001, 2
    %v3042 = vrot.slane %v2994, 3
    %v3043 = vrot.slane %v2995, 3
    %v3044 = vrot.slane %v2996, 3
    %v3045 = vrot.slane %v2997, 3
    %v3046 = vrot.slane %v2998, 3
    %v3047 = vrot.slane %v2999, 3
    %v3048 = vrot.slane %v3000, 3
    %v3049 = vrot.slane %v3001, 3
    %vm3058 = vcmask 1040384
    %v3059 = vsel %vm3058, %v2994, %v3010
    %v3060 = vsel %vm3058, %v2995, %v3011
    %v3061 = vsel %vm3058, %v2996, %v3012
    %v3062 = vsel %vm3058, %v2997, %v3013
    %v3063 = vsel %vm3058, %v2998, %v3014
    %v3064 = vsel %vm3058, %v2999, %v3015
    %v3065 = vsel %vm3058, %v3000, %v3016
    %v3066 = vsel %vm3058, %v3001, %v3017
    %vm3067 = vcmask 1041408
    %v3068 = vsel %vm3067, %v3059, %v3026
    %v3069 = vsel %vm3067, %v3060, %v3027
    %v3070 = vsel %vm3067, %v3061, %v3028
    %v3071 = vsel %vm3067, %v3062, %v3029
    %v3072 = vsel %vm3067, %v3063, %v3030
    %v3073 = vsel %vm3067, %v3064, %v3031
    %v3074 = vsel %vm3067, %v3065, %v3032
    %v3075 = vsel %vm3067, %v3066, %v3033
    %vm3076 = vcmask 1042432
    %v3077 = vsel %vm3076, %v3068, %v3042
    %v3078 = vsel %vm3076, %v3069, %v3043
    %v3079 = vsel %vm3076, %v3070, %v3044
    %v3080 = vsel %vm3076, %v3071, %v3045
    %v3081 = vsel %vm3076, %v3072, %v3046
    %v3082 = vsel %vm3076, %v3073, %v3047
    %v3083 = vsel %vm3076, %v3074, %v3048
    %v3084 = vsel %vm3076, %v3075, %v3049
    %vm3085 = vcmask 1043456
    %v3086 = vsel %vm3085, %v3077, 0.0
    %v3087 = vsel %vm3085, %v3078, 0.0
    %v3088 = vsel %vm3085, %v3079, 0.0
    %v3089 = vsel %vm3085, %v3080, 0.0
    %v3090 = vsel %vm3085, %v3081, 0.0
    %v3091 = vsel %vm3085, %v3082, 0.0
    %v3092 = vsel %vm3085, %v3083, 0.0
    %v3093 = vsel %vm3085, %v3084, 0.0
    %v3094 = vpack.c.bf16 %v3086, %v3086
    %v3095 = vpack.c.bf16 %v3087, %v3087
    %v3096 = vpack.c.bf16 %v3088, %v3088
    %v3097 = vpack.c.bf16 %v3089, %v3089
    %v3098 = vpack.c.bf16 %v3090, %v3090
    %v3099 = vpack.c.bf16 %v3091, %v3091
    %v3100 = vpack.c.bf16 %v3092, %v3092
    %v3101 = vpack.c.bf16 %v3093, %v3093
    %v3103 = vshrl.u32 %v3094, 16
    %v3105 = vrot.slane %v3103, 7
    %v3106 = vshll.u32 %v3094, 16
    %v3108 = vor.u32 %v3105, %v3106
    %v3110 = vshrl.u32 %v3095, 16
    %v3112 = vrot.slane %v3110, 7
    %v3113 = vshll.u32 %v3095, 16
    %v3115 = vor.u32 %v3112, %v3113
    %v3117 = vshrl.u32 %v3096, 16
    %v3119 = vrot.slane %v3117, 7
    %v3120 = vshll.u32 %v3096, 16
    %v3122 = vor.u32 %v3119, %v3120
    %v3124 = vshrl.u32 %v3097, 16
    %v3126 = vrot.slane %v3124, 7
    %v3127 = vshll.u32 %v3097, 16
    %v3129 = vor.u32 %v3126, %v3127
    %v3131 = vshrl.u32 %v3098, 16
    %v3133 = vrot.slane %v3131, 7
    %v3134 = vshll.u32 %v3098, 16
    %v3136 = vor.u32 %v3133, %v3134
    %v3138 = vshrl.u32 %v3099, 16
    %v3140 = vrot.slane %v3138, 7
    %v3141 = vshll.u32 %v3099, 16
    %v3143 = vor.u32 %v3140, %v3141
    %v3145 = vshrl.u32 %v3100, 16
    %v3147 = vrot.slane %v3145, 7
    %v3148 = vshll.u32 %v3100, 16
    %v3150 = vor.u32 %v3147, %v3148
    %v3152 = vshrl.u32 %v3101, 16
    %v3154 = vrot.slane %v3152, 7
    %v3155 = vshll.u32 %v3101, 16
    %v3157 = vor.u32 %v3154, %v3155
    %v3166 = vsel %vm1064, 0, %v3108
    %v3167 = vsel %vm1064, 0, %v3115
    %v3168 = vsel %vm1064, 0, %v3122
    %v3169 = vsel %vm1064, 0, %v3129
    %v3170 = vsel %vm1064, 0, %v3136
    %v3171 = vsel %vm1064, 0, %v3143
    %v3172 = vsel %vm1064, 0, %v3150
    %v3173 = vsel %vm1064, 0, %v3157
    %v3174 = vrot.slane %v3106, 1
    %v3175 = vor.u32 %v3103, %v3174
    %v3176 = vrot.slane %v3113, 1
    %v3177 = vor.u32 %v3110, %v3176
    %v3178 = vrot.slane %v3120, 1
    %v3179 = vor.u32 %v3117, %v3178
    %v3180 = vrot.slane %v3127, 1
    %v3181 = vor.u32 %v3124, %v3180
    %v3182 = vrot.slane %v3134, 1
    %v3183 = vor.u32 %v3131, %v3182
    %v3184 = vrot.slane %v3141, 1
    %v3185 = vor.u32 %v3138, %v3184
    %v3186 = vrot.slane %v3148, 1
    %v3187 = vor.u32 %v3145, %v3186
    %v3188 = vrot.slane %v3155, 1
    %v3189 = vor.u32 %v3152, %v3188
    %v3198 = vsel %vm1131, %v3175, 0
    %v3199 = vsel %vm1131, %v3177, 0
    %v3200 = vsel %vm1131, %v3179, 0
    %v3201 = vsel %vm1131, %v3181, 0
    %v3202 = vsel %vm1131, %v3183, 0
    %v3203 = vsel %vm1131, %v3185, 0
    %v3204 = vsel %vm1131, %v3187, 0
    %v3205 = vsel %vm1131, %v3189, 0
    %v3206 = vld [vmem:[#allocation5] sm:$0xf]
    %v3207 = vld [vmem:[#allocation5 + $0x4] sm:$0xf]
    %v3208 = vld [vmem:[#allocation5 + $0x8] sm:$0xf]
    %v3209 = vld [vmem:[#allocation5 + $0xc] sm:$0xf]
    %v3210 = vld [vmem:[#allocation5 + $0x10] sm:$0xf]
    %v3211 = vld [vmem:[#allocation5 + $0x14] sm:$0xf]
    %v3212 = vld [vmem:[#allocation5 + $0x18] sm:$0xf]
    %v3213 = vld [vmem:[#allocation5 + $0x1c] sm:$0xf]
    %v3214 = vld [vmem:[#allocation5 + $0x20] sm:$0xf]
    %v3215 = vld [vmem:[#allocation5 + $0x24] sm:$0xf]
    %v3216 = vld [vmem:[#allocation5 + $0x28] sm:$0xf]
    %v3217 = vld [vmem:[#allocation5 + $0x2c] sm:$0xf]
    %v3218 = vld [vmem:[#allocation5 + $0x30] sm:$0xf]
    %v3219 = vld [vmem:[#allocation5 + $0x34] sm:$0xf]
    %v3220 = vld [vmem:[#allocation5 + $0x38] sm:$0xf]
    %v3221 = vld [vmem:[#allocation5 + $0x3c] sm:$0xf]
    %s3222 = scalar_lea.vmem [#allocation5], 64
    %v3223 = vld [vmem:[%s3222] sm:$0xf]
    %v3224 = vld [vmem:[%s3222 + $0x4] sm:$0xf]
    %v3225 = vld [vmem:[%s3222 + $0x8] sm:$0xf]
    %v3226 = vld [vmem:[%s3222 + $0xc] sm:$0xf]
    %v3227 = vld [vmem:[%s3222 + $0x10] sm:$0xf]
    %v3228 = vld [vmem:[%s3222 + $0x14] sm:$0xf]
    %v3229 = vld [vmem:[%s3222 + $0x18] sm:$0xf]
    %v3230 = vld [vmem:[%s3222 + $0x1c] sm:$0xf]
    %v3231 = vld [vmem:[%s3222 + $0x20] sm:$0xf]
    %v3232 = vld [vmem:[%s3222 + $0x24] sm:$0xf]
    %v3233 = vld [vmem:[%s3222 + $0x28] sm:$0xf]
    %v3234 = vld [vmem:[%s3222 + $0x2c] sm:$0xf]
    %v3235 = vld [vmem:[%s3222 + $0x30] sm:$0xf]
    %v3236 = vld [vmem:[%s3222 + $0x34] sm:$0xf]
    %v3237 = vld [vmem:[%s3222 + $0x38] sm:$0xf]
    %v3238 = vld [vmem:[%s3222 + $0x3c] sm:$0xf]
    %v3245 = vunpack.c.l.b16 %v3094
    %v3246 = vunpack.c.l.b16 %v3095
    %v3247 = vunpack.c.l.b16 %v3096
    %v3248 = vunpack.c.l.b16 %v3098
    %v3249 = vunpack.c.l.b16 %v3099
    %v3250 = vunpack.c.l.b16 %v3100
    %v3251 = vpack.c.b16 %v3245, %v1196
    %v3252 = vpack.c.b16 %v3247, %v3246
    %v3253 = vpack.c.b16 %v3248, %v1196
    %v3254 = vpack.c.b16 %v3250, %v3249
    %v3275 = vunpack.c.l.b16 %v3223
    %v3276 = vunpack.c.l.b16 %v3224
    %v3277 = vunpack.c.l.b16 %v3225
    %v3278 = vunpack.c.l.b16 %v3226
    %v3279 = vunpack.c.l.b16 %v3227
    %v3280 = vunpack.c.l.b16 %v3228
    %v3281 = vunpack.c.l.b16 %v3229
    %v3282 = vunpack.c.l.b16 %v3230
    %v3283 = vunpack.c.l.b16 %v3231
    %v3284 = vunpack.c.l.b16 %v3232
    %v3285 = vunpack.c.l.b16 %v3233
    %v3286 = vunpack.c.l.b16 %v3234
    %v3287 = vunpack.c.l.b16 %v3235
    %v3288 = vunpack.c.l.b16 %v3236
    %v3289 = vunpack.c.l.b16 %v3237
    %v3290 = vunpack.c.l.b16 %v3238
    %v3291 = vpack.c.b16 %v3276, %v3275
    %v3292 = vpack.c.b16 %v3278, %v3277
    %v3293 = vpack.c.b16 %v3280, %v3279
    %v3294 = vpack.c.b16 %v3282, %v3281
    %v3295 = vpack.c.b16 %v3284, %v3283
    %v3296 = vpack.c.b16 %v3286, %v3285
    %v3297 = vpack.c.b16 %v3288, %v3287
    %v3298 = vpack.c.b16 %v3290, %v3289
    %3307 = vmatprep.subr.bf16.mxu0 0
    %3308 = vmatpush1.bf16.msra.mxu0 %v3291
    %3309 = vmatprep.subr.bf16.mxu0 0
    %3310 = vmatpush1.bf16.msra.mxu0 %v3292
    %3311 = vmatprep.subr.bf16.mxu0 0
    %3312 = vmatpush1.bf16.msra.mxu0 %v3293
    %3313 = vmatprep.subr.bf16.mxu0 0
    %3314 = vmatpush1.bf16.msra.mxu0 %v3294
    %3315 = vmatprep.subr.bf16.mxu0 0
    %3316 = vmatpush1.bf16.msra.mxu0 %v3295
    %3317 = vmatprep.subr.bf16.mxu0 0
    %3318 = vmatpush1.bf16.msra.mxu0 %v3296
    %3319 = vmatprep.subr.bf16.mxu0 0
    %3320 = vmatpush1.bf16.msra.mxu0 %v3297
    %3321 = vmatprep.subr.bf16.mxu0 0
    %3322 = vmatpush1.bf16.msra.mxu0 %v3298
    %3323 = vmatprep.subr.bf16.mxu0 0
    %3324 = vmatpush1.bf16.msra.mxu0 0
    %3325 = vmatprep.subr.bf16.mxu0 0
    %3326 = vmatpush1.bf16.msra.mxu0 0
    %3327 = vmatprep.subr.bf16.mxu0 0
    %3328 = vmatpush1.bf16.msra.mxu0 0
    %3329 = vmatprep.subr.bf16.mxu0 0
    %3330 = vmatpush1.bf16.msra.mxu0 0
    %3331 = vmatprep.subr.bf16.mxu0 0
    %3332 = vmatpush1.bf16.msra.mxu0 0
    %3333 = vmatprep.subr.bf16.mxu0 0
    %3334 = vmatpush1.bf16.msra.mxu0 0
    %3335 = vmatprep.subr.bf16.mxu0 0
    %3336 = vmatpush1.bf16.msra.mxu0 0
    %3337 = vmatprep.subr.bf16.mxu0 0
    %3338 = vmatpush1.bf16.msra.mxu0 0
    %3339 = vmatprep.mubr.bf16.mxu0 0
    %3340 = vmatmul.mubr.bf16.gmra.mrb[0].mxu0 %v3251
    %v3341 = vpop.f32.mrb[0].mxu0
    %v3342 = vadd.f32 0.0, %v3341
    %v3343 = vpop.f32.mrb[0].mxu0
    %v3344 = vpop.f32.mrb[0].mxu0
    %v3345 = vadd.f32 0.0, %v3344
    %v3346 = vpop.f32.mrb[0].mxu0
    %3347 = vmatprep.mubr.bf16.mxu0 0
    %3348 = vmatmul.mubr.bf16.gmra.mrb[0].mxu0 %v3252
    %v3349 = vpop.f32.mrb[0].mxu0
    %v3350 = vadd.f32 0.0, %v3349
    %v3351 = vpop.f32.mrb[0].mxu0
    %v3352 = vpop.f32.mrb[0].mxu0
    %v3353 = vadd.f32 0.0, %v3352
    %v3354 = vpop.f32.mrb[0].mxu0
    %3355 = vmatprep.mubr.bf16.mxu0 0
    %3356 = vmatmul.mubr.bf16.gmra.mrb[0].mxu0 %v3253
    %v3357 = vpop.f32.mrb[0].mxu0
    %v3358 = vadd.f32 0.0, %v3357
    %v3359 = vpop.f32.mrb[0].mxu0
    %v3360 = vpop.f32.mrb[0].mxu0
    %v3361 = vadd.f32 0.0, %v3360
    %v3362 = vpop.f32.mrb[0].mxu0
    %3363 = vmatprep.mubr.bf16.mxu0 0
    %3364 = vmatmul.mubr.bf16.gmra.mrb[0].mxu0 %v3254
    %v3365 = vpop.f32.mrb[0].mxu0
    %v3366 = vadd.f32 0.0, %v3365
    %v3367 = vpop.f32.mrb[0].mxu0
    %v3368 = vpop.f32.mrb[0].mxu0
    %v3369 = vadd.f32 0.0, %v3368
    %v3370 = vpop.f32.mrb[0].mxu0
    %3371 = vdwg.mxu0
    %v3378 = vunpack.c.l.b16 %v3166
    %v3379 = vunpack.c.l.b16 %v3167
    %v3380 = vunpack.c.l.b16 %v3168
    %v3381 = vunpack.c.l.b16 %v3170
    %v3382 = vunpack.c.l.b16 %v3171
    %v3383 = vunpack.c.l.b16 %v3172
    %v3384 = vpack.c.b16 %v3378, %v1196
    %v3385 = vpack.c.b16 %v3380, %v3379
    %v3386 = vpack.c.b16 %v3381, %v1196
    %v3387 = vpack.c.b16 %v3383, %v3382
    %v3408 = vunpack.c.l.b16 %v3206
    %v3409 = vunpack.c.l.b16 %v3207
    %v3410 = vunpack.c.l.b16 %v3208
    %v3411 = vunpack.c.l.b16 %v3209
    %v3412 = vunpack.c.l.b16 %v3210
    %v3413 = vunpack.c.l.b16 %v3211
    %v3414 = vunpack.c.l.b16 %v3212
    %v3415 = vunpack.c.l.b16 %v3213
    %v3416 = vunpack.c.l.b16 %v3214
    %v3417 = vunpack.c.l.b16 %v3215
    %v3418 = vunpack.c.l.b16 %v3216
    %v3419 = vunpack.c.l.b16 %v3217
    %v3420 = vunpack.c.l.b16 %v3218
    %v3421 = vunpack.c.l.b16 %v3219
    %v3422 = vunpack.c.l.b16 %v3220
    %v3423 = vunpack.c.l.b16 %v3221
    %v3424 = vpack.c.b16 %v3409, %v3408
    %v3425 = vpack.c.b16 %v3411, %v3410
    %v3426 = vpack.c.b16 %v3413, %v3412
    %v3427 = vpack.c.b16 %v3415, %v3414
    %v3428 = vpack.c.b16 %v3417, %v3416
    %v3429 = vpack.c.b16 %v3419, %v3418
    %v3430 = vpack.c.b16 %v3421, %v3420
    %v3431 = vpack.c.b16 %v3423, %v3422
    %3440 = vmatprep.subr.bf16.mxu0 0
    %3441 = vmatpush1.bf16.msra.mxu0 %v3424
    %3442 = vmatprep.subr.bf16.mxu0 0
    %3443 = vmatpush1.bf16.msra.mxu0 %v3425
    %3444 = vmatprep.subr.bf16.mxu0 0
    %3445 = vmatpush1.bf16.msra.mxu0 %v3426
    %3446 = vmatprep.subr.bf16.mxu0 0
    %3447 = vmatpush1.bf16.msra.mxu0 %v3427
    %3448 = vmatprep.subr.bf16.mxu0 0
    %3449 = vmatpush1.bf16.msra.mxu0 %v3428
    %3450 = vmatprep.subr.bf16.mxu0 0
    %3451 = vmatpush1.bf16.msra.mxu0 %v3429
    %3452 = vmatprep.subr.bf16.mxu0 0
    %3453 = vmatpush1.bf16.msra.mxu0 %v3430
    %3454 = vmatprep.subr.bf16.mxu0 0
    %3455 = vmatpush1.bf16.msra.mxu0 %v3431
    %3456 = vmatprep.subr.bf16.mxu0 0
    %3457 = vmatpush1.bf16.msra.mxu0 0
    %3458 = vmatprep.subr.bf16.mxu0 0
    %3459 = vmatpush1.bf16.msra.mxu0 0
    %3460 = vmatprep.subr.bf16.mxu0 0
    %3461 = vmatpush1.bf16.msra.mxu0 0
    %3462 = vmatprep.subr.bf16.mxu0 0
    %3463 = vmatpush1.bf16.msra.mxu0 0
    %3464 = vmatprep.subr.bf16.mxu0 0
    %3465 = vmatpush1.bf16.msra.mxu0 0
    %3466 = vmatprep.subr.bf16.mxu0 0
    %3467 = vmatpush1.bf16.msra.mxu0 0
    %3468 = vmatprep.subr.bf16.mxu0 0
    %3469 = vmatpush1.bf16.msra.mxu0 0
    %3470 = vmatprep.subr.bf16.mxu0 0
    %3471 = vmatpush1.bf16.msra.mxu0 0
    %3472 = vmatprep.mubr.bf16.mxu0 0
    %3473 = vmatmul.mubr.bf16.gmra.mrb[0].mxu0 %v3384
    %v3474 = vpop.f32.mrb[0].mxu0
    %v3475 = vadd.f32 %v3342, %v3474
    %v3476 = vpop.f32.mrb[0].mxu0
    %v3477 = vpop.f32.mrb[0].mxu0
    %v3478 = vadd.f32 %v3345, %v3477
    %v3479 = vpop.f32.mrb[0].mxu0
    %3480 = vmatprep.mubr.bf16.mxu0 0
    %3481 = vmatmul.mubr.bf16.gmra.mrb[0].mxu0 %v3385
    %v3482 = vpop.f32.mrb[0].mxu0
    %v3483 = vadd.f32 %v3350, %v3482
    %v3484 = vpop.f32.mrb[0].mxu0
    %v3485 = vpop.f32.mrb[0].mxu0
    %v3486 = vadd.f32 %v3353, %v3485
    %v3487 = vpop.f32.mrb[0].mxu0
    %3488 = vmatprep.mubr.bf16.mxu0 0
    %3489 = vmatmul.mubr.bf16.gmra.mrb[0].mxu0 %v3386
    %v3490 = vpop.f32.mrb[0].mxu0
    %v3491 = vadd.f32 %v3358, %v3490
    %v3492 = vpop.f32.mrb[0].mxu0
    %v3493 = vpop.f32.mrb[0].mxu0
    %v3494 = vadd.f32 %v3361, %v3493
    %v3495 = vpop.f32.mrb[0].mxu0
    %3496 = vmatprep.mubr.bf16.mxu0 0
    %3497 = vmatmul.mubr.bf16.gmra.mrb[0].mxu0 %v3387
    %v3498 = vpop.f32.mrb[0].mxu0
    %v3499 = vadd.f32 %v3366, %v3498
    %v3500 = vpop.f32.mrb[0].mxu0
    %v3501 = vpop.f32.mrb[0].mxu0
    %v3502 = vadd.f32 %v3369, %v3501
    %v3503 = vpop.f32.mrb[0].mxu0
    %3504 = vdwg.mxu0
    %s3505 = scalar_lea.vmem [#allocation5], 128
    %v3506 = vld [vmem:[%s3505] sm:$0xf]
    %v3507 = vld [vmem:[%s3505 + $0x4] sm:$0xf]
    %v3508 = vld [vmem:[%s3505 + $0x8] sm:$0xf]
    %v3509 = vld [vmem:[%s3505 + $0xc] sm:$0xf]
    %v3510 = vld [vmem:[%s3505 + $0x10] sm:$0xf]
    %v3511 = vld [vmem:[%s3505 + $0x14] sm:$0xf]
    %v3512 = vld [vmem:[%s3505 + $0x18] sm:$0xf]
    %v3513 = vld [vmem:[%s3505 + $0x1c] sm:$0xf]
    %v3514 = vld [vmem:[%s3505 + $0x20] sm:$0xf]
    %v3515 = vld [vmem:[%s3505 + $0x24] sm:$0xf]
    %v3516 = vld [vmem:[%s3505 + $0x28] sm:$0xf]
    %v3517 = vld [vmem:[%s3505 + $0x2c] sm:$0xf]
    %v3518 = vld [vmem:[%s3505 + $0x30] sm:$0xf]
    %v3519 = vld [vmem:[%s3505 + $0x34] sm:$0xf]
    %v3520 = vld [vmem:[%s3505 + $0x38] sm:$0xf]
    %v3521 = vld [vmem:[%s3505 + $0x3c] sm:$0xf]
    %v3528 = vunpack.c.l.b16 %v3198
    %v3529 = vunpack.c.l.b16 %v3199
    %v3530 = vunpack.c.l.b16 %v3200
    %v3531 = vunpack.c.l.b16 %v3202
    %v3532 = vunpack.c.l.b16 %v3203
    %v3533 = vunpack.c.l.b16 %v3204
    %v3534 = vpack.c.b16 %v3528, %v1196
    %v3535 = vpack.c.b16 %v3530, %v3529
    %v3536 = vpack.c.b16 %v3531, %v1196
    %v3537 = vpack.c.b16 %v3533, %v3532
    %v3558 = vunpack.c.l.b16 %v3506
    %v3559 = vunpack.c.l.b16 %v3507
    %v3560 = vunpack.c.l.b16 %v3508
    %v3561 = vunpack.c.l.b16 %v3509
    %v3562 = vunpack.c.l.b16 %v3510
    %v3563 = vunpack.c.l.b16 %v3511
    %v3564 = vunpack.c.l.b16 %v3512
    %v3565 = vunpack.c.l.b16 %v3513
    %v3566 = vunpack.c.l.b16 %v3514
    %v3567 = vunpack.c.l.b16 %v3515
    %v3568 = vunpack.c.l.b16 %v3516
    %v3569 = vunpack.c.l.b16 %v3517
    %v3570 = vunpack.c.l.b16 %v3518
    %v3571 = vunpack.c.l.b16 %v3519
    %v3572 = vunpack.c.l.b16 %v3520
    %v3573 = vunpack.c.l.b16 %v3521
    %v3574 = vpack.c.b16 %v3559, %v3558
    %v3575 = vpack.c.b16 %v3561, %v3560
    %v3576 = vpack.c.b16 %v3563, %v3562
    %v3577 = vpack.c.b16 %v3565, %v3564
    %v3578 = vpack.c.b16 %v3567, %v3566
    %v3579 = vpack.c.b16 %v3569, %v3568
    %v3580 = vpack.c.b16 %v3571, %v3570
    %v3581 = vpack.c.b16 %v3573, %v3572
    %3590 = vmatprep.subr.bf16.mxu0 0
    %3591 = vmatpush1.bf16.msra.mxu0 %v3574
    %3592 = vmatprep.subr.bf16.mxu0 0
    %3593 = vmatpush1.bf16.msra.mxu0 %v3575
    %3594 = vmatprep.subr.bf16.mxu0 0
    %3595 = vmatpush1.bf16.msra.mxu0 %v3576
    %3596 = vmatprep.subr.bf16.mxu0 0
    %3597 = vmatpush1.bf16.msra.mxu0 %v3577
    %3598 = vmatprep.subr.bf16.mxu0 0
    %3599 = vmatpush1.bf16.msra.mxu0 %v3578
    %3600 = vmatprep.subr.bf16.mxu0 0
    %3601 = vmatpush1.bf16.msra.mxu0 %v3579
    %3602 = vmatprep.subr.bf16.mxu0 0
    %3603 = vmatpush1.bf16.msra.mxu0 %v3580
    %3604 = vmatprep.subr.bf16.mxu0 0
    %3605 = vmatpush1.bf16.msra.mxu0 %v3581
    %3606 = vmatprep.subr.bf16.mxu0 0
    %3607 = vmatpush1.bf16.msra.mxu0 0
    %3608 = vmatprep.subr.bf16.mxu0 0
    %3609 = vmatpush1.bf16.msra.mxu0 0
    %3610 = vmatprep.subr.bf16.mxu0 0
    %3611 = vmatpush1.bf16.msra.mxu0 0
    %3612 = vmatprep.subr.bf16.mxu0 0
    %3613 = vmatpush1.bf16.msra.mxu0 0
    %3614 = vmatprep.subr.bf16.mxu0 0
    %3615 = vmatpush1.bf16.msra.mxu0 0
    %3616 = vmatprep.subr.bf16.mxu0 0
    %3617 = vmatpush1.bf16.msra.mxu0 0
    %3618 = vmatprep.subr.bf16.mxu0 0
    %3619 = vmatpush1.bf16.msra.mxu0 0
    %3620 = vmatprep.subr.bf16.mxu0 0
    %3621 = vmatpush1.bf16.msra.mxu0 0
    %3622 = vmatprep.mubr.bf16.mxu0 0
    %3623 = vmatmul.mubr.bf16.gmra.mrb[0].mxu0 %v3534
    %v3624 = vpop.f32.mrb[0].mxu0
    %v3625 = vadd.f32 0.0, %v3624
    %v3626 = vpop.f32.mrb[0].mxu0
    %v3627 = vpop.f32.mrb[0].mxu0
    %v3628 = vadd.f32 0.0, %v3627
    %v3629 = vpop.f32.mrb[0].mxu0
    %3630 = vmatprep.mubr.bf16.mxu0 0
    %3631 = vmatmul.mubr.bf16.gmra.mrb[0].mxu0 %v3535
    %v3632 = vpop.f32.mrb[0].mxu0
    %v3633 = vadd.f32 0.0, %v3632
    %v3634 = vpop.f32.mrb[0].mxu0
    %v3635 = vpop.f32.mrb[0].mxu0
    %v3636 = vadd.f32 0.0, %v3635
    %v3637 = vpop.f32.mrb[0].mxu0
    %3638 = vmatprep.mubr.bf16.mxu0 0
    %3639 = vmatmul.mubr.bf16.gmra.mrb[0].mxu0 %v3536
    %v3640 = vpop.f32.mrb[0].mxu0
    %v3641 = vadd.f32 0.0, %v3640
    %v3642 = vpop.f32.mrb[0].mxu0
    %v3643 = vpop.f32.mrb[0].mxu0
    %v3644 = vadd.f32 0.0, %v3643
    %v3645 = vpop.f32.mrb[0].mxu0
    %3646 = vmatprep.mubr.bf16.mxu0 0
    %3647 = vmatmul.mubr.bf16.gmra.mrb[0].mxu0 %v3537
    %v3648 = vpop.f32.mrb[0].mxu0
    %v3649 = vadd.f32 0.0, %v3648
    %v3650 = vpop.f32.mrb[0].mxu0
    %v3651 = vpop.f32.mrb[0].mxu0
    %v3652 = vadd.f32 0.0, %v3651
    %v3653 = vpop.f32.mrb[0].mxu0
    %3654 = vdwg.mxu0
    %v3655 = vadd.f32 %v3475, %v3625
    %v3656 = vadd.f32 %v3478, %v3628
    %v3657 = vadd.f32 %v3483, %v3633
    %v3658 = vadd.f32 %v3486, %v3636
    %v3659 = vadd.f32 %v3491, %v3641
    %v3660 = vadd.f32 %v3494, %v3644
    %v3661 = vadd.f32 %v3499, %v3649
    %v3662 = vadd.f32 %v3502, %v3652
    %s3663 = scalar_lea.vmem [#allocation5], 192
    %v3664 = vld [vmem:[%s3663] sm:$0xf]
    %v3665 = vld [vmem:[%s3663 + $0x4] sm:$0xf]
    %v3666 = vld [vmem:[%s3663 + $0x8] sm:$0xf]
    %v3667 = vld [vmem:[%s3663 + $0xc] sm:$0xf]
    %v3668 = vld [vmem:[%s3663 + $0x10] sm:$0xf]
    %v3669 = vld [vmem:[%s3663 + $0x14] sm:$0xf]
    %v3670 = vld [vmem:[%s3663 + $0x18] sm:$0xf]
    %v3671 = vld [vmem:[%s3663 + $0x1c] sm:$0xf]
    %v3672 = vld [vmem:[%s3663 + $0x20] sm:$0xf]
    %v3673 = vld [vmem:[%s3663 + $0x24] sm:$0xf]
    %v3674 = vld [vmem:[%s3663 + $0x28] sm:$0xf]
    %v3675 = vld [vmem:[%s3663 + $0x2c] sm:$0xf]
    %v3676 = vld [vmem:[%s3663 + $0x30] sm:$0xf]
    %v3677 = vld [vmem:[%s3663 + $0x34] sm:$0xf]
    %v3678 = vld [vmem:[%s3663 + $0x38] sm:$0xf]
    %v3679 = vld [vmem:[%s3663 + $0x3c] sm:$0xf]
    %v3682 = vunpack.c.l.b16 %v3169
    %v3683 = vunpack.c.l.b16 %v3173
    %v3684 = vpack.c.b16 %v3379, %v3378
    %v3685 = vpack.c.b16 %v3682, %v3380
    %v3686 = vpack.c.b16 %v3382, %v3381
    %v3687 = vpack.c.b16 %v3683, %v3383
    %v3708 = vunpack.c.l.b16 %v3664
    %v3709 = vunpack.c.l.b16 %v3665
    %v3710 = vunpack.c.l.b16 %v3666
    %v3711 = vunpack.c.l.b16 %v3667
    %v3712 = vunpack.c.l.b16 %v3668
    %v3713 = vunpack.c.l.b16 %v3669
    %v3714 = vunpack.c.l.b16 %v3670
    %v3715 = vunpack.c.l.b16 %v3671
    %v3716 = vunpack.c.l.b16 %v3672
    %v3717 = vunpack.c.l.b16 %v3673
    %v3718 = vunpack.c.l.b16 %v3674
    %v3719 = vunpack.c.l.b16 %v3675
    %v3720 = vunpack.c.l.b16 %v3676
    %v3721 = vunpack.c.l.b16 %v3677
    %v3722 = vunpack.c.l.b16 %v3678
    %v3723 = vunpack.c.l.b16 %v3679
    %v3724 = vpack.c.b16 %v3709, %v3708
    %v3725 = vpack.c.b16 %v3711, %v3710
    %v3726 = vpack.c.b16 %v3713, %v3712
    %v3727 = vpack.c.b16 %v3715, %v3714
    %v3728 = vpack.c.b16 %v3717, %v3716
    %v3729 = vpack.c.b16 %v3719, %v3718
    %v3730 = vpack.c.b16 %v3721, %v3720
    %v3731 = vpack.c.b16 %v3723, %v3722
    %3740 = vmatprep.subr.bf16.mxu0 0
    %3741 = vmatpush1.bf16.msra.mxu0 %v3724
    %3742 = vmatprep.subr.bf16.mxu0 0
    %3743 = vmatpush1.bf16.msra.mxu0 %v3725
    %3744 = vmatprep.subr.bf16.mxu0 0
    %3745 = vmatpush1.bf16.msra.mxu0 %v3726
    %3746 = vmatprep.subr.bf16.mxu0 0
    %3747 = vmatpush1.bf16.msra.mxu0 %v3727
    %3748 = vmatprep.subr.bf16.mxu0 0
    %3749 = vmatpush1.bf16.msra.mxu0 %v3728
    %3750 = vmatprep.subr.bf16.mxu0 0
    %3751 = vmatpush1.bf16.msra.mxu0 %v3729
    %3752 = vmatprep.subr.bf16.mxu0 0
    %3753 = vmatpush1.bf16.msra.mxu0 %v3730
    %3754 = vmatprep.subr.bf16.mxu0 0
    %3755 = vmatpush1.bf16.msra.mxu0 %v3731
    %3756 = vmatprep.subr.bf16.mxu0 0
    %3757 = vmatpush1.bf16.msra.mxu0 0
    %3758 = vmatprep.subr.bf16.mxu0 0
    %3759 = vmatpush1.bf16.msra.mxu0 0
    %3760 = vmatprep.subr.bf16.mxu0 0
    %3761 = vmatpush1.bf16.msra.mxu0 0
    %3762 = vmatprep.subr.bf16.mxu0 0
    %3763 = vmatpush1.bf16.msra.mxu0 0
    %3764 = vmatprep.subr.bf16.mxu0 0
    %3765 = vmatpush1.bf16.msra.mxu0 0
    %3766 = vmatprep.subr.bf16.mxu0 0
    %3767 = vmatpush1.bf16.msra.mxu0 0
    %3768 = vmatprep.subr.bf16.mxu0 0
    %3769 = vmatpush1.bf16.msra.mxu0 0
    %3770 = vmatprep.subr.bf16.mxu0 0
    %3771 = vmatpush1.bf16.msra.mxu0 0
    %3772 = vmatprep.mubr.bf16.mxu0 0
    %3773 = vmatmul.mubr.bf16.gmra.mrb[0].mxu0 %v3684
    %v3774 = vpop.f32.mrb[0].mxu0
    %v3775 = vadd.f32 0.0, %v3774
    %v3776 = vpop.f32.mrb[0].mxu0
    %v3777 = vpop.f32.mrb[0].mxu0
    %v3778 = vadd.f32 0.0, %v3777
    %v3779 = vpop.f32.mrb[0].mxu0
    %3780 = vmatprep.mubr.bf16.mxu0 0
    %3781 = vmatmul.mubr.bf16.gmra.mrb[0].mxu0 %v3685
    %v3782 = vpop.f32.mrb[0].mxu0
    %v3783 = vadd.f32 0.0, %v3782
    %v3784 = vpop.f32.mrb[0].mxu0
    %v3785 = vpop.f32.mrb[0].mxu0
    %v3786 = vadd.f32 0.0, %v3785
    %v3787 = vpop.f32.mrb[0].mxu0
    %3788 = vmatprep.mubr.bf16.mxu0 0
    %3789 = vmatmul.mubr.bf16.gmra.mrb[0].mxu0 %v3686
    %v3790 = vpop.f32.mrb[0].mxu0
    %v3791 = vadd.f32 0.0, %v3790
    %v3792 = vpop.f32.mrb[0].mxu0
    %v3793 = vpop.f32.mrb[0].mxu0
    %v3794 = vadd.f32 0.0, %v3793
    %v3795 = vpop.f32.mrb[0].mxu0
    %3796 = vmatprep.mubr.bf16.mxu0 0
    %3797 = vmatmul.mubr.bf16.gmra.mrb[0].mxu0 %v3687
    %v3798 = vpop.f32.mrb[0].mxu0
    %v3799 = vadd.f32 0.0, %v3798
    %v3800 = vpop.f32.mrb[0].mxu0
    %v3801 = vpop.f32.mrb[0].mxu0
    %v3802 = vadd.f32 0.0, %v3801
    %v3803 = vpop.f32.mrb[0].mxu0
    %3804 = vdwg.mxu0
    %v3805 = vadd.f32 %v3655, %v3775
    %v3806 = vadd.f32 %v3656, %v3778
    %v3807 = vadd.f32 %v3657, %v3783
    %v3808 = vadd.f32 %v3658, %v3786
    %v3809 = vadd.f32 %v3659, %v3791
    %v3810 = vadd.f32 %v3660, %v3794
    %v3811 = vadd.f32 %v3661, %v3799
    %v3812 = vadd.f32 %v3662, %v3802
    %s3813 = scalar_lea.vmem [#allocation5], 256
    %v3814 = vld [vmem:[%s3813] sm:$0xf]
    %v3815 = vld [vmem:[%s3813 + $0x4] sm:$0xf]
    %v3816 = vld [vmem:[%s3813 + $0x8] sm:$0xf]
    %v3817 = vld [vmem:[%s3813 + $0xc] sm:$0xf]
    %v3818 = vld [vmem:[%s3813 + $0x10] sm:$0xf]
    %v3819 = vld [vmem:[%s3813 + $0x14] sm:$0xf]
    %v3820 = vld [vmem:[%s3813 + $0x18] sm:$0xf]
    %v3821 = vld [vmem:[%s3813 + $0x1c] sm:$0xf]
    %v3822 = vld [vmem:[%s3813 + $0x20] sm:$0xf]
    %v3823 = vld [vmem:[%s3813 + $0x24] sm:$0xf]
    %v3824 = vld [vmem:[%s3813 + $0x28] sm:$0xf]
    %v3825 = vld [vmem:[%s3813 + $0x2c] sm:$0xf]
    %v3826 = vld [vmem:[%s3813 + $0x30] sm:$0xf]
    %v3827 = vld [vmem:[%s3813 + $0x34] sm:$0xf]
    %v3828 = vld [vmem:[%s3813 + $0x38] sm:$0xf]
    %v3829 = vld [vmem:[%s3813 + $0x3c] sm:$0xf]
    %v3832 = vunpack.c.l.b16 %v3097
    %v3833 = vunpack.c.l.b16 %v3101
    %v3834 = vpack.c.b16 %v3246, %v3245
    %v3835 = vpack.c.b16 %v3832, %v3247
    %v3836 = vpack.c.b16 %v3249, %v3248
    %v3837 = vpack.c.b16 %v3833, %v3250
    %v3858 = vunpack.c.l.b16 %v3814
    %v3859 = vunpack.c.l.b16 %v3815
    %v3860 = vunpack.c.l.b16 %v3816
    %v3861 = vunpack.c.l.b16 %v3817
    %v3862 = vunpack.c.l.b16 %v3818
    %v3863 = vunpack.c.l.b16 %v3819
    %v3864 = vunpack.c.l.b16 %v3820
    %v3865 = vunpack.c.l.b16 %v3821
    %v3866 = vunpack.c.l.b16 %v3822
    %v3867 = vunpack.c.l.b16 %v3823
    %v3868 = vunpack.c.l.b16 %v3824
    %v3869 = vunpack.c.l.b16 %v3825
    %v3870 = vunpack.c.l.b16 %v3826
    %v3871 = vunpack.c.l.b16 %v3827
    %v3872 = vunpack.c.l.b16 %v3828
    %v3873 = vunpack.c.l.b16 %v3829
    %v3874 = vpack.c.b16 %v3859, %v3858
    %v3875 = vpack.c.b16 %v3861, %v3860
    %v3876 = vpack.c.b16 %v3863, %v3862
    %v3877 = vpack.c.b16 %v3865, %v3864
    %v3878 = vpack.c.b16 %v3867, %v3866
    %v3879 = vpack.c.b16 %v3869, %v3868
    %v3880 = vpack.c.b16 %v3871, %v3870
    %v3881 = vpack.c.b16 %v3873, %v3872
    %3890 = vmatprep.subr.bf16.mxu0 0
    %3891 = vmatpush1.bf16.msra.mxu0 %v3874
    %3892 = vmatprep.subr.bf16.mxu0 0
    %3893 = vmatpush1.bf16.msra.mxu0 %v3875
    %3894 = vmatprep.subr.bf16.mxu0 0
    %3895 = vmatpush1.bf16.msra.mxu0 %v3876
    %3896 = vmatprep.subr.bf16.mxu0 0
    %3897 = vmatpush1.bf16.msra.mxu0 %v3877
    %3898 = vmatprep.subr.bf16.mxu0 0
    %3899 = vmatpush1.bf16.msra.mxu0 %v3878
    %3900 = vmatprep.subr.bf16.mxu0 0
    %3901 = vmatpush1.bf16.msra.mxu0 %v3879
    %3902 = vmatprep.subr.bf16.mxu0 0
    %3903 = vmatpush1.bf16.msra.mxu0 %v3880
    %3904 = vmatprep.subr.bf16.mxu0 0
    %3905 = vmatpush1.bf16.msra.mxu0 %v3881
    %3906 = vmatprep.subr.bf16.mxu0 0
    %3907 = vmatpush1.bf16.msra.mxu0 0
    %3908 = vmatprep.subr.bf16.mxu0 0
    %3909 = vmatpush1.bf16.msra.mxu0 0
    %3910 = vmatprep.subr.bf16.mxu0 0
    %3911 = vmatpush1.bf16.msra.mxu0 0
    %3912 = vmatprep.subr.bf16.mxu0 0
    %3913 = vmatpush1.bf16.msra.mxu0 0
    %3914 = vmatprep.subr.bf16.mxu0 0
    %3915 = vmatpush1.bf16.msra.mxu0 0
    %3916 = vmatprep.subr.bf16.mxu0 0
    %3917 = vmatpush1.bf16.msra.mxu0 0
    %3918 = vmatprep.subr.bf16.mxu0 0
    %3919 = vmatpush1.bf16.msra.mxu0 0
    %3920 = vmatprep.subr.bf16.mxu0 0
    %3921 = vmatpush1.bf16.msra.mxu0 0
    %3922 = vmatprep.mubr.bf16.mxu0 0
    %3923 = vmatmul.mubr.bf16.gmra.mrb[0].mxu0 %v3834
    %v3924 = vpop.f32.mrb[0].mxu0
    %v3925 = vadd.f32 0.0, %v3924
    %v3926 = vpop.f32.mrb[0].mxu0
    %v3927 = vpop.f32.mrb[0].mxu0
    %v3928 = vadd.f32 0.0, %v3927
    %v3929 = vpop.f32.mrb[0].mxu0
    %3930 = vmatprep.mubr.bf16.mxu0 0
    %3931 = vmatmul.mubr.bf16.gmra.mrb[0].mxu0 %v3835
    %v3932 = vpop.f32.mrb[0].mxu0
    %v3933 = vadd.f32 0.0, %v3932
    %v3934 = vpop.f32.mrb[0].mxu0
    %v3935 = vpop.f32.mrb[0].mxu0
    %v3936 = vadd.f32 0.0, %v3935
    %v3937 = vpop.f32.mrb[0].mxu0
    %3938 = vmatprep.mubr.bf16.mxu0 0
    %3939 = vmatmul.mubr.bf16.gmra.mrb[0].mxu0 %v3836
    %v3940 = vpop.f32.mrb[0].mxu0
    %v3941 = vadd.f32 0.0, %v3940
    %v3942 = vpop.f32.mrb[0].mxu0
    %v3943 = vpop.f32.mrb[0].mxu0
    %v3944 = vadd.f32 0.0, %v3943
    %v3945 = vpop.f32.mrb[0].mxu0
    %3946 = vmatprep.mubr.bf16.mxu0 0
    %3947 = vmatmul.mubr.bf16.gmra.mrb[0].mxu0 %v3837
    %v3948 = vpop.f32.mrb[0].mxu0
    %v3949 = vadd.f32 0.0, %v3948
    %v3950 = vpop.f32.mrb[0].mxu0
    %v3951 = vpop.f32.mrb[0].mxu0
    %v3952 = vadd.f32 0.0, %v3951
    %v3953 = vpop.f32.mrb[0].mxu0
    %3954 = vdwg.mxu0
    %v3955 = vadd.f32 %v3805, %v3925
    %v3956 = vadd.f32 %v3806, %v3928
    %v3957 = vadd.f32 %v3807, %v3933
    %v3958 = vadd.f32 %v3808, %v3936
    %v3959 = vadd.f32 %v3809, %v3941
    %v3960 = vadd.f32 %v3810, %v3944
    %v3961 = vadd.f32 %v3811, %v3949
    %v3962 = vadd.f32 %v3812, %v3952
    %s3963 = scalar_lea.vmem [#allocation5], 320
    %v3964 = vld [vmem:[%s3963] sm:$0xf]
    %v3965 = vld [vmem:[%s3963 + $0x4] sm:$0xf]
    %v3966 = vld [vmem:[%s3963 + $0x8] sm:$0xf]
    %v3967 = vld [vmem:[%s3963 + $0xc] sm:$0xf]
    %v3968 = vld [vmem:[%s3963 + $0x10] sm:$0xf]
    %v3969 = vld [vmem:[%s3963 + $0x14] sm:$0xf]
    %v3970 = vld [vmem:[%s3963 + $0x18] sm:$0xf]
    %v3971 = vld [vmem:[%s3963 + $0x1c] sm:$0xf]
    %v3972 = vld [vmem:[%s3963 + $0x20] sm:$0xf]
    %v3973 = vld [vmem:[%s3963 + $0x24] sm:$0xf]
    %v3974 = vld [vmem:[%s3963 + $0x28] sm:$0xf]
    %v3975 = vld [vmem:[%s3963 + $0x2c] sm:$0xf]
    %v3976 = vld [vmem:[%s3963 + $0x30] sm:$0xf]
    %v3977 = vld [vmem:[%s3963 + $0x34] sm:$0xf]
    %v3978 = vld [vmem:[%s3963 + $0x38] sm:$0xf]
    %v3979 = vld [vmem:[%s3963 + $0x3c] sm:$0xf]
    %v3982 = vunpack.c.l.b16 %v3201
    %v3983 = vunpack.c.l.b16 %v3205
    %v3984 = vpack.c.b16 %v3529, %v3528
    %v3985 = vpack.c.b16 %v3982, %v3530
    %v3986 = vpack.c.b16 %v3532, %v3531
    %v3987 = vpack.c.b16 %v3983, %v3533
    %v4008 = vunpack.c.l.b16 %v3964
    %v4009 = vunpack.c.l.b16 %v3965
    %v4010 = vunpack.c.l.b16 %v3966
    %v4011 = vunpack.c.l.b16 %v3967
    %v4012 = vunpack.c.l.b16 %v3968
    %v4013 = vunpack.c.l.b16 %v3969
    %v4014 = vunpack.c.l.b16 %v3970
    %v4015 = vunpack.c.l.b16 %v3971
    %v4016 = vunpack.c.l.b16 %v3972
    %v4017 = vunpack.c.l.b16 %v3973
    %v4018 = vunpack.c.l.b16 %v3974
    %v4019 = vunpack.c.l.b16 %v3975
    %v4020 = vunpack.c.l.b16 %v3976
    %v4021 = vunpack.c.l.b16 %v3977
    %v4022 = vunpack.c.l.b16 %v3978
    %v4023 = vunpack.c.l.b16 %v3979
    %v4024 = vpack.c.b16 %v4009, %v4008
    %v4025 = vpack.c.b16 %v4011, %v4010
    %v4026 = vpack.c.b16 %v4013, %v4012
    %v4027 = vpack.c.b16 %v4015, %v4014
    %v4028 = vpack.c.b16 %v4017, %v4016
    %v4029 = vpack.c.b16 %v4019, %v4018
    %v4030 = vpack.c.b16 %v4021, %v4020
    %v4031 = vpack.c.b16 %v4023, %v4022
    %4040 = vmatprep.subr.bf16.mxu0 0
    %4041 = vmatpush1.bf16.msra.mxu0 %v4024
    %4042 = vmatprep.subr.bf16.mxu0 0
    %4043 = vmatpush1.bf16.msra.mxu0 %v4025
    %4044 = vmatprep.subr.bf16.mxu0 0
    %4045 = vmatpush1.bf16.msra.mxu0 %v4026
    %4046 = vmatprep.subr.bf16.mxu0 0
    %4047 = vmatpush1.bf16.msra.mxu0 %v4027
    %4048 = vmatprep.subr.bf16.mxu0 0
    %4049 = vmatpush1.bf16.msra.mxu0 %v4028
    %4050 = vmatprep.subr.bf16.mxu0 0
    %4051 = vmatpush1.bf16.msra.mxu0 %v4029
    %4052 = vmatprep.subr.bf16.mxu0 0
    %4053 = vmatpush1.bf16.msra.mxu0 %v4030
    %4054 = vmatprep.subr.bf16.mxu0 0
    %4055 = vmatpush1.bf16.msra.mxu0 %v4031
    %4056 = vmatprep.subr.bf16.mxu0 0
    %4057 = vmatpush1.bf16.msra.mxu0 0
    %4058 = vmatprep.subr.bf16.mxu0 0
    %4059 = vmatpush1.bf16.msra.mxu0 0
    %4060 = vmatprep.subr.bf16.mxu0 0
    %4061 = vmatpush1.bf16.msra.mxu0 0
    %4062 = vmatprep.subr.bf16.mxu0 0
    %4063 = vmatpush1.bf16.msra.mxu0 0
    %4064 = vmatprep.subr.bf16.mxu0 0
    %4065 = vmatpush1.bf16.msra.mxu0 0
    %4066 = vmatprep.subr.bf16.mxu0 0
    %4067 = vmatpush1.bf16.msra.mxu0 0
    %4068 = vmatprep.subr.bf16.mxu0 0
    %4069 = vmatpush1.bf16.msra.mxu0 0
    %4070 = vmatprep.subr.bf16.mxu0 0
    %4071 = vmatpush1.bf16.msra.mxu0 0
    %4072 = vmatprep.mubr.bf16.mxu0 0
    %4073 = vmatmul.mubr.bf16.gmra.mrb[0].mxu0 %v3984
    %v4074 = vpop.f32.mrb[0].mxu0
    %v4075 = vadd.f32 0.0, %v4074
    %v4076 = vpop.f32.mrb[0].mxu0
    %v4077 = vpop.f32.mrb[0].mxu0
    %v4078 = vadd.f32 0.0, %v4077
    %v4079 = vpop.f32.mrb[0].mxu0
    %4080 = vmatprep.mubr.bf16.mxu0 0
    %4081 = vmatmul.mubr.bf16.gmra.mrb[0].mxu0 %v3985
    %v4082 = vpop.f32.mrb[0].mxu0
    %v4083 = vadd.f32 0.0, %v4082
    %v4084 = vpop.f32.mrb[0].mxu0
    %v4085 = vpop.f32.mrb[0].mxu0
    %v4086 = vadd.f32 0.0, %v4085
    %v4087 = vpop.f32.mrb[0].mxu0
    %4088 = vmatprep.mubr.bf16.mxu0 0
    %4089 = vmatmul.mubr.bf16.gmra.mrb[0].mxu0 %v3986
    %v4090 = vpop.f32.mrb[0].mxu0
    %v4091 = vadd.f32 0.0, %v4090
    %v4092 = vpop.f32.mrb[0].mxu0
    %v4093 = vpop.f32.mrb[0].mxu0
    %v4094 = vadd.f32 0.0, %v4093
    %v4095 = vpop.f32.mrb[0].mxu0
    %4096 = vmatprep.mubr.bf16.mxu0 0
    %4097 = vmatmul.mubr.bf16.gmra.mrb[0].mxu0 %v3987
    %v4098 = vpop.f32.mrb[0].mxu0
    %v4099 = vadd.f32 0.0, %v4098
    %v4100 = vpop.f32.mrb[0].mxu0
    %v4101 = vpop.f32.mrb[0].mxu0
    %v4102 = vadd.f32 0.0, %v4101
    %v4103 = vpop.f32.mrb[0].mxu0
    %4104 = vdwg.mxu0
    %v4105 = vadd.f32 %v3955, %v4075
    %v4106 = vadd.f32 %v3956, %v4078
    %v4107 = vadd.f32 %v3957, %v4083
    %v4108 = vadd.f32 %v3958, %v4086
    %v4109 = vadd.f32 %v3959, %v4091
    %v4110 = vadd.f32 %v3960, %v4094
    %v4111 = vadd.f32 %v3961, %v4099
    %v4112 = vadd.f32 %v3962, %v4102
    %s4113 = scalar_lea.vmem [#allocation5], 384
    %v4114 = vld [vmem:[%s4113] sm:$0xf]
    %v4115 = vld [vmem:[%s4113 + $0x4] sm:$0xf]
    %v4116 = vld [vmem:[%s4113 + $0x8] sm:$0xf]
    %v4117 = vld [vmem:[%s4113 + $0xc] sm:$0xf]
    %v4118 = vld [vmem:[%s4113 + $0x10] sm:$0xf]
    %v4119 = vld [vmem:[%s4113 + $0x14] sm:$0xf]
    %v4120 = vld [vmem:[%s4113 + $0x18] sm:$0xf]
    %v4121 = vld [vmem:[%s4113 + $0x1c] sm:$0xf]
    %v4122 = vld [vmem:[%s4113 + $0x20] sm:$0xf]
    %v4123 = vld [vmem:[%s4113 + $0x24] sm:$0xf]
    %v4124 = vld [vmem:[%s4113 + $0x28] sm:$0xf]
    %v4125 = vld [vmem:[%s4113 + $0x2c] sm:$0xf]
    %v4126 = vld [vmem:[%s4113 + $0x30] sm:$0xf]
    %v4127 = vld [vmem:[%s4113 + $0x34] sm:$0xf]
    %v4128 = vld [vmem:[%s4113 + $0x38] sm:$0xf]
    %v4129 = vld [vmem:[%s4113 + $0x3c] sm:$0xf]
    %v4130 = vpack.c.b16 %v1196, %v3682
    %v4131 = vpack.c.b16 %v1196, %v3683
    %v4150 = vunpack.c.l.b16 %v4114
    %v4151 = vunpack.c.l.b16 %v4115
    %v4152 = vunpack.c.l.b16 %v4116
    %v4153 = vunpack.c.l.b16 %v4117
    %v4154 = vunpack.c.l.b16 %v4118
    %v4155 = vunpack.c.l.b16 %v4119
    %v4156 = vunpack.c.l.b16 %v4120
    %v4157 = vunpack.c.l.b16 %v4121
    %v4158 = vunpack.c.l.b16 %v4122
    %v4159 = vunpack.c.l.b16 %v4123
    %v4160 = vunpack.c.l.b16 %v4124
    %v4161 = vunpack.c.l.b16 %v4125
    %v4162 = vunpack.c.l.b16 %v4126
    %v4163 = vunpack.c.l.b16 %v4127
    %v4164 = vunpack.c.l.b16 %v4128
    %v4165 = vunpack.c.l.b16 %v4129
    %v4166 = vpack.c.b16 %v4151, %v4150
    %v4167 = vpack.c.b16 %v4153, %v4152
    %v4168 = vpack.c.b16 %v4155, %v4154
    %v4169 = vpack.c.b16 %v4157, %v4156
    %v4170 = vpack.c.b16 %v4159, %v4158
    %v4171 = vpack.c.b16 %v4161, %v4160
    %v4172 = vpack.c.b16 %v4163, %v4162
    %v4173 = vpack.c.b16 %v4165, %v4164
    %4182 = vmatprep.subr.bf16.mxu0 0
    %4183 = vmatpush1.bf16.msra.mxu0 %v4166
    %4184 = vmatprep.subr.bf16.mxu0 0
    %4185 = vmatpush1.bf16.msra.mxu0 %v4167
    %4186 = vmatprep.subr.bf16.mxu0 0
    %4187 = vmatpush1.bf16.msra.mxu0 %v4168
    %4188 = vmatprep.subr.bf16.mxu0 0
    %4189 = vmatpush1.bf16.msra.mxu0 %v4169
    %4190 = vmatprep.subr.bf16.mxu0 0
    %4191 = vmatpush1.bf16.msra.mxu0 %v4170
    %4192 = vmatprep.subr.bf16.mxu0 0
    %4193 = vmatpush1.bf16.msra.mxu0 %v4171
    %4194 = vmatprep.subr.bf16.mxu0 0
    %4195 = vmatpush1.bf16.msra.mxu0 %v4172
    %4196 = vmatprep.subr.bf16.mxu0 0
    %4197 = vmatpush1.bf16.msra.mxu0 %v4173
    %4198 = vmatprep.subr.bf16.mxu0 0
    %4199 = vmatpush1.bf16.msra.mxu0 0
    %4200 = vmatprep.subr.bf16.mxu0 0
    %4201 = vmatpush1.bf16.msra.mxu0 0
    %4202 = vmatprep.subr.bf16.mxu0 0
    %4203 = vmatpush1.bf16.msra.mxu0 0
    %4204 = vmatprep.subr.bf16.mxu0 0
    %4205 = vmatpush1.bf16.msra.mxu0 0
    %4206 = vmatprep.subr.bf16.mxu0 0
    %4207 = vmatpush1.bf16.msra.mxu0 0
    %4208 = vmatprep.subr.bf16.mxu0 0
    %4209 = vmatpush1.bf16.msra.mxu0 0
    %4210 = vmatprep.subr.bf16.mxu0 0
    %4211 = vmatpush1.bf16.msra.mxu0 0
    %4212 = vmatprep.subr.bf16.mxu0 0
    %4213 = vmatpush1.bf16.msra.mxu0 0
    %4214 = vmatprep.mubr.bf16.mxu0 0
    %4215 = vmatmul.mubr.bf16.gmra.mrb[0].mxu0 %v3385
    %v4216 = vpop.f32.mrb[0].mxu0
    %v4217 = vadd.f32 0.0, %v4216
    %v4218 = vpop.f32.mrb[0].mxu0
    %v4219 = vpop.f32.mrb[0].mxu0
    %v4220 = vadd.f32 0.0, %v4219
    %v4221 = vpop.f32.mrb[0].mxu0
    %4222 = vmatprep.mubr.bf16.mxu0 0
    %4223 = vmatmul.mubr.bf16.gmra.mrb[0].mxu0 %v4130
    %v4224 = vpop.f32.mrb[0].mxu0
    %v4225 = vadd.f32 0.0, %v4224
    %v4226 = vpop.f32.mrb[0].mxu0
    %v4227 = vpop.f32.mrb[0].mxu0
    %v4228 = vadd.f32 0.0, %v4227
    %v4229 = vpop.f32.mrb[0].mxu0
    %4230 = vmatprep.mubr.bf16.mxu0 0
    %4231 = vmatmul.mubr.bf16.gmra.mrb[0].mxu0 %v3387
    %v4232 = vpop.f32.mrb[0].mxu0
    %v4233 = vadd.f32 0.0, %v4232
    %v4234 = vpop.f32.mrb[0].mxu0
    %v4235 = vpop.f32.mrb[0].mxu0
    %v4236 = vadd.f32 0.0, %v4235
    %v4237 = vpop.f32.mrb[0].mxu0
    %4238 = vmatprep.mubr.bf16.mxu0 0
    %4239 = vmatmul.mubr.bf16.gmra.mrb[0].mxu0 %v4131
    %v4240 = vpop.f32.mrb[0].mxu0
    %v4241 = vadd.f32 0.0, %v4240
    %v4242 = vpop.f32.mrb[0].mxu0
    %v4243 = vpop.f32.mrb[0].mxu0
    %v4244 = vadd.f32 0.0, %v4243
    %v4245 = vpop.f32.mrb[0].mxu0
    %4246 = vdwg.mxu0
    %v4247 = vadd.f32 %v4105, %v4217
    %v4248 = vadd.f32 %v4106, %v4220
    %v4249 = vadd.f32 %v4107, %v4225
    %v4250 = vadd.f32 %v4108, %v4228
    %v4251 = vadd.f32 %v4109, %v4233
    %v4252 = vadd.f32 %v4110, %v4236
    %v4253 = vadd.f32 %v4111, %v4241
    %v4254 = vadd.f32 %v4112, %v4244
    %s4255 = scalar_lea.vmem [#allocation5], 448
    %v4256 = vld [vmem:[%s4255] sm:$0xf]
    %v4257 = vld [vmem:[%s4255 + $0x4] sm:$0xf]
    %v4258 = vld [vmem:[%s4255 + $0x8] sm:$0xf]
    %v4259 = vld [vmem:[%s4255 + $0xc] sm:$0xf]
    %v4260 = vld [vmem:[%s4255 + $0x10] sm:$0xf]
    %v4261 = vld [vmem:[%s4255 + $0x14] sm:$0xf]
    %v4262 = vld [vmem:[%s4255 + $0x18] sm:$0xf]
    %v4263 = vld [vmem:[%s4255 + $0x1c] sm:$0xf]
    %v4264 = vld [vmem:[%s4255 + $0x20] sm:$0xf]
    %v4265 = vld [vmem:[%s4255 + $0x24] sm:$0xf]
    %v4266 = vld [vmem:[%s4255 + $0x28] sm:$0xf]
    %v4267 = vld [vmem:[%s4255 + $0x2c] sm:$0xf]
    %v4268 = vld [vmem:[%s4255 + $0x30] sm:$0xf]
    %v4269 = vld [vmem:[%s4255 + $0x34] sm:$0xf]
    %v4270 = vld [vmem:[%s4255 + $0x38] sm:$0xf]
    %v4271 = vld [vmem:[%s4255 + $0x3c] sm:$0xf]
    %v4272 = vpack.c.b16 %v1196, %v3832
    %v4273 = vpack.c.b16 %v1196, %v3833
    %v4292 = vunpack.c.l.b16 %v4256
    %v4293 = vunpack.c.l.b16 %v4257
    %v4294 = vunpack.c.l.b16 %v4258
    %v4295 = vunpack.c.l.b16 %v4259
    %v4296 = vunpack.c.l.b16 %v4260
    %v4297 = vunpack.c.l.b16 %v4261
    %v4298 = vunpack.c.l.b16 %v4262
    %v4299 = vunpack.c.l.b16 %v4263
    %v4300 = vunpack.c.l.b16 %v4264
    %v4301 = vunpack.c.l.b16 %v4265
    %v4302 = vunpack.c.l.b16 %v4266
    %v4303 = vunpack.c.l.b16 %v4267
    %v4304 = vunpack.c.l.b16 %v4268
    %v4305 = vunpack.c.l.b16 %v4269
    %v4306 = vunpack.c.l.b16 %v4270
    %v4307 = vunpack.c.l.b16 %v4271
    %v4308 = vpack.c.b16 %v4293, %v4292
    %v4309 = vpack.c.b16 %v4295, %v4294
    %v4310 = vpack.c.b16 %v4297, %v4296
    %v4311 = vpack.c.b16 %v4299, %v4298
    %v4312 = vpack.c.b16 %v4301, %v4300
    %v4313 = vpack.c.b16 %v4303, %v4302
    %v4314 = vpack.c.b16 %v4305, %v4304
    %v4315 = vpack.c.b16 %v4307, %v4306
    %4324 = vmatprep.subr.bf16.mxu0 0
    %4325 = vmatpush1.bf16.msra.mxu0 %v4308
    %4326 = vmatprep.subr.bf16.mxu0 0
    %4327 = vmatpush1.bf16.msra.mxu0 %v4309
    %4328 = vmatprep.subr.bf16.mxu0 0
    %4329 = vmatpush1.bf16.msra.mxu0 %v4310
    %4330 = vmatprep.subr.bf16.mxu0 0
    %4331 = vmatpush1.bf16.msra.mxu0 %v4311
    %4332 = vmatprep.subr.bf16.mxu0 0
    %4333 = vmatpush1.bf16.msra.mxu0 %v4312
    %4334 = vmatprep.subr.bf16.mxu0 0
    %4335 = vmatpush1.bf16.msra.mxu0 %v4313
    %4336 = vmatprep.subr.bf16.mxu0 0
    %4337 = vmatpush1.bf16.msra.mxu0 %v4314
    %4338 = vmatprep.subr.bf16.mxu0 0
    %4339 = vmatpush1.bf16.msra.mxu0 %v4315
    %4340 = vmatprep.subr.bf16.mxu0 0
    %4341 = vmatpush1.bf16.msra.mxu0 0
    %4342 = vmatprep.subr.bf16.mxu0 0
    %4343 = vmatpush1.bf16.msra.mxu0 0
    %4344 = vmatprep.subr.bf16.mxu0 0
    %4345 = vmatpush1.bf16.msra.mxu0 0
    %4346 = vmatprep.subr.bf16.mxu0 0
    %4347 = vmatpush1.bf16.msra.mxu0 0
    %4348 = vmatprep.subr.bf16.mxu0 0
    %4349 = vmatpush1.bf16.msra.mxu0 0
    %4350 = vmatprep.subr.bf16.mxu0 0
    %4351 = vmatpush1.bf16.msra.mxu0 0
    %4352 = vmatprep.subr.bf16.mxu0 0
    %4353 = vmatpush1.bf16.msra.mxu0 0
    %4354 = vmatprep.subr.bf16.mxu0 0
    %4355 = vmatpush1.bf16.msra.mxu0 0
    %4356 = vmatprep.mubr.bf16.mxu0 0
    %4357 = vmatmul.mubr.bf16.gmra.mrb[0].mxu0 %v3252
    %v4358 = vpop.f32.mrb[0].mxu0
    %v4359 = vadd.f32 0.0, %v4358
    %v4360 = vpop.f32.mrb[0].mxu0
    %v4361 = vpop.f32.mrb[0].mxu0
    %v4362 = vadd.f32 0.0, %v4361
    %v4363 = vpop.f32.mrb[0].mxu0
    %4364 = vmatprep.mubr.bf16.mxu0 0
    %4365 = vmatmul.mubr.bf16.gmra.mrb[0].mxu0 %v4272
    %v4366 = vpop.f32.mrb[0].mxu0
    %v4367 = vadd.f32 0.0, %v4366
    %v4368 = vpop.f32.mrb[0].mxu0
    %v4369 = vpop.f32.mrb[0].mxu0
    %v4370 = vadd.f32 0.0, %v4369
    %v4371 = vpop.f32.mrb[0].mxu0
    %4372 = vmatprep.mubr.bf16.mxu0 0
    %4373 = vmatmul.mubr.bf16.gmra.mrb[0].mxu0 %v3254
    %v4374 = vpop.f32.mrb[0].mxu0
    %v4375 = vadd.f32 0.0, %v4374
    %v4376 = vpop.f32.mrb[0].mxu0
    %v4377 = vpop.f32.mrb[0].mxu0
    %v4378 = vadd.f32 0.0, %v4377
    %v4379 = vpop.f32.mrb[0].mxu0
    %4380 = vmatprep.mubr.bf16.mxu0 0
    %4381 = vmatmul.mubr.bf16.gmra.mrb[0].mxu0 %v4273
    %v4382 = vpop.f32.mrb[0].mxu0
    %v4383 = vadd.f32 0.0, %v4382
    %v4384 = vpop.f32.mrb[0].mxu0
    %v4385 = vpop.f32.mrb[0].mxu0
    %v4386 = vadd.f32 0.0, %v4385
    %v4387 = vpop.f32.mrb[0].mxu0
    %4388 = vdwg.mxu0
    %v4389 = vadd.f32 %v4247, %v4359
    %v4390 = vadd.f32 %v4248, %v4362
    %v4391 = vadd.f32 %v4249, %v4367
    %v4392 = vadd.f32 %v4250, %v4370
    %v4393 = vadd.f32 %v4251, %v4375
    %v4394 = vadd.f32 %v4252, %v4378
    %v4395 = vadd.f32 %v4253, %v4383
    %v4396 = vadd.f32 %v4254, %v4386
    %s4397 = scalar_lea.vmem [#allocation5], 512
    %v4398 = vld [vmem:[%s4397] sm:$0xf]
    %v4399 = vld [vmem:[%s4397 + $0x4] sm:$0xf]
    %v4400 = vld [vmem:[%s4397 + $0x8] sm:$0xf]
    %v4401 = vld [vmem:[%s4397 + $0xc] sm:$0xf]
    %v4402 = vld [vmem:[%s4397 + $0x10] sm:$0xf]
    %v4403 = vld [vmem:[%s4397 + $0x14] sm:$0xf]
    %v4404 = vld [vmem:[%s4397 + $0x18] sm:$0xf]
    %v4405 = vld [vmem:[%s4397 + $0x1c] sm:$0xf]
    %v4406 = vld [vmem:[%s4397 + $0x20] sm:$0xf]
    %v4407 = vld [vmem:[%s4397 + $0x24] sm:$0xf]
    %v4408 = vld [vmem:[%s4397 + $0x28] sm:$0xf]
    %v4409 = vld [vmem:[%s4397 + $0x2c] sm:$0xf]
    %v4410 = vld [vmem:[%s4397 + $0x30] sm:$0xf]
    %v4411 = vld [vmem:[%s4397 + $0x34] sm:$0xf]
    %v4412 = vld [vmem:[%s4397 + $0x38] sm:$0xf]
    %v4413 = vld [vmem:[%s4397 + $0x3c] sm:$0xf]
    %v4414 = vpack.c.b16 %v1196, %v3982
    %v4415 = vpack.c.b16 %v1196, %v3983
    %v4434 = vunpack.c.l.b16 %v4398
    %v4435 = vunpack.c.l.b16 %v4399
    %v4436 = vunpack.c.l.b16 %v4400
    %v4437 = vunpack.c.l.b16 %v4401
    %v4438 = vunpack.c.l.b16 %v4402
    %v4439 = vunpack.c.l.b16 %v4403
    %v4440 = vunpack.c.l.b16 %v4404
    %v4441 = vunpack.c.l.b16 %v4405
    %v4442 = vunpack.c.l.b16 %v4406
    %v4443 = vunpack.c.l.b16 %v4407
    %v4444 = vunpack.c.l.b16 %v4408
    %v4445 = vunpack.c.l.b16 %v4409
    %v4446 = vunpack.c.l.b16 %v4410
    %v4447 = vunpack.c.l.b16 %v4411
    %v4448 = vunpack.c.l.b16 %v4412
    %v4449 = vunpack.c.l.b16 %v4413
    %v4450 = vpack.c.b16 %v4435, %v4434
    %v4451 = vpack.c.b16 %v4437, %v4436
    %v4452 = vpack.c.b16 %v4439, %v4438
    %v4453 = vpack.c.b16 %v4441, %v4440
    %v4454 = vpack.c.b16 %v4443, %v4442
    %v4455 = vpack.c.b16 %v4445, %v4444
    %v4456 = vpack.c.b16 %v4447, %v4446
    %v4457 = vpack.c.b16 %v4449, %v4448
    %4466 = vmatprep.subr.bf16.mxu0 0
    %4467 = vmatpush1.bf16.msra.mxu0 %v4450
    %4468 = vmatprep.subr.bf16.mxu0 0
    %4469 = vmatpush1.bf16.msra.mxu0 %v4451
    %4470 = vmatprep.subr.bf16.mxu0 0
    %4471 = vmatpush1.bf16.msra.mxu0 %v4452
    %4472 = vmatprep.subr.bf16.mxu0 0
    %4473 = vmatpush1.bf16.msra.mxu0 %v4453
    %4474 = vmatprep.subr.bf16.mxu0 0
    %4475 = vmatpush1.bf16.msra.mxu0 %v4454
    %4476 = vmatprep.subr.bf16.mxu0 0
    %4477 = vmatpush1.bf16.msra.mxu0 %v4455
    %4478 = vmatprep.subr.bf16.mxu0 0
    %4479 = vmatpush1.bf16.msra.mxu0 %v4456
    %4480 = vmatprep.subr.bf16.mxu0 0
    %4481 = vmatpush1.bf16.msra.mxu0 %v4457
    %4482 = vmatprep.subr.bf16.mxu0 0
    %4483 = vmatpush1.bf16.msra.mxu0 0
    %4484 = vmatprep.subr.bf16.mxu0 0
    %4485 = vmatpush1.bf16.msra.mxu0 0
    %4486 = vmatprep.subr.bf16.mxu0 0
    %4487 = vmatpush1.bf16.msra.mxu0 0
    %4488 = vmatprep.subr.bf16.mxu0 0
    %4489 = vmatpush1.bf16.msra.mxu0 0
    %4490 = vmatprep.subr.bf16.mxu0 0
    %4491 = vmatpush1.bf16.msra.mxu0 0
    %4492 = vmatprep.subr.bf16.mxu0 0
    %4493 = vmatpush1.bf16.msra.mxu0 0
    %4494 = vmatprep.subr.bf16.mxu0 0
    %4495 = vmatpush1.bf16.msra.mxu0 0
    %4496 = vmatprep.subr.bf16.mxu0 0
    %4497 = vmatpush1.bf16.msra.mxu0 0
    %4498 = vmatprep.mubr.bf16.mxu0 0
    %4499 = vmatmul.mubr.bf16.gmra.mrb[0].mxu0 %v3535
    %v4500 = vpop.f32.mrb[0].mxu0
    %v4501 = vadd.f32 0.0, %v4500
    %v4502 = vpop.f32.mrb[0].mxu0
    %v4503 = vpop.f32.mrb[0].mxu0
    %v4504 = vadd.f32 0.0, %v4503
    %v4505 = vpop.f32.mrb[0].mxu0
    %4506 = vmatprep.mubr.bf16.mxu0 0
    %4507 = vmatmul.mubr.bf16.gmra.mrb[0].mxu0 %v4414
    %v4508 = vpop.f32.mrb[0].mxu0
    %v4509 = vadd.f32 0.0, %v4508
    %v4510 = vpop.f32.mrb[0].mxu0
    %v4511 = vpop.f32.mrb[0].mxu0
    %v4512 = vadd.f32 0.0, %v4511
    %v4513 = vpop.f32.mrb[0].mxu0
    %4514 = vmatprep.mubr.bf16.mxu0 0
    %4515 = vmatmul.mubr.bf16.gmra.mrb[0].mxu0 %v3537
    %v4516 = vpop.f32.mrb[0].mxu0
    %v4517 = vadd.f32 0.0, %v4516
    %v4518 = vpop.f32.mrb[0].mxu0
    %v4519 = vpop.f32.mrb[0].mxu0
    %v4520 = vadd.f32 0.0, %v4519
    %v4521 = vpop.f32.mrb[0].mxu0
    %4522 = vmatprep.mubr.bf16.mxu0 0
    %4523 = vmatmul.mubr.bf16.gmra.mrb[0].mxu0 %v4415
    %v4524 = vpop.f32.mrb[0].mxu0
    %v4525 = vadd.f32 0.0, %v4524
    %v4526 = vpop.f32.mrb[0].mxu0
    %v4527 = vpop.f32.mrb[0].mxu0
    %v4528 = vadd.f32 0.0, %v4527
    %v4529 = vpop.f32.mrb[0].mxu0
    %4530 = vdwg.mxu0
    %v4531 = vadd.f32 %v4389, %v4501
    %v4532 = vadd.f32 %v4390, %v4504
    %v4533 = vadd.f32 %v4391, %v4509
    %v4534 = vadd.f32 %v4392, %v4512
    %v4535 = vadd.f32 %v4393, %v4517
    %v4536 = vadd.f32 %v4394, %v4520
    %v4537 = vadd.f32 %v4395, %v4525
    %v4538 = vadd.f32 %v4396, %v4528
    %v4539 = vld [vmem:[%s6] sm:$0x1]
    %v4541 = vlaneseq
    %v4542 = vshrl.u32 %v4541, 7
    %v4543 = vsub.s32 0, %v4542
    %v4544 = vrot.slane %v4539, %v4543
    %v4546 = vadd.f32 %v4531, %v4544
    %v4547 = vadd.f32 %v4532, %v4544
    %v4548 = vadd.f32 %v4533, %v4544
    %v4549 = vadd.f32 %v4534, %v4544
    %v4550 = vadd.f32 %v4535, %v4544
    %v4551 = vadd.f32 %v4536, %v4544
    %v4552 = vadd.f32 %v4537, %v4544
    %v4553 = vadd.f32 %v4538, %v4544
    %v4554 = vmax.f32 %v4546, 0.0
    %v4555 = vmax.f32 %v4547, 0.0
    %v4556 = vmax.f32 %v4548, 0.0
    %v4557 = vmax.f32 %v4549, 0.0
    %v4558 = vmax.f32 %v4550, 0.0
    %v4559 = vmax.f32 %v4551, 0.0
    %v4560 = vmax.f32 %v4552, 0.0
    %v4561 = vmax.f32 %v4553, 0.0
    %v4564 = vrot.slane %v4554, 1
    %v4565 = vrot.slane %v4558, 1
    %v4568 = vmax.f32 %v4554, %v4564
    %v4569 = vmax.f32 %v4558, %v4565
    %v4572 = vrot.slane %v4555, 1
    %v4573 = vrot.slane %v4559, 1
    %v4576 = vmax.f32 %v4555, %v4572
    %v4577 = vmax.f32 %v4559, %v4573
    %v4578 = vmax.f32 %v4568, %v4576
    %v4579 = vmax.f32 %v4569, %v4577
    %v4582 = vrot.slane %v4578, 2
    %v4583 = vrot.slane %v4579, 2
    %v4586 = vadd.f32 %v4578, %v4582
    %v4587 = vadd.f32 %v4579, %v4583
    %v4590 = vrot.slane %v4556, 1
    %v4591 = vrot.slane %v4560, 1
    %v4594 = vmax.f32 %v4556, %v4590
    %v4595 = vmax.f32 %v4560, %v4591
    %v4598 = vrot.slane %v4557, 1
    %v4599 = vrot.slane %v4561, 1
    %v4602 = vmax.f32 %v4557, %v4598
    %v4603 = vmax.f32 %v4561, %v4599
    %v4604 = vmax.f32 %v4594, %v4602
    %v4605 = vmax.f32 %v4595, %v4603
    %v4606 = vadd.f32 %v4586, %v4604
    %v4607 = vadd.f32 %v4587, %v4605
    %v4610 = vrot.slane %v4604, 2
    %v4611 = vrot.slane %v4605, 2
    %v4614 = vadd.f32 %v4606, %v4610
    %v4615 = vadd.f32 %v4607, %v4611
    %v4616 = vmul.f32 %v4614, 0.25
    %v4617 = vmul.f32 %v4615, 0.25
    %v4618 = vpack.c.bf16 %v4616, %v4616
    %v4619 = vpack.c.bf16 %v4617, %v4617
    %v4620 = vld [vmem:[%s7] sm:$0xff]
    %v4621 = vld [vmem:[%s7 + $0x8] sm:$0xff]
    %v4622 = vld [vmem:[%s7 + $0x10] sm:$0xff]
    %v4623 = vld [vmem:[%s7 + $0x18] sm:$0xff]
    %v4624 = vld [vmem:[%s7 + $0x20] sm:$0xff]
    %v4625 = vld [vmem:[%s7 + $0x28] sm:$0xff]
    %v4626 = vld [vmem:[%s7 + $0x30] sm:$0xff]
    %v4627 = vld [vmem:[%s7 + $0x38] sm:$0xff]
    %v4628 = vld [vmem:[%s7 + $0x40] sm:$0xff]
    %v4629 = vld [vmem:[%s7 + $0x48] sm:$0xff]
    %v4630 = vld [vmem:[%s7 + $0x50] sm:$0xff]
    %v4631 = vld [vmem:[%s7 + $0x58] sm:$0xff]
    %v4632 = vld [vmem:[%s7 + $0x60] sm:$0xff]
    %v4633 = vld [vmem:[%s7 + $0x68] sm:$0xff]
    %v4634 = vld [vmem:[%s7 + $0x70] sm:$0xff]
    %v4635 = vld [vmem:[%s7 + $0x78] sm:$0xff]
    %v4636 = vld [vmem:[%s8] sm:$0x3]
    %v4638 = vlaneseq
    %v4639 = vshrl.u32 %v4638, 7
    %v4640 = vsub.s32 0, %v4639
    %v4641 = vrot.slane %v4636, %v4640
    %v4642 = vlaneseq
    %v4643 = vshrl.u32 %v4642, 7
    %v4644 = vsub.s32 1, %v4643
    %v4645 = vrot.slane %v4636, %v4644
    %v4650 = vunpack.c.l.b16 %v4618
    %v4651 = vunpack.c.l.b16 %v4619
    %v4652 = vrot.slane %v4651, 7
    %vm4653 = vcmask 1041409
    %v4654 = vsel %vm4653, %v4652, %v4650
    %v4655 = vpack.c.b16 %v4654, %v4654
    %v4673 = vunpack.c.l.b16 %v4620
    %v4674 = vunpack.c.h.b16 %v4620
    %v4675 = vunpack.c.l.b16 %v4621
    %v4676 = vunpack.c.h.b16 %v4621
    %v4677 = vunpack.c.l.b16 %v4622
    %v4678 = vunpack.c.h.b16 %v4622
    %v4679 = vunpack.c.l.b16 %v4623
    %v4680 = vunpack.c.h.b16 %v4623
    %v4681 = vunpack.c.l.b16 %v4624
    %v4682 = vunpack.c.h.b16 %v4624
    %v4683 = vunpack.c.l.b16 %v4625
    %v4684 = vunpack.c.h.b16 %v4625
    %v4685 = vunpack.c.l.b16 %v4626
    %v4686 = vunpack.c.h.b16 %v4626
    %v4687 = vunpack.c.l.b16 %v4627
    %v4688 = vunpack.c.h.b16 %v4627
    %v4689 = vunpack.c.l.b16 %v4628
    %v4690 = vunpack.c.h.b16 %v4628
    %v4691 = vunpack.c.l.b16 %v4629
    %v4692 = vunpack.c.h.b16 %v4629
    %v4693 = vunpack.c.l.b16 %v4630
    %v4694 = vunpack.c.h.b16 %v4630
    %v4695 = vunpack.c.l.b16 %v4631
    %v4696 = vunpack.c.h.b16 %v4631
    %v4697 = vunpack.c.l.b16 %v4632
    %v4698 = vunpack.c.h.b16 %v4632
    %v4699 = vunpack.c.l.b16 %v4633
    %v4700 = vunpack.c.h.b16 %v4633
    %v4701 = vunpack.c.l.b16 %v4634
    %v4702 = vunpack.c.h.b16 %v4634
    %v4703 = vunpack.c.l.b16 %v4635
    %v4704 = vunpack.c.h.b16 %v4635
    %v4705 = vpack.c.b16 %v4675, %v4673
    %v4706 = vpack.c.b16 %v4676, %v4674
    %v4707 = vpack.c.b16 %v4679, %v4677
    %v4708 = vpack.c.b16 %v4680, %v4678
    %v4709 = vpack.c.b16 %v4683, %v4681
    %v4710 = vpack.c.b16 %v4684, %v4682
    %v4711 = vpack.c.b16 %v4687, %v4685
    %v4712 = vpack.c.b16 %v4688, %v4686
    %v4713 = vpack.c.b16 %v4691, %v4689
    %v4714 = vpack.c.b16 %v4692, %v4690
    %v4715 = vpack.c.b16 %v4695, %v4693
    %v4716 = vpack.c.b16 %v4696, %v4694
    %v4717 = vpack.c.b16 %v4699, %v4697
    %v4718 = vpack.c.b16 %v4700, %v4698
    %v4719 = vpack.c.b16 %v4703, %v4701
    %v4720 = vpack.c.b16 %v4704, %v4702
    %4737 = vmatprep.subr.bf16.mxu0 %v4706
    %4738 = vmatpush1.bf16.msra.mxu0 %v4705
    %4739 = vmatprep.subr.bf16.mxu0 %v4708
    %4740 = vmatpush1.bf16.msra.mxu0 %v4707
    %4741 = vmatprep.subr.bf16.mxu0 %v4710
    %4742 = vmatpush1.bf16.msra.mxu0 %v4709
    %4743 = vmatprep.subr.bf16.mxu0 %v4712
    %4744 = vmatpush1.bf16.msra.mxu0 %v4711
    %4745 = vmatprep.subr.bf16.mxu0 %v4714
    %4746 = vmatpush1.bf16.msra.mxu0 %v4713
    %4747 = vmatprep.subr.bf16.mxu0 %v4716
    %4748 = vmatpush1.bf16.msra.mxu0 %v4715
    %4749 = vmatprep.subr.bf16.mxu0 %v4718
    %4750 = vmatpush1.bf16.msra.mxu0 %v4717
    %4751 = vmatprep.subr.bf16.mxu0 %v4720
    %4752 = vmatpush1.bf16.msra.mxu0 %v4719
    %4753 = vmatprep.subr.bf16.mxu0 0
    %4754 = vmatpush1.bf16.msra.mxu0 0
    %4755 = vmatprep.subr.bf16.mxu0 0
    %4756 = vmatpush1.bf16.msra.mxu0 0
    %4757 = vmatprep.subr.bf16.mxu0 0
    %4758 = vmatpush1.bf16.msra.mxu0 0
    %4759 = vmatprep.subr.bf16.mxu0 0
    %4760 = vmatpush1.bf16.msra.mxu0 0
    %4761 = vmatprep.subr.bf16.mxu0 0
    %4762 = vmatpush1.bf16.msra.mxu0 0
    %4763 = vmatprep.subr.bf16.mxu0 0
    %4764 = vmatpush1.bf16.msra.mxu0 0
    %4765 = vmatprep.subr.bf16.mxu0 0
    %4766 = vmatpush1.bf16.msra.mxu0 0
    %4767 = vmatprep.subr.bf16.mxu0 0
    %4768 = vmatpush1.bf16.msra.mxu0 0
    %4769 = vmatprep.mubr.bf16.mxu0 0
    %4770 = vmatmul.mubr.bf16.gmra.mrb[0].mxu0 %v4655
    %v4771 = vpop.f32.mrb[0].mxu0
    %v4772 = vadd.f32 %v4641, %v4771
    %v4773 = vpop.f32.mrb[0].mxu0
    %v4774 = vadd.f32 %v4645, %v4773
    %v4775 = vpop.f32.mrb[0].mxu0
    %v4776 = vpop.f32.mrb[0].mxu0
    %4777 = vdwg.mxu0
    %v4778 = vmax.f32 %v4772, 0.0
    %v4779 = vmax.f32 %v4774, 0.0
    %v4780 = vpack.c.bf16 %v4778, %v4778
    %v4781 = vpack.c.bf16 %v4779, %v4779
    %v4782 = vld [vmem:[%s9] sm:$0xf]
    %v4783 = vld [vmem:[%s9 + $0x4] sm:$0xf]
    %v4784 = vld [vmem:[%s9 + $0x8] sm:$0xf]
    %v4785 = vld [vmem:[%s9 + $0xc] sm:$0xf]
    %v4786 = vld [vmem:[%s9 + $0x10] sm:$0xf]
    %v4787 = vld [vmem:[%s9 + $0x14] sm:$0xf]
    %v4788 = vld [vmem:[%s9 + $0x18] sm:$0xf]
    %v4789 = vld [vmem:[%s9 + $0x1c] sm:$0xf]
    %v4790 = vld [vmem:[%s9 + $0x20] sm:$0xf]
    %v4791 = vld [vmem:[%s9 + $0x24] sm:$0xf]
    %v4792 = vld [vmem:[%s9 + $0x28] sm:$0xf]
    %v4793 = vld [vmem:[%s9 + $0x2c] sm:$0xf]
    %v4794 = vld [vmem:[%s9 + $0x30] sm:$0xf]
    %v4795 = vld [vmem:[%s9 + $0x34] sm:$0xf]
    %v4796 = vld [vmem:[%s9 + $0x38] sm:$0xf]
    %v4797 = vld [vmem:[%s9 + $0x3c] sm:$0xf]
    %v4798 = vld [vmem:[%s9 + $0x40] sm:$0xf]
    %v4799 = vld [vmem:[%s9 + $0x44] sm:$0xf]
    %v4800 = vld [vmem:[%s9 + $0x48] sm:$0xf]
    %v4801 = vld [vmem:[%s9 + $0x4c] sm:$0xf]
    %v4802 = vld [vmem:[%s9 + $0x50] sm:$0xf]
    %v4803 = vld [vmem:[%s9 + $0x54] sm:$0xf]
    %v4804 = vld [vmem:[%s9 + $0x58] sm:$0xf]
    %v4805 = vld [vmem:[%s9 + $0x5c] sm:$0xf]
    %v4806 = vld [vmem:[%s9 + $0x60] sm:$0xf]
    %v4807 = vld [vmem:[%s9 + $0x64] sm:$0xf]
    %v4808 = vld [vmem:[%s9 + $0x68] sm:$0xf]
    %v4809 = vld [vmem:[%s9 + $0x6c] sm:$0xf]
    %v4810 = vld [vmem:[%s9 + $0x70] sm:$0xf]
    %v4811 = vld [vmem:[%s9 + $0x74] sm:$0xf]
    %v4812 = vld [vmem:[%s9 + $0x78] sm:$0xf]
    %v4813 = vld [vmem:[%s9 + $0x7c] sm:$0xf]
    %v4814 = vld [vmem:[%s10] sm:$0x1]
    %v4816 = vlaneseq
    %v4817 = vshrl.u32 %v4816, 7
    %v4818 = vsub.s32 0, %v4817
    %v4819 = vrot.slane %v4814, %v4818
    %v4853 = vunpack.c.l.b16 %v4782
    %v4854 = vunpack.c.l.b16 %v4783
    %v4855 = vunpack.c.l.b16 %v4784
    %v4856 = vunpack.c.l.b16 %v4785
    %v4857 = vunpack.c.l.b16 %v4786
    %v4858 = vunpack.c.l.b16 %v4787
    %v4859 = vunpack.c.l.b16 %v4788
    %v4860 = vunpack.c.l.b16 %v4789
    %v4861 = vunpack.c.l.b16 %v4790
    %v4862 = vunpack.c.l.b16 %v4791
    %v4863 = vunpack.c.l.b16 %v4792
    %v4864 = vunpack.c.l.b16 %v4793
    %v4865 = vunpack.c.l.b16 %v4794
    %v4866 = vunpack.c.l.b16 %v4795
    %v4867 = vunpack.c.l.b16 %v4796
    %v4868 = vunpack.c.l.b16 %v4797
    %v4869 = vunpack.c.l.b16 %v4798
    %v4870 = vunpack.c.l.b16 %v4799
    %v4871 = vunpack.c.l.b16 %v4800
    %v4872 = vunpack.c.l.b16 %v4801
    %v4873 = vunpack.c.l.b16 %v4802
    %v4874 = vunpack.c.l.b16 %v4803
    %v4875 = vunpack.c.l.b16 %v4804
    %v4876 = vunpack.c.l.b16 %v4805
    %v4877 = vunpack.c.l.b16 %v4806
    %v4878 = vunpack.c.l.b16 %v4807
    %v4879 = vunpack.c.l.b16 %v4808
    %v4880 = vunpack.c.l.b16 %v4809
    %v4881 = vunpack.c.l.b16 %v4810
    %v4882 = vunpack.c.l.b16 %v4811
    %v4883 = vunpack.c.l.b16 %v4812
    %v4884 = vunpack.c.l.b16 %v4813
    %v4885 = vpack.c.b16 %v4854, %v4853
    %v4886 = vpack.c.b16 %v4856, %v4855
    %v4887 = vpack.c.b16 %v4858, %v4857
    %v4888 = vpack.c.b16 %v4860, %v4859
    %v4889 = vpack.c.b16 %v4862, %v4861
    %v4890 = vpack.c.b16 %v4864, %v4863
    %v4891 = vpack.c.b16 %v4866, %v4865
    %v4892 = vpack.c.b16 %v4868, %v4867
    %v4893 = vpack.c.b16 %v4870, %v4869
    %v4894 = vpack.c.b16 %v4872, %v4871
    %v4895 = vpack.c.b16 %v4874, %v4873
    %v4896 = vpack.c.b16 %v4876, %v4875
    %v4897 = vpack.c.b16 %v4878, %v4877
    %v4898 = vpack.c.b16 %v4880, %v4879
    %v4899 = vpack.c.b16 %v4882, %v4881
    %v4900 = vpack.c.b16 %v4884, %v4883
    %4917 = vmatprep.subr.bf16.mxu0 0
    %4918 = vmatpush1.bf16.msra.mxu0 %v4885
    %4919 = vmatprep.subr.bf16.mxu0 0
    %4920 = vmatpush1.bf16.msra.mxu0 %v4886
    %4921 = vmatprep.subr.bf16.mxu0 0
    %4922 = vmatpush1.bf16.msra.mxu0 %v4887
    %4923 = vmatprep.subr.bf16.mxu0 0
    %4924 = vmatpush1.bf16.msra.mxu0 %v4888
    %4925 = vmatprep.subr.bf16.mxu0 0
    %4926 = vmatpush1.bf16.msra.mxu0 %v4889
    %4927 = vmatprep.subr.bf16.mxu0 0
    %4928 = vmatpush1.bf16.msra.mxu0 %v4890
    %4929 = vmatprep.subr.bf16.mxu0 0
    %4930 = vmatpush1.bf16.msra.mxu0 %v4891
    %4931 = vmatprep.subr.bf16.mxu0 0
    %4932 = vmatpush1.bf16.msra.mxu0 %v4892
    %4933 = vmatprep.subr.bf16.mxu0 0
    %4934 = vmatpush1.bf16.msra.mxu0 %v4893
    %4935 = vmatprep.subr.bf16.mxu0 0
    %4936 = vmatpush1.bf16.msra.mxu0 %v4894
    %4937 = vmatprep.subr.bf16.mxu0 0
    %4938 = vmatpush1.bf16.msra.mxu0 %v4895
    %4939 = vmatprep.subr.bf16.mxu0 0
    %4940 = vmatpush1.bf16.msra.mxu0 %v4896
    %4941 = vmatprep.subr.bf16.mxu0 0
    %4942 = vmatpush1.bf16.msra.mxu0 %v4897
    %4943 = vmatprep.subr.bf16.mxu0 0
    %4944 = vmatpush1.bf16.msra.mxu0 %v4898
    %4945 = vmatprep.subr.bf16.mxu0 0
    %4946 = vmatpush1.bf16.msra.mxu0 %v4899
    %4947 = vmatprep.subr.bf16.mxu0 0
    %4948 = vmatpush1.bf16.msra.mxu0 %v4900
    %4949 = vmatprep.mubr.bf16.mxu0 %v4781
    %4950 = vmatmul.mubr.bf16.gmra.mrb[0].mxu0 %v4780
    %v4951 = vpop.f32.mrb[0].mxu0
    %v4952 = vadd.f32 %v4819, %v4951
    %v4953 = vpop.f32.mrb[0].mxu0
    %v4954 = vpop.f32.mrb[0].mxu0
    %v4955 = vpop.f32.mrb[0].mxu0
    %4956 = vdwg.mxu0
    %v4957 = vmax.f32 %v4952, 0.0
    %v4958 = vpack.c.bf16 %v4957, %v4957
    %v4959 = vld [vmem:[%s11] sm:$0xf]
    %v4960 = vld [vmem:[%s11 + $0x4] sm:$0xf]
    %v4961 = vld [vmem:[%s11 + $0x8] sm:$0xf]
    %v4962 = vld [vmem:[%s11 + $0xc] sm:$0xf]
    %v4963 = vld [vmem:[%s11 + $0x10] sm:$0xf]
    %v4964 = vld [vmem:[%s11 + $0x14] sm:$0xf]
    %v4965 = vld [vmem:[%s11 + $0x18] sm:$0xf]
    %v4966 = vld [vmem:[%s11 + $0x1c] sm:$0xf]
    %v4967 = vld [vmem:[%s11 + $0x20] sm:$0xf]
    %v4968 = vld [vmem:[%s11 + $0x24] sm:$0xf]
    %v4969 = vld [vmem:[%s11 + $0x28] sm:$0xf]
    %v4970 = vld [vmem:[%s11 + $0x2c] sm:$0xf]
    %v4971 = vld [vmem:[%s11 + $0x30] sm:$0xf]
    %v4972 = vld [vmem:[%s11 + $0x34] sm:$0xf]
    %v4973 = vld [vmem:[%s11 + $0x38] sm:$0xf]
    %v4974 = vld [vmem:[%s11 + $0x3c] sm:$0xf]
    %v4975 = vld [vmem:[%s12] sm:$0x1]
    %v4977 = vlaneseq
    %v4978 = vshrl.u32 %v4977, 7
    %v4979 = vsub.s32 0, %v4978
    %v4980 = vrot.slane %v4975, %v4979
    %v4998 = vunpack.c.l.b16 %v4959
    %v4999 = vunpack.c.l.b16 %v4960
    %v5000 = vunpack.c.l.b16 %v4961
    %v5001 = vunpack.c.l.b16 %v4962
    %v5002 = vunpack.c.l.b16 %v4963
    %v5003 = vunpack.c.l.b16 %v4964
    %v5004 = vunpack.c.l.b16 %v4965
    %v5005 = vunpack.c.l.b16 %v4966
    %v5006 = vunpack.c.l.b16 %v4967
    %v5007 = vunpack.c.l.b16 %v4968
    %v5008 = vunpack.c.l.b16 %v4969
    %v5009 = vunpack.c.l.b16 %v4970
    %v5010 = vunpack.c.l.b16 %v4971
    %v5011 = vunpack.c.l.b16 %v4972
    %v5012 = vunpack.c.l.b16 %v4973
    %v5013 = vunpack.c.l.b16 %v4974
    %v5014 = vpack.c.b16 %v4999, %v4998
    %v5015 = vpack.c.b16 %v5001, %v5000
    %v5016 = vpack.c.b16 %v5003, %v5002
    %v5017 = vpack.c.b16 %v5005, %v5004
    %v5018 = vpack.c.b16 %v5007, %v5006
    %v5019 = vpack.c.b16 %v5009, %v5008
    %v5020 = vpack.c.b16 %v5011, %v5010
    %v5021 = vpack.c.b16 %v5013, %v5012
    %5030 = vmatprep.subr.bf16.mxu0 0
    %5031 = vmatpush1.bf16.msra.mxu0 %v5014
    %5032 = vmatprep.subr.bf16.mxu0 0
    %5033 = vmatpush1.bf16.msra.mxu0 %v5015
    %5034 = vmatprep.subr.bf16.mxu0 0
    %5035 = vmatpush1.bf16.msra.mxu0 %v5016
    %5036 = vmatprep.subr.bf16.mxu0 0
    %5037 = vmatpush1.bf16.msra.mxu0 %v5017
    %5038 = vmatprep.subr.bf16.mxu0 0
    %5039 = vmatpush1.bf16.msra.mxu0 %v5018
    %5040 = vmatprep.subr.bf16.mxu0 0
    %5041 = vmatpush1.bf16.msra.mxu0 %v5019
    %5042 = vmatprep.subr.bf16.mxu0 0
    %5043 = vmatpush1.bf16.msra.mxu0 %v5020
    %5044 = vmatprep.subr.bf16.mxu0 0
    %5045 = vmatpush1.bf16.msra.mxu0 %v5021
    %5046 = vmatprep.subr.bf16.mxu0 0
    %5047 = vmatpush1.bf16.msra.mxu0 0
    %5048 = vmatprep.subr.bf16.mxu0 0
    %5049 = vmatpush1.bf16.msra.mxu0 0
    %5050 = vmatprep.subr.bf16.mxu0 0
    %5051 = vmatpush1.bf16.msra.mxu0 0
    %5052 = vmatprep.subr.bf16.mxu0 0
    %5053 = vmatpush1.bf16.msra.mxu0 0
    %5054 = vmatprep.subr.bf16.mxu0 0
    %5055 = vmatpush1.bf16.msra.mxu0 0
    %5056 = vmatprep.subr.bf16.mxu0 0
    %5057 = vmatpush1.bf16.msra.mxu0 0
    %5058 = vmatprep.subr.bf16.mxu0 0
    %5059 = vmatpush1.bf16.msra.mxu0 0
    %5060 = vmatprep.subr.bf16.mxu0 0
    %5061 = vmatpush1.bf16.msra.mxu0 0
    %5062 = vmatprep.mubr.bf16.mxu0 0
    %5063 = vmatmul.mubr.bf16.gmra.mrb[0].mxu0 %v4958
    %v5064 = vpop.f32.mrb[0].mxu0
    %v5065 = vadd.f32 %v4980, %v5064
    %v5066 = vpop.f32.mrb[0].mxu0
    %v5067 = vpop.f32.mrb[0].mxu0
    %v5068 = vpop.f32.mrb[0].mxu0
    %5069 = vdwg.mxu0
    %5070 = vst [vmem:[#allocation7] sm:$0x3] %v5065
    // Predicated region
    $region62: #{tpu_custom_call.1} parent=1 // pred_check
      _
    $region63: #{tpu_custom_call.1} parent=1 // pred_check_branch
      %5072 = sbr.rel (0) target = $region65
    $region64: #{tpu_custom_call.1} parent=1 // pred_region
      %s5074 = ssub.s32 32, 32
      %5075 = vsyncadd [#allocation4], %s5074
      %s5077 = sshll.u32 [#allocation7], 4
      %s5078 = int_to_ptr.vmem [resolvable:$true] %s5077
      %5080 = dma.vmem_to_hbm [thread:$0]  %s5078, 32, %s13, [#allocation4]
    $region65: #{tpu_custom_call.1} parent=1 // pred_fallthru
      _
    // Predicated region
    $region66: #{tpu_custom_call.1} parent=1 // pred_check
      _
    $region67: #{tpu_custom_call.1} parent=1 // pred_check_branch
      %5082 = sbr.rel (0) target = $region69
    $region68: #{tpu_custom_call.1} parent=1 // pred_region
      %5083 = dma.done [#allocation4], 32
    $region69: #{tpu_custom_call.1} parent=1 // pred_fallthru
      _
    %5084 = vsyncpa [#allocation3], 1
    %5085 = vsyncpa [#allocation6], 1
    %5086 = vsyncpa [#allocation4], 1

</llo_original>
